<compile_context>
chip_gen: v6e
topology: v6e:2x2x1
jax: 0.10.0
libtpu: 0.0.40
codegen_flags: <defaults>
</compile_context>

<pallas_src>
import jax
import jax.numpy as jnp
from jax import lax
from jax.experimental import pallas as pl
from jax.experimental.pallas import tpu as pltpu


def qnet_kernel(obs_ref, act_ref, wih_ref, whh_ref, b_ref,
                w1h_ref, w1a_ref, b1_ref, w2_ref, b2_ref,
                out_ref):
    """Full LSTM recurrence + MLP head for one (small) batch.

    obs_ref : (T*B, 6)   time-major flattened observations (row t*B + b)
    act_ref : (B, 3)
    wih_ref : (6, 4H)    W_ih^T
    whh_ref : (H, 4H)    W_hh^T
    b_ref   : (1, 4H)    b_ih + b_hh
    w1h_ref : (H, H)     first Linear weight (hidden part), transposed
    w1a_ref : (3, H)     first Linear weight (action part), transposed
    b1_ref  : (1, H)
    w2_ref  : (1, H)     second Linear weight as a row vector
    b2_ref  : (1, 1)
    out_ref : (B, 1)
    """
    TB = obs_ref.shape[0]
    H = whh_ref.shape[0]
    B = out_ref.shape[0]
    T = TB // B

    # ---- One-time input projection for every time step (M = T*B rows). ----
    xp = (jnp.dot(obs_ref[...], wih_ref[...],
                  preferred_element_type=jnp.float32)
          + b_ref[...])                                     # (T*B, 4H)

    # Split per gate ONCE (lane extraction happens outside the serial loop).
    # PyTorch gate order: input, forget, cell (g), output.
    xp_i = xp[:, 0 * H:1 * H]
    xp_f = xp[:, 1 * H:2 * H]
    xp_g = xp[:, 2 * H:3 * H]
    xp_o = xp[:, 3 * H:4 * H]

    whh = whh_ref[...]                                      # load once
    w_i = whh[:, 0 * H:1 * H]
    w_f = whh[:, 1 * H:2 * H]
    w_g = whh[:, 2 * H:3 * H]
    w_o = whh[:, 3 * H:4 * H]

    # ---- Recurrence: state carried in vregs, loop statically unrolled. ----
    h = jnp.zeros((B, H), jnp.float32)
    c = jnp.zeros((B, H), jnp.float32)

    for t in range(T):                                      # T is static
        r0 = t * B
        i_g = jax.nn.sigmoid(
            xp_i[r0:r0 + B]
            + jnp.dot(h, w_i, preferred_element_type=jnp.float32))
        f_g = jax.nn.sigmoid(
            xp_f[r0:r0 + B]
            + jnp.dot(h, w_f, preferred_element_type=jnp.float32))
        g_g = jnp.tanh(
            xp_g[r0:r0 + B]
            + jnp.dot(h, w_g, preferred_element_type=jnp.float32))
        o_g = jax.nn.sigmoid(
            xp_o[r0:r0 + B]
            + jnp.dot(h, w_o, preferred_element_type=jnp.float32))
        c = f_g * c + i_g * g_g
        h = o_g * jnp.tanh(c)

    # ---- MLP head: ReLU(Linear(H+3, H)) -> Linear(H, 1). ----
    pre = (jnp.dot(h, w1h_ref[...], preferred_element_type=jnp.float32)
           + jnp.dot(act_ref[...], w1a_ref[...],
                     preferred_element_type=jnp.float32)
           + b1_ref[...])                                   # (B, H)
    hid = jnp.maximum(pre, 0.0)
    # N=1 matmul replaced by VPU multiply + lane reduction.
    out_ref[...] = (jnp.sum(hid * w2_ref[...], axis=-1, keepdims=True)
                    + b2_ref[...])                          # (B, 1)


def init_qnet_params(key, hidden_size):
    """Deterministic parameter init matching the PyTorch module's shapes
    (xavier_uniform for dim>1 params, small uniform for biases)."""
    H = hidden_size
    keys = jax.random.split(key, 8)

    def xavier(k, shape):
        fan_out, fan_in = shape
        bound = (6.0 / (fan_in + fan_out)) ** 0.5
        return jax.random.uniform(k, shape, jnp.float32, -bound, bound)

    def bias(k, shape, fan):
        bound = 1.0 / (fan ** 0.5)
        return jax.random.uniform(k, shape, jnp.float32, -bound, bound)

    return {
        "hidden": H,
        # LSTM (PyTorch layout: (4H, in), (4H, H), biases (4H,))
        "w_ih": xavier(keys[0], (4 * H, 6)),
        "w_hh": xavier(keys[1], (4 * H, H)),
        "b_ih": bias(keys[2], (4 * H,), H),
        "b_hh": bias(keys[3], (4 * H,), H),
        # MLP head
        "w1": xavier(keys[4], (H, H + 3)),
        "b1": bias(keys[5], (H,), H + 3),
        "w2": xavier(keys[6], (1, H)),
        "b2": bias(keys[7], (1,), H),
    }


def qnet_forward(obs, action, params):
    """obs: (B, T, 6), action: (B, 3)  ->  (B, 1) float32."""
    obs = obs.astype(jnp.float32)
    action = action.astype(jnp.float32)
    B, T, F = obs.shape
    H = params["hidden"]

    # Time-major, flattened so row (t*B + b) is step t of sequence b.
    obs_2d = jnp.transpose(obs, (1, 0, 2)).reshape(T * B, F)    # (T*B, 6)
    wih_t = params["w_ih"].T                                    # (6, 4H)
    whh_t = params["w_hh"].T                                    # (H, 4H)
    b = (params["b_ih"] + params["b_hh"]).reshape(1, 4 * H)     # (1, 4H)
    w1h_t = params["w1"][:, :H].T                               # (H, H)
    w1a_t = params["w1"][:, H:].T                               # (3, H)
    b1 = params["b1"].reshape(1, H)                             # (1, H)
    w2_row = params["w2"].reshape(1, H)                         # (1, H)
    b2 = params["b2"].reshape(1, 1)                             # (1, 1)

    vmem_spec = pl.BlockSpec(memory_space=pltpu.MemorySpace.VMEM)

    # TODO(synk): for large B, add a grid over the batch axis with
    # dimension_semantics=("parallel",) to use both v7x TensorCores and
    # stream obs over T to keep VMEM flat.
    return pl.pallas_call(
        qnet_kernel,
        out_shape=jax.ShapeDtypeStruct((B, 1), jnp.float32),
        in_specs=[vmem_spec] * 10,
        out_specs=vmem_spec,
    )(obs_2d, action, wih_t, whh_t, b, w1h_t, w1a_t, b1, w2_row, b2)


def qnet_reference(obs, action, params):
    """Pure-JAX reference matching the PyTorch forward (f32, high precision)."""
    obs = obs.astype(jnp.float32)
    action = action.astype(jnp.float32)
    B, T, _ = obs.shape
    H = params["hidden"]
    hp = lax.Precision.HIGHEST
    wih, whh = params["w_ih"], params["w_hh"]
    b = params["b_ih"] + params["b_hh"]
    h = jnp.zeros((B, H), jnp.float32)
    c = jnp.zeros((B, H), jnp.float32)
    for t in range(T):
        g = (jnp.dot(obs[:, t], wih.T, precision=hp)
             + jnp.dot(h, whh.T, precision=hp) + b)
        i = jax.nn.sigmoid(g[:, 0 * H:1 * H])
        f = jax.nn.sigmoid(g[:, 1 * H:2 * H])
        gg = jnp.tanh(g[:, 2 * H:3 * H])
        o = jax.nn.sigmoid(g[:, 3 * H:4 * H])
        c = f * c + i * gg
        h = o * jnp.tanh(c)
    x = jnp.concatenate([h, action], axis=-1)
    hid = jnp.maximum(jnp.dot(x, params["w1"].T, precision=hp)
                      + params["b1"], 0.0)
    return jnp.dot(hid, params["w2"].T, precision=hp) + params["b2"]


if __name__ == "__main__":
    key = jax.random.PRNGKey(0)
    k_param, k_obs, k_act = jax.random.split(key, 3)

    B, T, H = 2, 8, 32
    params = init_qnet_params(k_param, H)
    obs = jax.random.normal(k_obs, (B, T, 6), dtype=jnp.float32)
    action = jax.random.normal(k_act, (B, 3), dtype=jnp.float32)

    out = qnet_forward(obs, action, params)
    out = jax.block_until_ready(out)
    assert out.shape == (B, 1) and out.dtype == jnp.float32

    ref = jax.block_until_ready(qnet_reference(obs, action, params))
    assert jnp.allclose(out, ref, atol=2e-3, rtol=2e-3), (out, ref)

    print("KERNEL_OK")
</pallas_src>

<mosaic_0001>
module attributes {stable_mosaic.version = 11 : i64} {
  func.func @qnet_kernel(%arg0: memref<16x6xf32, #tpu.memory_space<vmem>>, %arg1: memref<2x3xf32, #tpu.memory_space<vmem>>, %arg2: memref<6x128xf32, #tpu.memory_space<vmem>>, %arg3: memref<32x128xf32, #tpu.memory_space<vmem>>, %arg4: memref<1x128xf32, #tpu.memory_space<vmem>>, %arg5: memref<32x32xf32, #tpu.memory_space<vmem>>, %arg6: memref<3x32xf32, #tpu.memory_space<vmem>>, %arg7: memref<1x32xf32, #tpu.memory_space<vmem>>, %arg8: memref<1x32xf32, #tpu.memory_space<vmem>>, %arg9: memref<1x1xf32, #tpu.memory_space<vmem>>, %arg10: memref<2x1xf32, #tpu.memory_space<vmem>>) attributes {dimension_semantics = [], scalar_prefetch = 0 : i64, scratch_operands = 0 : i64, tpu.core_type = #tpu.core_type<tc>} {
    %c0 = arith.constant 0 : index
    %c0_0 = arith.constant 0 : index
    %0 = vector.load %arg0[%c0, %c0_0] : memref<16x6xf32, #tpu.memory_space<vmem>>, vector<16x6xf32>
    %c0_1 = arith.constant 0 : index
    %c0_2 = arith.constant 0 : index
    %1 = vector.load %arg2[%c0_1, %c0_2] : memref<6x128xf32, #tpu.memory_space<vmem>>, vector<6x128xf32>
    %cst = arith.constant dense<0.000000e+00> : vector<16x128xf32>
    %2 = tpu.matmul %0, %1, %cst {dimension_numbers = #tpu.dot_dimension_numbers<[1], [0], [0], [1], [0, 0, 1, 1], [], []>} : vector<16x6xf32>, vector<6x128xf32>, vector<16x128xf32> -> vector<16x128xf32>
    %c0_3 = arith.constant 0 : index
    %c0_4 = arith.constant 0 : index
    %3 = vector.load %arg4[%c0_3, %c0_4] : memref<1x128xf32, #tpu.memory_space<vmem>>, vector<1x128xf32>
    %4 = vector.broadcast %3 : vector<1x128xf32> to vector<16x128xf32>
    %5 = arith.addf %2, %4 : vector<16x128xf32>
    %6 = vector.extract_strided_slice %5 {offsets = [0, 0], sizes = [16, 32], strides = [1, 1]} : vector<16x128xf32> to vector<16x32xf32>
    %7 = vector.extract_strided_slice %5 {offsets = [0, 32], sizes = [16, 32], strides = [1, 1]} : vector<16x128xf32> to vector<16x32xf32>
    %8 = vector.extract_strided_slice %5 {offsets = [0, 64], sizes = [16, 32], strides = [1, 1]} : vector<16x128xf32> to vector<16x32xf32>
    %9 = vector.extract_strided_slice %5 {offsets = [0, 96], sizes = [16, 32], strides = [1, 1]} : vector<16x128xf32> to vector<16x32xf32>
    %c0_5 = arith.constant 0 : index
    %c0_6 = arith.constant 0 : index
    %10 = vector.load %arg3[%c0_5, %c0_6] : memref<32x128xf32, #tpu.memory_space<vmem>>, vector<32x128xf32>
    %11 = vector.extract_strided_slice %10 {offsets = [0, 0], sizes = [32, 32], strides = [1, 1]} : vector<32x128xf32> to vector<32x32xf32>
    %12 = vector.extract_strided_slice %10 {offsets = [0, 32], sizes = [32, 32], strides = [1, 1]} : vector<32x128xf32> to vector<32x32xf32>
    %13 = vector.extract_strided_slice %10 {offsets = [0, 64], sizes = [32, 32], strides = [1, 1]} : vector<32x128xf32> to vector<32x32xf32>
    %14 = vector.extract_strided_slice %10 {offsets = [0, 96], sizes = [32, 32], strides = [1, 1]} : vector<32x128xf32> to vector<32x32xf32>
    %cst_7 = arith.constant 0.000000e+00 : f32
    %15 = vector.broadcast %cst_7 : f32 to vector<2x32xf32>
    %cst_8 = arith.constant 0.000000e+00 : f32
    %16 = vector.broadcast %cst_8 : f32 to vector<2x32xf32>
    %17 = vector.extract_strided_slice %6 {offsets = [0, 0], sizes = [2, 32], strides = [1, 1]} : vector<16x32xf32> to vector<2x32xf32>
    %cst_9 = arith.constant dense<0.000000e+00> : vector<2x32xf32>
    %18 = tpu.matmul %15, %11, %cst_9 {dimension_numbers = #tpu.dot_dimension_numbers<[1], [0], [0], [1], [0, 0, 1, 1], [], []>} : vector<2x32xf32>, vector<32x32xf32>, vector<2x32xf32> -> vector<2x32xf32>
    %19 = arith.addf %17, %18 : vector<2x32xf32>
    %20 = arith.negf %19 : vector<2x32xf32>
    %21 = math.exp %20 : vector<2x32xf32>
    %cst_10 = arith.constant 1.000000e+00 : f32
    %22 = vector.broadcast %cst_10 : f32 to vector<2x32xf32>
    %23 = arith.addf %22, %21 : vector<2x32xf32>
    %24 = arith.divf %22, %23 : vector<2x32xf32>
    %25 = vector.extract_strided_slice %7 {offsets = [0, 0], sizes = [2, 32], strides = [1, 1]} : vector<16x32xf32> to vector<2x32xf32>
    %cst_11 = arith.constant dense<0.000000e+00> : vector<2x32xf32>
    %26 = tpu.matmul %15, %12, %cst_11 {dimension_numbers = #tpu.dot_dimension_numbers<[1], [0], [0], [1], [0, 0, 1, 1], [], []>} : vector<2x32xf32>, vector<32x32xf32>, vector<2x32xf32> -> vector<2x32xf32>
    %27 = arith.addf %25, %26 : vector<2x32xf32>
    %28 = arith.negf %27 : vector<2x32xf32>
    %29 = math.exp %28 : vector<2x32xf32>
    %cst_12 = arith.constant 1.000000e+00 : f32
    %30 = vector.broadcast %cst_12 : f32 to vector<2x32xf32>
    %31 = arith.addf %30, %29 : vector<2x32xf32>
    %32 = arith.divf %30, %31 : vector<2x32xf32>
    %33 = vector.extract_strided_slice %8 {offsets = [0, 0], sizes = [2, 32], strides = [1, 1]} : vector<16x32xf32> to vector<2x32xf32>
    %cst_13 = arith.constant dense<0.000000e+00> : vector<2x32xf32>
    %34 = tpu.matmul %15, %13, %cst_13 {dimension_numbers = #tpu.dot_dimension_numbers<[1], [0], [0], [1], [0, 0, 1, 1], [], []>} : vector<2x32xf32>, vector<32x32xf32>, vector<2x32xf32> -> vector<2x32xf32>
    %35 = arith.addf %33, %34 : vector<2x32xf32>
    %36 = math.tanh %35 : vector<2x32xf32>
    %37 = vector.extract_strided_slice %9 {offsets = [0, 0], sizes = [2, 32], strides = [1, 1]} : vector<16x32xf32> to vector<2x32xf32>
    %cst_14 = arith.constant dense<0.000000e+00> : vector<2x32xf32>
    %38 = tpu.matmul %15, %14, %cst_14 {dimension_numbers = #tpu.dot_dimension_numbers<[1], [0], [0], [1], [0, 0, 1, 1], [], []>} : vector<2x32xf32>, vector<32x32xf32>, vector<2x32xf32> -> vector<2x32xf32>
    %39 = arith.addf %37, %38 : vector<2x32xf32>
    %40 = arith.negf %39 : vector<2x32xf32>
    %41 = math.exp %40 : vector<2x32xf32>
    %cst_15 = arith.constant 1.000000e+00 : f32
    %42 = vector.broadcast %cst_15 : f32 to vector<2x32xf32>
    %43 = arith.addf %42, %41 : vector<2x32xf32>
    %44 = arith.divf %42, %43 : vector<2x32xf32>
    %45 = arith.mulf %32, %16 : vector<2x32xf32>
    %46 = arith.mulf %24, %36 : vector<2x32xf32>
    %47 = arith.addf %45, %46 : vector<2x32xf32>
    %48 = math.tanh %47 : vector<2x32xf32>
    %49 = arith.mulf %44, %48 : vector<2x32xf32>
    %50 = vector.extract_strided_slice %6 {offsets = [2, 0], sizes = [2, 32], strides = [1, 1]} : vector<16x32xf32> to vector<2x32xf32>
    %cst_16 = arith.constant dense<0.000000e+00> : vector<2x32xf32>
    %51 = tpu.matmul %49, %11, %cst_16 {dimension_numbers = #tpu.dot_dimension_numbers<[1], [0], [0], [1], [0, 0, 1, 1], [], []>} : vector<2x32xf32>, vector<32x32xf32>, vector<2x32xf32> -> vector<2x32xf32>
    %52 = arith.addf %50, %51 : vector<2x32xf32>
    %53 = arith.negf %52 : vector<2x32xf32>
    %54 = math.exp %53 : vector<2x32xf32>
    %cst_17 = arith.constant 1.000000e+00 : f32
    %55 = vector.broadcast %cst_17 : f32 to vector<2x32xf32>
    %56 = arith.addf %55, %54 : vector<2x32xf32>
    %57 = arith.divf %55, %56 : vector<2x32xf32>
    %58 = vector.extract_strided_slice %7 {offsets = [2, 0], sizes = [2, 32], strides = [1, 1]} : vector<16x32xf32> to vector<2x32xf32>
    %cst_18 = arith.constant dense<0.000000e+00> : vector<2x32xf32>
    %59 = tpu.matmul %49, %12, %cst_18 {dimension_numbers = #tpu.dot_dimension_numbers<[1], [0], [0], [1], [0, 0, 1, 1], [], []>} : vector<2x32xf32>, vector<32x32xf32>, vector<2x32xf32> -> vector<2x32xf32>
    %60 = arith.addf %58, %59 : vector<2x32xf32>
    %61 = arith.negf %60 : vector<2x32xf32>
    %62 = math.exp %61 : vector<2x32xf32>
    %cst_19 = arith.constant 1.000000e+00 : f32
    %63 = vector.broadcast %cst_19 : f32 to vector<2x32xf32>
    %64 = arith.addf %63, %62 : vector<2x32xf32>
    %65 = arith.divf %63, %64 : vector<2x32xf32>
    %66 = vector.extract_strided_slice %8 {offsets = [2, 0], sizes = [2, 32], strides = [1, 1]} : vector<16x32xf32> to vector<2x32xf32>
    %cst_20 = arith.constant dense<0.000000e+00> : vector<2x32xf32>
    %67 = tpu.matmul %49, %13, %cst_20 {dimension_numbers = #tpu.dot_dimension_numbers<[1], [0], [0], [1], [0, 0, 1, 1], [], []>} : vector<2x32xf32>, vector<32x32xf32>, vector<2x32xf32> -> vector<2x32xf32>
    %68 = arith.addf %66, %67 : vector<2x32xf32>
    %69 = math.tanh %68 : vector<2x32xf32>
    %70 = vector.extract_strided_slice %9 {offsets = [2, 0], sizes = [2, 32], strides = [1, 1]} : vector<16x32xf32> to vector<2x32xf32>
    %cst_21 = arith.constant dense<0.000000e+00> : vector<2x32xf32>
    %71 = tpu.matmul %49, %14, %cst_21 {dimension_numbers = #tpu.dot_dimension_numbers<[1], [0], [0], [1], [0, 0, 1, 1], [], []>} : vector<2x32xf32>, vector<32x32xf32>, vector<2x32xf32> -> vector<2x32xf32>
    %72 = arith.addf %70, %71 : vector<2x32xf32>
    %73 = arith.negf %72 : vector<2x32xf32>
    %74 = math.exp %73 : vector<2x32xf32>
    %cst_22 = arith.constant 1.000000e+00 : f32
    %75 = vector.broadcast %cst_22 : f32 to vector<2x32xf32>
    %76 = arith.addf %75, %74 : vector<2x32xf32>
    %77 = arith.divf %75, %76 : vector<2x32xf32>
    %78 = arith.mulf %65, %47 : vector<2x32xf32>
    %79 = arith.mulf %57, %69 : vector<2x32xf32>
    %80 = arith.addf %78, %79 : vector<2x32xf32>
    %81 = math.tanh %80 : vector<2x32xf32>
    %82 = arith.mulf %77, %81 : vector<2x32xf32>
    %83 = vector.extract_strided_slice %6 {offsets = [4, 0], sizes = [2, 32], strides = [1, 1]} : vector<16x32xf32> to vector<2x32xf32>
    %cst_23 = arith.constant dense<0.000000e+00> : vector<2x32xf32>
    %84 = tpu.matmul %82, %11, %cst_23 {dimension_numbers = #tpu.dot_dimension_numbers<[1], [0], [0], [1], [0, 0, 1, 1], [], []>} : vector<2x32xf32>, vector<32x32xf32>, vector<2x32xf32> -> vector<2x32xf32>
    %85 = arith.addf %83, %84 : vector<2x32xf32>
    %86 = arith.negf %85 : vector<2x32xf32>
    %87 = math.exp %86 : vector<2x32xf32>
    %cst_24 = arith.constant 1.000000e+00 : f32
    %88 = vector.broadcast %cst_24 : f32 to vector<2x32xf32>
    %89 = arith.addf %88, %87 : vector<2x32xf32>
    %90 = arith.divf %88, %89 : vector<2x32xf32>
    %91 = vector.extract_strided_slice %7 {offsets = [4, 0], sizes = [2, 32], strides = [1, 1]} : vector<16x32xf32> to vector<2x32xf32>
    %cst_25 = arith.constant dense<0.000000e+00> : vector<2x32xf32>
    %92 = tpu.matmul %82, %12, %cst_25 {dimension_numbers = #tpu.dot_dimension_numbers<[1], [0], [0], [1], [0, 0, 1, 1], [], []>} : vector<2x32xf32>, vector<32x32xf32>, vector<2x32xf32> -> vector<2x32xf32>
    %93 = arith.addf %91, %92 : vector<2x32xf32>
    %94 = arith.negf %93 : vector<2x32xf32>
    %95 = math.exp %94 : vector<2x32xf32>
    %cst_26 = arith.constant 1.000000e+00 : f32
    %96 = vector.broadcast %cst_26 : f32 to vector<2x32xf32>
    %97 = arith.addf %96, %95 : vector<2x32xf32>
    %98 = arith.divf %96, %97 : vector<2x32xf32>
    %99 = vector.extract_strided_slice %8 {offsets = [4, 0], sizes = [2, 32], strides = [1, 1]} : vector<16x32xf32> to vector<2x32xf32>
    %cst_27 = arith.constant dense<0.000000e+00> : vector<2x32xf32>
    %100 = tpu.matmul %82, %13, %cst_27 {dimension_numbers = #tpu.dot_dimension_numbers<[1], [0], [0], [1], [0, 0, 1, 1], [], []>} : vector<2x32xf32>, vector<32x32xf32>, vector<2x32xf32> -> vector<2x32xf32>
    %101 = arith.addf %99, %100 : vector<2x32xf32>
    %102 = math.tanh %101 : vector<2x32xf32>
    %103 = vector.extract_strided_slice %9 {offsets = [4, 0], sizes = [2, 32], strides = [1, 1]} : vector<16x32xf32> to vector<2x32xf32>
    %cst_28 = arith.constant dense<0.000000e+00> : vector<2x32xf32>
    %104 = tpu.matmul %82, %14, %cst_28 {dimension_numbers = #tpu.dot_dimension_numbers<[1], [0], [0], [1], [0, 0, 1, 1], [], []>} : vector<2x32xf32>, vector<32x32xf32>, vector<2x32xf32> -> vector<2x32xf32>
    %105 = arith.addf %103, %104 : vector<2x32xf32>
    %106 = arith.negf %105 : vector<2x32xf32>
    %107 = math.exp %106 : vector<2x32xf32>
    %cst_29 = arith.constant 1.000000e+00 : f32
    %108 = vector.broadcast %cst_29 : f32 to vector<2x32xf32>
    %109 = arith.addf %108, %107 : vector<2x32xf32>
    %110 = arith.divf %108, %109 : vector<2x32xf32>
    %111 = arith.mulf %98, %80 : vector<2x32xf32>
    %112 = arith.mulf %90, %102 : vector<2x32xf32>
    %113 = arith.addf %111, %112 : vector<2x32xf32>
    %114 = math.tanh %113 : vector<2x32xf32>
    %115 = arith.mulf %110, %114 : vector<2x32xf32>
    %116 = vector.extract_strided_slice %6 {offsets = [6, 0], sizes = [2, 32], strides = [1, 1]} : vector<16x32xf32> to vector<2x32xf32>
    %cst_30 = arith.constant dense<0.000000e+00> : vector<2x32xf32>
    %117 = tpu.matmul %115, %11, %cst_30 {dimension_numbers = #tpu.dot_dimension_numbers<[1], [0], [0], [1], [0, 0, 1, 1], [], []>} : vector<2x32xf32>, vector<32x32xf32>, vector<2x32xf32> -> vector<2x32xf32>
    %118 = arith.addf %116, %117 : vector<2x32xf32>
    %119 = arith.negf %118 : vector<2x32xf32>
    %120 = math.exp %119 : vector<2x32xf32>
    %cst_31 = arith.constant 1.000000e+00 : f32
    %121 = vector.broadcast %cst_31 : f32 to vector<2x32xf32>
    %122 = arith.addf %121, %120 : vector<2x32xf32>
    %123 = arith.divf %121, %122 : vector<2x32xf32>
    %124 = vector.extract_strided_slice %7 {offsets = [6, 0], sizes = [2, 32], strides = [1, 1]} : vector<16x32xf32> to vector<2x32xf32>
    %cst_32 = arith.constant dense<0.000000e+00> : vector<2x32xf32>
    %125 = tpu.matmul %115, %12, %cst_32 {dimension_numbers = #tpu.dot_dimension_numbers<[1], [0], [0], [1], [0, 0, 1, 1], [], []>} : vector<2x32xf32>, vector<32x32xf32>, vector<2x32xf32> -> vector<2x32xf32>
    %126 = arith.addf %124, %125 : vector<2x32xf32>
    %127 = arith.negf %126 : vector<2x32xf32>
    %128 = math.exp %127 : vector<2x32xf32>
    %cst_33 = arith.constant 1.000000e+00 : f32
    %129 = vector.broadcast %cst_33 : f32 to vector<2x32xf32>
    %130 = arith.addf %129, %128 : vector<2x32xf32>
    %131 = arith.divf %129, %130 : vector<2x32xf32>
    %132 = vector.extract_strided_slice %8 {offsets = [6, 0], sizes = [2, 32], strides = [1, 1]} : vector<16x32xf32> to vector<2x32xf32>
    %cst_34 = arith.constant dense<0.000000e+00> : vector<2x32xf32>
    %133 = tpu.matmul %115, %13, %cst_34 {dimension_numbers = #tpu.dot_dimension_numbers<[1], [0], [0], [1], [0, 0, 1, 1], [], []>} : vector<2x32xf32>, vector<32x32xf32>, vector<2x32xf32> -> vector<2x32xf32>
    %134 = arith.addf %132, %133 : vector<2x32xf32>
    %135 = math.tanh %134 : vector<2x32xf32>
    %136 = vector.extract_strided_slice %9 {offsets = [6, 0], sizes = [2, 32], strides = [1, 1]} : vector<16x32xf32> to vector<2x32xf32>
    %cst_35 = arith.constant dense<0.000000e+00> : vector<2x32xf32>
    %137 = tpu.matmul %115, %14, %cst_35 {dimension_numbers = #tpu.dot_dimension_numbers<[1], [0], [0], [1], [0, 0, 1, 1], [], []>} : vector<2x32xf32>, vector<32x32xf32>, vector<2x32xf32> -> vector<2x32xf32>
    %138 = arith.addf %136, %137 : vector<2x32xf32>
    %139 = arith.negf %138 : vector<2x32xf32>
    %140 = math.exp %139 : vector<2x32xf32>
    %cst_36 = arith.constant 1.000000e+00 : f32
    %141 = vector.broadcast %cst_36 : f32 to vector<2x32xf32>
    %142 = arith.addf %141, %140 : vector<2x32xf32>
    %143 = arith.divf %141, %142 : vector<2x32xf32>
    %144 = arith.mulf %131, %113 : vector<2x32xf32>
    %145 = arith.mulf %123, %135 : vector<2x32xf32>
    %146 = arith.addf %144, %145 : vector<2x32xf32>
    %147 = math.tanh %146 : vector<2x32xf32>
    %148 = arith.mulf %143, %147 : vector<2x32xf32>
    %149 = vector.extract_strided_slice %6 {offsets = [8, 0], sizes = [2, 32], strides = [1, 1]} : vector<16x32xf32> to vector<2x32xf32>
    %cst_37 = arith.constant dense<0.000000e+00> : vector<2x32xf32>
    %150 = tpu.matmul %148, %11, %cst_37 {dimension_numbers = #tpu.dot_dimension_numbers<[1], [0], [0], [1], [0, 0, 1, 1], [], []>} : vector<2x32xf32>, vector<32x32xf32>, vector<2x32xf32> -> vector<2x32xf32>
    %151 = arith.addf %149, %150 : vector<2x32xf32>
    %152 = arith.negf %151 : vector<2x32xf32>
    %153 = math.exp %152 : vector<2x32xf32>
    %cst_38 = arith.constant 1.000000e+00 : f32
    %154 = vector.broadcast %cst_38 : f32 to vector<2x32xf32>
    %155 = arith.addf %154, %153 : vector<2x32xf32>
    %156 = arith.divf %154, %155 : vector<2x32xf32>
    %157 = vector.extract_strided_slice %7 {offsets = [8, 0], sizes = [2, 32], strides = [1, 1]} : vector<16x32xf32> to vector<2x32xf32>
    %cst_39 = arith.constant dense<0.000000e+00> : vector<2x32xf32>
    %158 = tpu.matmul %148, %12, %cst_39 {dimension_numbers = #tpu.dot_dimension_numbers<[1], [0], [0], [1], [0, 0, 1, 1], [], []>} : vector<2x32xf32>, vector<32x32xf32>, vector<2x32xf32> -> vector<2x32xf32>
    %159 = arith.addf %157, %158 : vector<2x32xf32>
    %160 = arith.negf %159 : vector<2x32xf32>
    %161 = math.exp %160 : vector<2x32xf32>
    %cst_40 = arith.constant 1.000000e+00 : f32
    %162 = vector.broadcast %cst_40 : f32 to vector<2x32xf32>
    %163 = arith.addf %162, %161 : vector<2x32xf32>
    %164 = arith.divf %162, %163 : vector<2x32xf32>
    %165 = vector.extract_strided_slice %8 {offsets = [8, 0], sizes = [2, 32], strides = [1, 1]} : vector<16x32xf32> to vector<2x32xf32>
    %cst_41 = arith.constant dense<0.000000e+00> : vector<2x32xf32>
    %166 = tpu.matmul %148, %13, %cst_41 {dimension_numbers = #tpu.dot_dimension_numbers<[1], [0], [0], [1], [0, 0, 1, 1], [], []>} : vector<2x32xf32>, vector<32x32xf32>, vector<2x32xf32> -> vector<2x32xf32>
    %167 = arith.addf %165, %166 : vector<2x32xf32>
    %168 = math.tanh %167 : vector<2x32xf32>
    %169 = vector.extract_strided_slice %9 {offsets = [8, 0], sizes = [2, 32], strides = [1, 1]} : vector<16x32xf32> to vector<2x32xf32>
    %cst_42 = arith.constant dense<0.000000e+00> : vector<2x32xf32>
    %170 = tpu.matmul %148, %14, %cst_42 {dimension_numbers = #tpu.dot_dimension_numbers<[1], [0], [0], [1], [0, 0, 1, 1], [], []>} : vector<2x32xf32>, vector<32x32xf32>, vector<2x32xf32> -> vector<2x32xf32>
    %171 = arith.addf %169, %170 : vector<2x32xf32>
    %172 = arith.negf %171 : vector<2x32xf32>
    %173 = math.exp %172 : vector<2x32xf32>
    %cst_43 = arith.constant 1.000000e+00 : f32
    %174 = vector.broadcast %cst_43 : f32 to vector<2x32xf32>
    %175 = arith.addf %174, %173 : vector<2x32xf32>
    %176 = arith.divf %174, %175 : vector<2x32xf32>
    %177 = arith.mulf %164, %146 : vector<2x32xf32>
    %178 = arith.mulf %156, %168 : vector<2x32xf32>
    %179 = arith.addf %177, %178 : vector<2x32xf32>
    %180 = math.tanh %179 : vector<2x32xf32>
    %181 = arith.mulf %176, %180 : vector<2x32xf32>
    %182 = vector.extract_strided_slice %6 {offsets = [10, 0], sizes = [2, 32], strides = [1, 1]} : vector<16x32xf32> to vector<2x32xf32>
    %cst_44 = arith.constant dense<0.000000e+00> : vector<2x32xf32>
    %183 = tpu.matmul %181, %11, %cst_44 {dimension_numbers = #tpu.dot_dimension_numbers<[1], [0], [0], [1], [0, 0, 1, 1], [], []>} : vector<2x32xf32>, vector<32x32xf32>, vector<2x32xf32> -> vector<2x32xf32>
    %184 = arith.addf %182, %183 : vector<2x32xf32>
    %185 = arith.negf %184 : vector<2x32xf32>
    %186 = math.exp %185 : vector<2x32xf32>
    %cst_45 = arith.constant 1.000000e+00 : f32
    %187 = vector.broadcast %cst_45 : f32 to vector<2x32xf32>
    %188 = arith.addf %187, %186 : vector<2x32xf32>
    %189 = arith.divf %187, %188 : vector<2x32xf32>
    %190 = vector.extract_strided_slice %7 {offsets = [10, 0], sizes = [2, 32], strides = [1, 1]} : vector<16x32xf32> to vector<2x32xf32>
    %cst_46 = arith.constant dense<0.000000e+00> : vector<2x32xf32>
    %191 = tpu.matmul %181, %12, %cst_46 {dimension_numbers = #tpu.dot_dimension_numbers<[1], [0], [0], [1], [0, 0, 1, 1], [], []>} : vector<2x32xf32>, vector<32x32xf32>, vector<2x32xf32> -> vector<2x32xf32>
    %192 = arith.addf %190, %191 : vector<2x32xf32>
    %193 = arith.negf %192 : vector<2x32xf32>
    %194 = math.exp %193 : vector<2x32xf32>
    %cst_47 = arith.constant 1.000000e+00 : f32
    %195 = vector.broadcast %cst_47 : f32 to vector<2x32xf32>
    %196 = arith.addf %195, %194 : vector<2x32xf32>
    %197 = arith.divf %195, %196 : vector<2x32xf32>
    %198 = vector.extract_strided_slice %8 {offsets = [10, 0], sizes = [2, 32], strides = [1, 1]} : vector<16x32xf32> to vector<2x32xf32>
    %cst_48 = arith.constant dense<0.000000e+00> : vector<2x32xf32>
    %199 = tpu.matmul %181, %13, %cst_48 {dimension_numbers = #tpu.dot_dimension_numbers<[1], [0], [0], [1], [0, 0, 1, 1], [], []>} : vector<2x32xf32>, vector<32x32xf32>, vector<2x32xf32> -> vector<2x32xf32>
    %200 = arith.addf %198, %199 : vector<2x32xf32>
    %201 = math.tanh %200 : vector<2x32xf32>
    %202 = vector.extract_strided_slice %9 {offsets = [10, 0], sizes = [2, 32], strides = [1, 1]} : vector<16x32xf32> to vector<2x32xf32>
    %cst_49 = arith.constant dense<0.000000e+00> : vector<2x32xf32>
    %203 = tpu.matmul %181, %14, %cst_49 {dimension_numbers = #tpu.dot_dimension_numbers<[1], [0], [0], [1], [0, 0, 1, 1], [], []>} : vector<2x32xf32>, vector<32x32xf32>, vector<2x32xf32> -> vector<2x32xf32>
    %204 = arith.addf %202, %203 : vector<2x32xf32>
    %205 = arith.negf %204 : vector<2x32xf32>
    %206 = math.exp %205 : vector<2x32xf32>
    %cst_50 = arith.constant 1.000000e+00 : f32
    %207 = vector.broadcast %cst_50 : f32 to vector<2x32xf32>
    %208 = arith.addf %207, %206 : vector<2x32xf32>
    %209 = arith.divf %207, %208 : vector<2x32xf32>
    %210 = arith.mulf %197, %179 : vector<2x32xf32>
    %211 = arith.mulf %189, %201 : vector<2x32xf32>
    %212 = arith.addf %210, %211 : vector<2x32xf32>
    %213 = math.tanh %212 : vector<2x32xf32>
    %214 = arith.mulf %209, %213 : vector<2x32xf32>
    %215 = vector.extract_strided_slice %6 {offsets = [12, 0], sizes = [2, 32], strides = [1, 1]} : vector<16x32xf32> to vector<2x32xf32>
    %cst_51 = arith.constant dense<0.000000e+00> : vector<2x32xf32>
    %216 = tpu.matmul %214, %11, %cst_51 {dimension_numbers = #tpu.dot_dimension_numbers<[1], [0], [0], [1], [0, 0, 1, 1], [], []>} : vector<2x32xf32>, vector<32x32xf32>, vector<2x32xf32> -> vector<2x32xf32>
    %217 = arith.addf %215, %216 : vector<2x32xf32>
    %218 = arith.negf %217 : vector<2x32xf32>
    %219 = math.exp %218 : vector<2x32xf32>
    %cst_52 = arith.constant 1.000000e+00 : f32
    %220 = vector.broadcast %cst_52 : f32 to vector<2x32xf32>
    %221 = arith.addf %220, %219 : vector<2x32xf32>
    %222 = arith.divf %220, %221 : vector<2x32xf32>
    %223 = vector.extract_strided_slice %7 {offsets = [12, 0], sizes = [2, 32], strides = [1, 1]} : vector<16x32xf32> to vector<2x32xf32>
    %cst_53 = arith.constant dense<0.000000e+00> : vector<2x32xf32>
    %224 = tpu.matmul %214, %12, %cst_53 {dimension_numbers = #tpu.dot_dimension_numbers<[1], [0], [0], [1], [0, 0, 1, 1], [], []>} : vector<2x32xf32>, vector<32x32xf32>, vector<2x32xf32> -> vector<2x32xf32>
    %225 = arith.addf %223, %224 : vector<2x32xf32>
    %226 = arith.negf %225 : vector<2x32xf32>
    %227 = math.exp %226 : vector<2x32xf32>
    %cst_54 = arith.constant 1.000000e+00 : f32
    %228 = vector.broadcast %cst_54 : f32 to vector<2x32xf32>
    %229 = arith.addf %228, %227 : vector<2x32xf32>
    %230 = arith.divf %228, %229 : vector<2x32xf32>
    %231 = vector.extract_strided_slice %8 {offsets = [12, 0], sizes = [2, 32], strides = [1, 1]} : vector<16x32xf32> to vector<2x32xf32>
    %cst_55 = arith.constant dense<0.000000e+00> : vector<2x32xf32>
    %232 = tpu.matmul %214, %13, %cst_55 {dimension_numbers = #tpu.dot_dimension_numbers<[1], [0], [0], [1], [0, 0, 1, 1], [], []>} : vector<2x32xf32>, vector<32x32xf32>, vector<2x32xf32> -> vector<2x32xf32>
    %233 = arith.addf %231, %232 : vector<2x32xf32>
    %234 = math.tanh %233 : vector<2x32xf32>
    %235 = vector.extract_strided_slice %9 {offsets = [12, 0], sizes = [2, 32], strides = [1, 1]} : vector<16x32xf32> to vector<2x32xf32>
    %cst_56 = arith.constant dense<0.000000e+00> : vector<2x32xf32>
    %236 = tpu.matmul %214, %14, %cst_56 {dimension_numbers = #tpu.dot_dimension_numbers<[1], [0], [0], [1], [0, 0, 1, 1], [], []>} : vector<2x32xf32>, vector<32x32xf32>, vector<2x32xf32> -> vector<2x32xf32>
    %237 = arith.addf %235, %236 : vector<2x32xf32>
    %238 = arith.negf %237 : vector<2x32xf32>
    %239 = math.exp %238 : vector<2x32xf32>
    %cst_57 = arith.constant 1.000000e+00 : f32
    %240 = vector.broadcast %cst_57 : f32 to vector<2x32xf32>
    %241 = arith.addf %240, %239 : vector<2x32xf32>
    %242 = arith.divf %240, %241 : vector<2x32xf32>
    %243 = arith.mulf %230, %212 : vector<2x32xf32>
    %244 = arith.mulf %222, %234 : vector<2x32xf32>
    %245 = arith.addf %243, %244 : vector<2x32xf32>
    %246 = math.tanh %245 : vector<2x32xf32>
    %247 = arith.mulf %242, %246 : vector<2x32xf32>
    %248 = vector.extract_strided_slice %6 {offsets = [14, 0], sizes = [2, 32], strides = [1, 1]} : vector<16x32xf32> to vector<2x32xf32>
    %cst_58 = arith.constant dense<0.000000e+00> : vector<2x32xf32>
    %249 = tpu.matmul %247, %11, %cst_58 {dimension_numbers = #tpu.dot_dimension_numbers<[1], [0], [0], [1], [0, 0, 1, 1], [], []>} : vector<2x32xf32>, vector<32x32xf32>, vector<2x32xf32> -> vector<2x32xf32>
    %250 = arith.addf %248, %249 : vector<2x32xf32>
    %251 = arith.negf %250 : vector<2x32xf32>
    %252 = math.exp %251 : vector<2x32xf32>
    %cst_59 = arith.constant 1.000000e+00 : f32
    %253 = vector.broadcast %cst_59 : f32 to vector<2x32xf32>
    %254 = arith.addf %253, %252 : vector<2x32xf32>
    %255 = arith.divf %253, %254 : vector<2x32xf32>
    %256 = vector.extract_strided_slice %7 {offsets = [14, 0], sizes = [2, 32], strides = [1, 1]} : vector<16x32xf32> to vector<2x32xf32>
    %cst_60 = arith.constant dense<0.000000e+00> : vector<2x32xf32>
    %257 = tpu.matmul %247, %12, %cst_60 {dimension_numbers = #tpu.dot_dimension_numbers<[1], [0], [0], [1], [0, 0, 1, 1], [], []>} : vector<2x32xf32>, vector<32x32xf32>, vector<2x32xf32> -> vector<2x32xf32>
    %258 = arith.addf %256, %257 : vector<2x32xf32>
    %259 = arith.negf %258 : vector<2x32xf32>
    %260 = math.exp %259 : vector<2x32xf32>
    %cst_61 = arith.constant 1.000000e+00 : f32
    %261 = vector.broadcast %cst_61 : f32 to vector<2x32xf32>
    %262 = arith.addf %261, %260 : vector<2x32xf32>
    %263 = arith.divf %261, %262 : vector<2x32xf32>
    %264 = vector.extract_strided_slice %8 {offsets = [14, 0], sizes = [2, 32], strides = [1, 1]} : vector<16x32xf32> to vector<2x32xf32>
    %cst_62 = arith.constant dense<0.000000e+00> : vector<2x32xf32>
    %265 = tpu.matmul %247, %13, %cst_62 {dimension_numbers = #tpu.dot_dimension_numbers<[1], [0], [0], [1], [0, 0, 1, 1], [], []>} : vector<2x32xf32>, vector<32x32xf32>, vector<2x32xf32> -> vector<2x32xf32>
    %266 = arith.addf %264, %265 : vector<2x32xf32>
    %267 = math.tanh %266 : vector<2x32xf32>
    %268 = vector.extract_strided_slice %9 {offsets = [14, 0], sizes = [2, 32], strides = [1, 1]} : vector<16x32xf32> to vector<2x32xf32>
    %cst_63 = arith.constant dense<0.000000e+00> : vector<2x32xf32>
    %269 = tpu.matmul %247, %14, %cst_63 {dimension_numbers = #tpu.dot_dimension_numbers<[1], [0], [0], [1], [0, 0, 1, 1], [], []>} : vector<2x32xf32>, vector<32x32xf32>, vector<2x32xf32> -> vector<2x32xf32>
    %270 = arith.addf %268, %269 : vector<2x32xf32>
    %271 = arith.negf %270 : vector<2x32xf32>
    %272 = math.exp %271 : vector<2x32xf32>
    %cst_64 = arith.constant 1.000000e+00 : f32
    %273 = vector.broadcast %cst_64 : f32 to vector<2x32xf32>
    %274 = arith.addf %273, %272 : vector<2x32xf32>
    %275 = arith.divf %273, %274 : vector<2x32xf32>
    %276 = arith.mulf %263, %245 : vector<2x32xf32>
    %277 = arith.mulf %255, %267 : vector<2x32xf32>
    %278 = arith.addf %276, %277 : vector<2x32xf32>
    %279 = math.tanh %278 : vector<2x32xf32>
    %280 = arith.mulf %275, %279 : vector<2x32xf32>
    %c0_65 = arith.constant 0 : index
    %c0_66 = arith.constant 0 : index
    %281 = vector.load %arg5[%c0_65, %c0_66] : memref<32x32xf32, #tpu.memory_space<vmem>>, vector<32x32xf32>
    %cst_67 = arith.constant dense<0.000000e+00> : vector<2x32xf32>
    %282 = tpu.matmul %280, %281, %cst_67 {dimension_numbers = #tpu.dot_dimension_numbers<[1], [0], [0], [1], [0, 0, 1, 1], [], []>} : vector<2x32xf32>, vector<32x32xf32>, vector<2x32xf32> -> vector<2x32xf32>
    %c0_68 = arith.constant 0 : index
    %c0_69 = arith.constant 0 : index
    %283 = vector.load %arg1[%c0_68, %c0_69] : memref<2x3xf32, #tpu.memory_space<vmem>>, vector<2x3xf32>
    %c0_70 = arith.constant 0 : index
    %c0_71 = arith.constant 0 : index
    %284 = vector.load %arg6[%c0_70, %c0_71] : memref<3x32xf32, #tpu.memory_space<vmem>>, vector<3x32xf32>
    %cst_72 = arith.constant dense<0.000000e+00> : vector<2x32xf32>
    %285 = tpu.matmul %283, %284, %cst_72 {dimension_numbers = #tpu.dot_dimension_numbers<[1], [0], [0], [1], [0, 0, 1, 1], [], []>} : vector<2x3xf32>, vector<3x32xf32>, vector<2x32xf32> -> vector<2x32xf32>
    %286 = arith.addf %282, %285 : vector<2x32xf32>
    %c0_73 = arith.constant 0 : index
    %c0_74 = arith.constant 0 : index
    %287 = vector.load %arg7[%c0_73, %c0_74] : memref<1x32xf32, #tpu.memory_space<vmem>>, vector<1x32xf32>
    %288 = vector.broadcast %287 : vector<1x32xf32> to vector<2x32xf32>
    %289 = arith.addf %286, %288 : vector<2x32xf32>
    %cst_75 = arith.constant 0.000000e+00 : f32
    %290 = vector.broadcast %cst_75 : f32 to vector<2x32xf32>
    %291 = arith.maximumf %289, %290 : vector<2x32xf32>
    %c0_76 = arith.constant 0 : index
    %c0_77 = arith.constant 0 : index
    %292 = vector.load %arg8[%c0_76, %c0_77] : memref<1x32xf32, #tpu.memory_space<vmem>>, vector<1x32xf32>
    %293 = vector.broadcast %292 : vector<1x32xf32> to vector<2x32xf32>
    %294 = arith.mulf %291, %293 : vector<2x32xf32>
    %cst_78 = arith.constant dense<0.000000e+00> : vector<2xf32>
    %295 = vector.multi_reduction <add>, %294, %cst_78 [1] : vector<2x32xf32> to vector<2xf32>
    %296 = vector.shape_cast %295 : vector<2xf32> to vector<2x1xf32>
    %c0_79 = arith.constant 0 : index
    %c0_80 = arith.constant 0 : index
    %297 = vector.load %arg9[%c0_79, %c0_80] : memref<1x1xf32, #tpu.memory_space<vmem>>, vector<1x1xf32>
    %298 = vector.broadcast %297 : vector<1x1xf32> to vector<2x1xf32>
    %299 = arith.addf %296, %298 : vector<2x1xf32>
    %c0_81 = arith.constant 0 : index
    %c0_82 = arith.constant 0 : index
    %300 = vector.load %arg10[%c0_81, %c0_82] : memref<2x1xf32, #tpu.memory_space<vmem>>, vector<2x1xf32>
    tpu.vector_store %arg10[%c0_81, %c0_82], %299 {strides = array<i32>} : memref<2x1xf32, #tpu.memory_space<vmem>>, vector<2x1xf32>,
    return
  }
}

</mosaic_0001>

<llo_original>
// kernel: tpu_custom_call.1
$region0: #{tpu_custom_call.1}
  #allocation0 [shape = 'u32[]', space=smem, size = 0x4, offset = 0x4, fixed_abs, tag = 'smem constant byte address 0x4 - core index']
  #allocation1 [shape = 'u32[144,128]{1,0:T(1,128)}', space=vmem, size = 0x12000, scoped, tag = 'internal scratch']
  #allocation2 [shape = 'f32[1,1]{1,0:T(1,128)S(1)}', space=vmem, size = 0x200, scoped, tag = 'scoped memory for tpu_custom_call.1']
  %s0 = inlined_call_operand.vmem [shape: f32[16,6], index: 0, kind: input, shape index: {}]
  %s1 = inlined_call_operand.hbm [shape: f32[2,3], index: 1, kind: input, shape index: {}]
  %s2 = inlined_call_operand.hbm [shape: f32[6,128], index: 2, kind: input, shape index: {}]
  %s3 = inlined_call_operand.hbm [shape: f32[32,128], index: 3, kind: input, shape index: {}]
  %s4 = inlined_call_operand.hbm [shape: f32[1,128], index: 4, kind: input, shape index: {}]
  %s5 = inlined_call_operand.vmem [shape: f32[32,32], index: 5, kind: input, shape index: {}]
  %s6 = inlined_call_operand.vmem [shape: f32[3,32], index: 6, kind: input, shape index: {}]
  %s7 = inlined_call_operand.vmem [shape: f32[1,32], index: 7, kind: input, shape index: {}]
  %s8 = inlined_call_operand.vmem [shape: f32[1,32], index: 8, kind: input, shape index: {}]
  %s9 = inlined_call_operand.<no memory space> [shape: f32[1,1], index: 9, kind: input, shape index: {}]
  %s10 = inlined_call_operand.vmem [shape: f32[2,1], index: 10, kind: output, shape index: {}]
  %s11 = sld [smem:[#allocation0]]
  $region66: #{tpu_custom_call.1} parent=0
    _
  %s13 = ssub.s32 1, %s11
  %s14 = scalar_select 0, %s13, %s11
  %v15 = vstv %s9
  %16 = vst [vmem:[#allocation2] sm:$0x1] %v15
  $region1: #{tpu_custom_call.1} parent=0
    #allocation3 [shape = 'u8[1024]{0}', space=vmem, size = 0x400, scoped, tag = 'input window, operand 1, single buffered']
    #allocation4 [shape = 's32[1]{0}', space=sflag, size = 0x4, scoped, tag = 'scoped memory for tpu_custom_call.1']
    #allocation5 [shape = 'u8[4096]{0}', space=vmem, size = 0x1000, scoped, tag = 'input window, operand 2, single buffered']
    #allocation6 [shape = 's32[1]{0}', space=sflag, size = 0x4, scoped, tag = 'scoped memory for tpu_custom_call.1']
    #allocation7 [shape = 'u8[16384]{0}', space=vmem, size = 0x4000, scoped, tag = 'input window, operand 3, single buffered']
    #allocation8 [shape = 'u8[512]{0}', space=vmem, size = 0x400, scoped, tag = 'input window, operand 4, single buffered']
    #allocation9 [shape = 's32[1]{0}', space=sflag, size = 0x4, scoped, tag = 'scoped memory for tpu_custom_call.1']
    %17 = vsyncpa [#allocation4], 0
    %18 = vsyncpa [#allocation6], 0
    %19 = vsyncpa [#allocation9], 0
    // Predicated region
    $region2: #{tpu_custom_call.1} parent=1 // pred_check
      _
    $region3: #{tpu_custom_call.1} parent=1 // pred_check_branch
      %21 = sbr.rel (0) target = $region5
    $region4: #{tpu_custom_call.1} parent=1 // pred_region
      _
    $region5: #{tpu_custom_call.1} parent=1 // pred_fallthru
      _
    // Predicated region
    $region6: #{tpu_custom_call.1} parent=1 // pred_check
      _
    $region7: #{tpu_custom_call.1} parent=1 // pred_check_branch
      %23 = sbr.rel (0) target = $region9
    $region8: #{tpu_custom_call.1} parent=1 // pred_region
      %s25 = ssub.s32 32, 32
      %26 = vsyncadd [#allocation4], %s25
      %s28 = sshll.u32 [#allocation3], 4
      %s29 = int_to_ptr.vmem [resolvable:$true] %s28
      %31 = dma.hbm_to_vmem [thread:$0]  %s1, 32, %s29, [#allocation4]
    $region9: #{tpu_custom_call.1} parent=1 // pred_fallthru
      _
    // Predicated region
    $region10: #{tpu_custom_call.1} parent=1 // pred_check
      _
    $region11: #{tpu_custom_call.1} parent=1 // pred_check_branch
      %33 = sbr.rel (0) target = $region13
    $region12: #{tpu_custom_call.1} parent=1 // pred_region
      %s35 = ssub.s32 128, 128
      %36 = vsyncadd [#allocation6], %s35
      %s38 = sshll.u32 [#allocation5], 4
      %s39 = int_to_ptr.vmem [resolvable:$true] %s38
      %41 = dma.hbm_to_vmem [thread:$0]  %s2, 128, %s39, [#allocation6]
    $region13: #{tpu_custom_call.1} parent=1 // pred_fallthru
      _
    // Predicated region
    $region14: #{tpu_custom_call.1} parent=1 // pred_check
      _
    $region15: #{tpu_custom_call.1} parent=1 // pred_check_branch
      %43 = sbr.rel (0) target = $region17
    $region16: #{tpu_custom_call.1} parent=1 // pred_region
      %s45 = ssub.s32 512, 512
      %46 = vsyncadd [#allocation6], %s45
      %s47 = sshll.u32 [#allocation7], 4
      %s48 = int_to_ptr.vmem [resolvable:$true] %s47
      %53 = dma.hbm_to_vmem [thread:$0]  %s3, 512, %s48, [#allocation6], 128, 128, 8
    $region17: #{tpu_custom_call.1} parent=1 // pred_fallthru
      _
    // Predicated region
    $region18: #{tpu_custom_call.1} parent=1 // pred_check
      _
    $region19: #{tpu_custom_call.1} parent=1 // pred_check_branch
      %55 = sbr.rel (0) target = $region21
    $region20: #{tpu_custom_call.1} parent=1 // pred_region
      %s57 = ssub.s32 16, 16
      %58 = vsyncadd [#allocation9], %s57
      %s60 = sshll.u32 [#allocation8], 4
      %s61 = int_to_ptr.vmem [resolvable:$true] %s60
      %63 = dma.hbm_to_vmem [thread:$0]  %s4, 16, %s61, [#allocation9]
    $region21: #{tpu_custom_call.1} parent=1 // pred_fallthru
      _
    // Predicated region
    $region22: #{tpu_custom_call.1} parent=1 // pred_check
      _
    $region23: #{tpu_custom_call.1} parent=1 // pred_check_branch
      %65 = sbr.rel (0) target = $region25
    $region24: #{tpu_custom_call.1} parent=1 // pred_region
      _
    $region25: #{tpu_custom_call.1} parent=1 // pred_fallthru
      _
    // Predicated region
    $region26: #{tpu_custom_call.1} parent=1 // pred_check
      _
    $region27: #{tpu_custom_call.1} parent=1 // pred_check_branch
      %67 = sbr.rel (0) target = $region29
    $region28: #{tpu_custom_call.1} parent=1 // pred_region
      _
    $region29: #{tpu_custom_call.1} parent=1 // pred_fallthru
      _
    // Predicated region
    $region30: #{tpu_custom_call.1} parent=1 // pred_check
      _
    $region31: #{tpu_custom_call.1} parent=1 // pred_check_branch
      %69 = sbr.rel (0) target = $region33
    $region32: #{tpu_custom_call.1} parent=1 // pred_region
      _
    $region33: #{tpu_custom_call.1} parent=1 // pred_fallthru
      _
    // Predicated region
    $region34: #{tpu_custom_call.1} parent=1 // pred_check
      _
    $region35: #{tpu_custom_call.1} parent=1 // pred_check_branch
      %71 = sbr.rel (0) target = $region37
    $region36: #{tpu_custom_call.1} parent=1 // pred_region
      _
    $region37: #{tpu_custom_call.1} parent=1 // pred_fallthru
      _
    // Predicated region
    $region38: #{tpu_custom_call.1} parent=1 // pred_check
      _
    $region39: #{tpu_custom_call.1} parent=1 // pred_check_branch
      %73 = sbr.rel (0) target = $region41
    $region40: #{tpu_custom_call.1} parent=1 // pred_region
      _
    $region41: #{tpu_custom_call.1} parent=1 // pred_fallthru
      _
    // Predicated region
    $region42: #{tpu_custom_call.1} parent=1 // pred_check
      _
    $region43: #{tpu_custom_call.1} parent=1 // pred_check_branch
      %75 = sbr.rel (0) target = $region45
    $region44: #{tpu_custom_call.1} parent=1 // pred_region
      %76 = dma.done [#allocation4], 32
    $region45: #{tpu_custom_call.1} parent=1 // pred_fallthru
      _
    // Predicated region
    $region46: #{tpu_custom_call.1} parent=1 // pred_check
      _
    $region47: #{tpu_custom_call.1} parent=1 // pred_check_branch
      %78 = sbr.rel (0) target = $region49
    $region48: #{tpu_custom_call.1} parent=1 // pred_region
      %79 = dma.done [#allocation6], 128
    $region49: #{tpu_custom_call.1} parent=1 // pred_fallthru
      _
    // Predicated region
    $region50: #{tpu_custom_call.1} parent=1 // pred_check
      _
    $region51: #{tpu_custom_call.1} parent=1 // pred_check_branch
      %81 = sbr.rel (0) target = $region53
    $region52: #{tpu_custom_call.1} parent=1 // pred_region
      %82 = dma.done [#allocation6], 512
    $region53: #{tpu_custom_call.1} parent=1 // pred_fallthru
      _
    // Predicated region
    $region54: #{tpu_custom_call.1} parent=1 // pred_check
      _
    $region55: #{tpu_custom_call.1} parent=1 // pred_check_branch
      %84 = sbr.rel (0) target = $region57
    $region56: #{tpu_custom_call.1} parent=1 // pred_region
      %85 = dma.done [#allocation9], 16
    $region57: #{tpu_custom_call.1} parent=1 // pred_fallthru
      _
    %v86 = vld [vmem:[%s0] sm:$0xff]
    %v87 = vld [vmem:[%s0 + $0x8] sm:$0xff]
    %v88 = vld [vmem:[#allocation5] sm:$0x3f]
    %v89 = vld [vmem:[#allocation8] sm:$0x1]
    %v91 = vlaneseq
    %v92 = vshrl.u32 %v91, 7
    %v93 = vsub.s32 0, %v92
    %v94 = vrot.slane %v89, %v93
    %vm96 = vcmask 48128
    %v98 = vsel %vm96, %v86, 0
    %v101 = vsel %vm96, %v87, 0
    %vm103 = vcmask 1045504
    %v105 = vsel %vm103, %v88, 0
    %107 = vmatprep.subr.mxu0 0.0
    %108 = vmatpush1.msra.mxu0 0.0
    %109 = vmatprep.subr.mxu0 0.0
    %110 = vmatpush1.msra.mxu0 0.0
    %111 = vmatprep.subr.mxu0 0.0
    %112 = vmatpush1.msra.mxu0 0.0
    %113 = vmatprep.subr.mxu0 0.0
    %114 = vmatpush1.msra.mxu0 0.0
    %115 = vmatprep.subr.mxu0 0.0
    %116 = vmatpush1.msra.mxu0 0.0
    %117 = vmatprep.subr.mxu0 0.0
    %118 = vmatpush1.msra.mxu0 0.0
    %119 = vmatprep.subr.mxu0 0.0
    %120 = vmatpush1.msra.mxu0 0.0
    %121 = vmatprep.subr.mxu0 0.0
    %122 = vmatpush1.msra.mxu0 0.0
    %123 = vmatprep.subr.mxu0 0.0
    %124 = vmatpush1.msra.mxu0 0.0
    %125 = vmatprep.subr.mxu0 0.0
    %126 = vmatpush1.msra.mxu0 0.0
    %127 = vmatprep.subr.mxu0 0.0
    %128 = vmatpush1.msra.mxu0 0.0
    %129 = vmatprep.subr.mxu0 0.0
    %130 = vmatpush1.msra.mxu0 0.0
    %131 = vmatprep.subr.mxu0 0.0
    %132 = vmatpush1.msra.mxu0 0.0
    %133 = vmatprep.subr.mxu0 0.0
    %134 = vmatpush1.msra.mxu0 0.0
    %135 = vmatprep.subr.mxu0 0.0
    %136 = vmatpush1.msra.mxu0 0.0
    %137 = vmatprep.subr.mxu0 0.0
    %138 = vmatpush1.msra.mxu0 %v105
    %139 = vmatprep.subr.mxu0 0.0
    %140 = vmatpush2.msra.mxu0 0.0
    %141 = vmatprep.subr.mxu0 0.0
    %142 = vmatpush2.msra.mxu0 0.0
    %143 = vmatprep.subr.mxu0 0.0
    %144 = vmatpush2.msra.mxu0 0.0
    %145 = vmatprep.subr.mxu0 0.0
    %146 = vmatpush2.msra.mxu0 0.0
    %147 = vmatprep.subr.mxu0 0.0
    %148 = vmatpush2.msra.mxu0 0.0
    %149 = vmatprep.subr.mxu0 0.0
    %150 = vmatpush2.msra.mxu0 0.0
    %151 = vmatprep.subr.mxu0 0.0
    %152 = vmatpush2.msra.mxu0 0.0
    %153 = vmatprep.subr.mxu0 0.0
    %154 = vmatpush2.msra.mxu0 0.0
    %155 = vmatprep.subr.mxu0 0.0
    %156 = vmatpush2.msra.mxu0 0.0
    %157 = vmatprep.subr.mxu0 0.0
    %158 = vmatpush2.msra.mxu0 0.0
    %159 = vmatprep.subr.mxu0 0.0
    %160 = vmatpush2.msra.mxu0 0.0
    %161 = vmatprep.subr.mxu0 0.0
    %162 = vmatpush2.msra.mxu0 0.0
    %163 = vmatprep.subr.mxu0 0.0
    %164 = vmatpush2.msra.mxu0 0.0
    %165 = vmatprep.subr.mxu0 0.0
    %166 = vmatpush2.msra.mxu0 0.0
    %167 = vmatprep.subr.mxu0 0.0
    %168 = vmatpush2.msra.mxu0 0.0
    %169 = vmatprep.subr.mxu0 0.0
    %170 = vmatpush2.msra.mxu0 0.0
    %171 = vmatprep.mubr.f32.mxu0 0.0
    %172 = vmatmul.mubr.f32.gmra.mxu0 %v98
    %v173 = vpop.f32.mrf.mxu0
    %v174 = vadd.f32 %v94, %v173
    %v175 = vpop.f32.mrf.mxu0
    %176 = vmatprep.mubr.f32.mxu0 0.0
    %177 = vmatmul.mubr.f32.gmra.mxu0 %v101
    %v178 = vpop.f32.mrf.mxu0
    %v179 = vadd.f32 %v94, %v178
    %v180 = vpop.f32.mrf.mxu0
    %181 = vdwg.mxu0
    %v182 = vld [vmem:[#allocation7] sm:$0xff]
    %v183 = vld [vmem:[#allocation7 + $0x8] sm:$0xff]
    %v184 = vld [vmem:[#allocation7 + $0x10] sm:$0xff]
    %v185 = vld [vmem:[#allocation7 + $0x18] sm:$0xff]
    %vm186 = vcmask 261120
    %v188 = vsel %vm186, 0.0, 0
    %190 = vmatprep.subr.mxu0 0.0
    %191 = vmatpush1.msra.mxu0 0.0
    %192 = vmatprep.subr.mxu0 0.0
    %193 = vmatpush1.msra.mxu0 0.0
    %194 = vmatprep.subr.mxu0 0.0
    %195 = vmatpush1.msra.mxu0 0.0
    %196 = vmatprep.subr.mxu0 0.0
    %197 = vmatpush1.msra.mxu0 0.0
    %198 = vmatprep.subr.mxu0 0.0
    %199 = vmatpush1.msra.mxu0 0.0
    %200 = vmatprep.subr.mxu0 0.0
    %201 = vmatpush1.msra.mxu0 0.0
    %202 = vmatprep.subr.mxu0 0.0
    %203 = vmatpush1.msra.mxu0 0.0
    %204 = vmatprep.subr.mxu0 0.0
    %205 = vmatpush1.msra.mxu0 0.0
    %206 = vmatprep.subr.mxu0 0.0
    %207 = vmatpush1.msra.mxu0 0.0
    %208 = vmatprep.subr.mxu0 0.0
    %209 = vmatpush1.msra.mxu0 0.0
    %210 = vmatprep.subr.mxu0 0.0
    %211 = vmatpush1.msra.mxu0 0.0
    %212 = vmatprep.subr.mxu0 0.0
    %213 = vmatpush1.msra.mxu0 0.0
    %214 = vmatprep.subr.mxu0 0.0
    %215 = vmatpush1.msra.mxu0 %v185
    %216 = vmatprep.subr.mxu0 0.0
    %217 = vmatpush1.msra.mxu0 %v184
    %218 = vmatprep.subr.mxu0 0.0
    %219 = vmatpush1.msra.mxu0 %v183
    %220 = vmatprep.subr.mxu0 0.0
    %221 = vmatpush1.msra.mxu0 %v182
    %222 = vmatprep.subr.mxu0 0.0
    %223 = vmatpush2.msra.mxu0 0.0
    %224 = vmatprep.subr.mxu0 0.0
    %225 = vmatpush2.msra.mxu0 0.0
    %226 = vmatprep.subr.mxu0 0.0
    %227 = vmatpush2.msra.mxu0 0.0
    %228 = vmatprep.subr.mxu0 0.0
    %229 = vmatpush2.msra.mxu0 0.0
    %230 = vmatprep.subr.mxu0 0.0
    %231 = vmatpush2.msra.mxu0 0.0
    %232 = vmatprep.subr.mxu0 0.0
    %233 = vmatpush2.msra.mxu0 0.0
    %234 = vmatprep.subr.mxu0 0.0
    %235 = vmatpush2.msra.mxu0 0.0
    %236 = vmatprep.subr.mxu0 0.0
    %237 = vmatpush2.msra.mxu0 0.0
    %238 = vmatprep.subr.mxu0 0.0
    %239 = vmatpush2.msra.mxu0 0.0
    %240 = vmatprep.subr.mxu0 0.0
    %241 = vmatpush2.msra.mxu0 0.0
    %242 = vmatprep.subr.mxu0 0.0
    %243 = vmatpush2.msra.mxu0 0.0
    %244 = vmatprep.subr.mxu0 0.0
    %245 = vmatpush2.msra.mxu0 0.0
    %246 = vmatprep.subr.mxu0 0.0
    %247 = vmatpush2.msra.mxu0 0.0
    %248 = vmatprep.subr.mxu0 0.0
    %249 = vmatpush2.msra.mxu0 0.0
    %250 = vmatprep.subr.mxu0 0.0
    %251 = vmatpush2.msra.mxu0 0.0
    %252 = vmatprep.subr.mxu0 0.0
    %253 = vmatpush2.msra.mxu0 0.0
    %254 = vmatprep.mubr.f32.mxu0 0.0
    %255 = vmatmul.mubr.f32.gmra.mxu0 %v188
    %v256 = vpop.f32.mrf.mxu0
    %v257 = vadd.f32 0.0, %v256
    %v258 = vpop.f32.mrf.mxu0
    %259 = vdwg.mxu0
    %v260 = vadd.f32 %v174, %v257
    %v261 = vxor.u32 %v260, 2147483648
    %v262 = vmul.f32 %v261, 1.442695
    %v263 = vpow.pop %v262
    %v264 = vadd.f32 %v263, 1.0
    %v265 = vrcp.pop %v264
    %v266 = vmul.f32 1.0, %v265
    %271 = vrot.lane.b32.xlu0 %v182, 96
    %v272 = vpop.permute.xlu0 %271
    %273 = vrot.lane.b32.xlu0 %v183, 96
    %v274 = vpop.permute.xlu0 %273
    %275 = vrot.lane.b32.xlu0 %v184, 96
    %v276 = vpop.permute.xlu0 %275
    %277 = vrot.lane.b32.xlu0 %v185, 96
    %v278 = vpop.permute.xlu0 %277
    %283 = vmatprep.subr.mxu0 0.0
    %284 = vmatpush1.msra.mxu0 0.0
    %285 = vmatprep.subr.mxu0 0.0
    %286 = vmatpush1.msra.mxu0 0.0
    %287 = vmatprep.subr.mxu0 0.0
    %288 = vmatpush1.msra.mxu0 0.0
    %289 = vmatprep.subr.mxu0 0.0
    %290 = vmatpush1.msra.mxu0 0.0
    %291 = vmatprep.subr.mxu0 0.0
    %292 = vmatpush1.msra.mxu0 0.0
    %293 = vmatprep.subr.mxu0 0.0
    %294 = vmatpush1.msra.mxu0 0.0
    %295 = vmatprep.subr.mxu0 0.0
    %296 = vmatpush1.msra.mxu0 0.0
    %297 = vmatprep.subr.mxu0 0.0
    %298 = vmatpush1.msra.mxu0 0.0
    %299 = vmatprep.subr.mxu0 0.0
    %300 = vmatpush1.msra.mxu0 0.0
    %301 = vmatprep.subr.mxu0 0.0
    %302 = vmatpush1.msra.mxu0 0.0
    %303 = vmatprep.subr.mxu0 0.0
    %304 = vmatpush1.msra.mxu0 0.0
    %305 = vmatprep.subr.mxu0 0.0
    %306 = vmatpush1.msra.mxu0 0.0
    %307 = vmatprep.subr.mxu0 0.0
    %308 = vmatpush1.msra.mxu0 %v278
    %309 = vmatprep.subr.mxu0 0.0
    %310 = vmatpush1.msra.mxu0 %v276
    %311 = vmatprep.subr.mxu0 0.0
    %312 = vmatpush1.msra.mxu0 %v274
    %313 = vmatprep.subr.mxu0 0.0
    %314 = vmatpush1.msra.mxu0 %v272
    %315 = vmatprep.subr.mxu0 0.0
    %316 = vmatpush2.msra.mxu0 0.0
    %317 = vmatprep.subr.mxu0 0.0
    %318 = vmatpush2.msra.mxu0 0.0
    %319 = vmatprep.subr.mxu0 0.0
    %320 = vmatpush2.msra.mxu0 0.0
    %321 = vmatprep.subr.mxu0 0.0
    %322 = vmatpush2.msra.mxu0 0.0
    %323 = vmatprep.subr.mxu0 0.0
    %324 = vmatpush2.msra.mxu0 0.0
    %325 = vmatprep.subr.mxu0 0.0
    %326 = vmatpush2.msra.mxu0 0.0
    %327 = vmatprep.subr.mxu0 0.0
    %328 = vmatpush2.msra.mxu0 0.0
    %329 = vmatprep.subr.mxu0 0.0
    %330 = vmatpush2.msra.mxu0 0.0
    %331 = vmatprep.subr.mxu0 0.0
    %332 = vmatpush2.msra.mxu0 0.0
    %333 = vmatprep.subr.mxu0 0.0
    %334 = vmatpush2.msra.mxu0 0.0
    %335 = vmatprep.subr.mxu0 0.0
    %336 = vmatpush2.msra.mxu0 0.0
    %337 = vmatprep.subr.mxu0 0.0
    %338 = vmatpush2.msra.mxu0 0.0
    %339 = vmatprep.subr.mxu0 0.0
    %340 = vmatpush2.msra.mxu0 0.0
    %341 = vmatprep.subr.mxu0 0.0
    %342 = vmatpush2.msra.mxu0 0.0
    %343 = vmatprep.subr.mxu0 0.0
    %344 = vmatpush2.msra.mxu0 0.0
    %345 = vmatprep.subr.mxu0 0.0
    %346 = vmatpush2.msra.mxu0 0.0
    %347 = vmatprep.mubr.f32.mxu0 0.0
    %348 = vmatmul.mubr.f32.gmra.mxu0 %v188
    %v349 = vpop.f32.mrf.mxu0
    %v350 = vadd.f32 0.0, %v349
    %v351 = vpop.f32.mrf.mxu0
    %352 = vdwg.mxu0
    %354 = vrot.lane.b32.xlu0 %v350, 32
    %v355 = vpop.permute.xlu0 %354
    %v357 = vadd.f32 %v174, %v355
    %v358 = vxor.u32 %v357, 2147483648
    %v359 = vmul.f32 %v358, 1.442695
    %v360 = vpow.pop %v359
    %v361 = vadd.f32 %v360, 1.0
    %v362 = vrcp.pop %v361
    %v363 = vmul.f32 1.0, %v362
    %364 = vrot.lane.b32.xlu0 %v182, 64
    %v365 = vpop.permute.xlu0 %364
    %366 = vrot.lane.b32.xlu0 %v183, 64
    %v367 = vpop.permute.xlu0 %366
    %368 = vrot.lane.b32.xlu0 %v184, 64
    %v369 = vpop.permute.xlu0 %368
    %370 = vrot.lane.b32.xlu0 %v185, 64
    %v371 = vpop.permute.xlu0 %370
    %376 = vmatprep.subr.mxu0 0.0
    %377 = vmatpush1.msra.mxu0 0.0
    %378 = vmatprep.subr.mxu0 0.0
    %379 = vmatpush1.msra.mxu0 0.0
    %380 = vmatprep.subr.mxu0 0.0
    %381 = vmatpush1.msra.mxu0 0.0
    %382 = vmatprep.subr.mxu0 0.0
    %383 = vmatpush1.msra.mxu0 0.0
    %384 = vmatprep.subr.mxu0 0.0
    %385 = vmatpush1.msra.mxu0 0.0
    %386 = vmatprep.subr.mxu0 0.0
    %387 = vmatpush1.msra.mxu0 0.0
    %388 = vmatprep.subr.mxu0 0.0
    %389 = vmatpush1.msra.mxu0 0.0
    %390 = vmatprep.subr.mxu0 0.0
    %391 = vmatpush1.msra.mxu0 0.0
    %392 = vmatprep.subr.mxu0 0.0
    %393 = vmatpush1.msra.mxu0 0.0
    %394 = vmatprep.subr.mxu0 0.0
    %395 = vmatpush1.msra.mxu0 0.0
    %396 = vmatprep.subr.mxu0 0.0
    %397 = vmatpush1.msra.mxu0 0.0
    %398 = vmatprep.subr.mxu0 0.0
    %399 = vmatpush1.msra.mxu0 0.0
    %400 = vmatprep.subr.mxu0 0.0
    %401 = vmatpush1.msra.mxu0 %v371
    %402 = vmatprep.subr.mxu0 0.0
    %403 = vmatpush1.msra.mxu0 %v369
    %404 = vmatprep.subr.mxu0 0.0
    %405 = vmatpush1.msra.mxu0 %v367
    %406 = vmatprep.subr.mxu0 0.0
    %407 = vmatpush1.msra.mxu0 %v365
    %408 = vmatprep.subr.mxu0 0.0
    %409 = vmatpush2.msra.mxu0 0.0
    %410 = vmatprep.subr.mxu0 0.0
    %411 = vmatpush2.msra.mxu0 0.0
    %412 = vmatprep.subr.mxu0 0.0
    %413 = vmatpush2.msra.mxu0 0.0
    %414 = vmatprep.subr.mxu0 0.0
    %415 = vmatpush2.msra.mxu0 0.0
    %416 = vmatprep.subr.mxu0 0.0
    %417 = vmatpush2.msra.mxu0 0.0
    %418 = vmatprep.subr.mxu0 0.0
    %419 = vmatpush2.msra.mxu0 0.0
    %420 = vmatprep.subr.mxu0 0.0
    %421 = vmatpush2.msra.mxu0 0.0
    %422 = vmatprep.subr.mxu0 0.0
    %423 = vmatpush2.msra.mxu0 0.0
    %424 = vmatprep.subr.mxu0 0.0
    %425 = vmatpush2.msra.mxu0 0.0
    %426 = vmatprep.subr.mxu0 0.0
    %427 = vmatpush2.msra.mxu0 0.0
    %428 = vmatprep.subr.mxu0 0.0
    %429 = vmatpush2.msra.mxu0 0.0
    %430 = vmatprep.subr.mxu0 0.0
    %431 = vmatpush2.msra.mxu0 0.0
    %432 = vmatprep.subr.mxu0 0.0
    %433 = vmatpush2.msra.mxu0 0.0
    %434 = vmatprep.subr.mxu0 0.0
    %435 = vmatpush2.msra.mxu0 0.0
    %436 = vmatprep.subr.mxu0 0.0
    %437 = vmatpush2.msra.mxu0 0.0
    %438 = vmatprep.subr.mxu0 0.0
    %439 = vmatpush2.msra.mxu0 0.0
    %440 = vmatprep.mubr.f32.mxu0 0.0
    %441 = vmatmul.mubr.f32.gmra.mxu0 %v188
    %v442 = vpop.f32.mrf.mxu0
    %v443 = vadd.f32 0.0, %v442
    %v444 = vpop.f32.mrf.mxu0
    %445 = vdwg.mxu0
    %447 = vrot.lane.b32.xlu0 %v443, 64
    %v448 = vpop.permute.xlu0 %447
    %v450 = vadd.f32 %v174, %v448
    %v451 = vtanh.pop %v450
    %452 = vrot.lane.b32.xlu0 %v182, 32
    %v453 = vpop.permute.xlu0 %452
    %454 = vrot.lane.b32.xlu0 %v183, 32
    %v455 = vpop.permute.xlu0 %454
    %456 = vrot.lane.b32.xlu0 %v184, 32
    %v457 = vpop.permute.xlu0 %456
    %458 = vrot.lane.b32.xlu0 %v185, 32
    %v459 = vpop.permute.xlu0 %458
    %464 = vmatprep.subr.mxu0 0.0
    %465 = vmatpush1.msra.mxu0 0.0
    %466 = vmatprep.subr.mxu0 0.0
    %467 = vmatpush1.msra.mxu0 0.0
    %468 = vmatprep.subr.mxu0 0.0
    %469 = vmatpush1.msra.mxu0 0.0
    %470 = vmatprep.subr.mxu0 0.0
    %471 = vmatpush1.msra.mxu0 0.0
    %472 = vmatprep.subr.mxu0 0.0
    %473 = vmatpush1.msra.mxu0 0.0
    %474 = vmatprep.subr.mxu0 0.0
    %475 = vmatpush1.msra.mxu0 0.0
    %476 = vmatprep.subr.mxu0 0.0
    %477 = vmatpush1.msra.mxu0 0.0
    %478 = vmatprep.subr.mxu0 0.0
    %479 = vmatpush1.msra.mxu0 0.0
    %480 = vmatprep.subr.mxu0 0.0
    %481 = vmatpush1.msra.mxu0 0.0
    %482 = vmatprep.subr.mxu0 0.0
    %483 = vmatpush1.msra.mxu0 0.0
    %484 = vmatprep.subr.mxu0 0.0
    %485 = vmatpush1.msra.mxu0 0.0
    %486 = vmatprep.subr.mxu0 0.0
    %487 = vmatpush1.msra.mxu0 0.0
    %488 = vmatprep.subr.mxu0 0.0
    %489 = vmatpush1.msra.mxu0 %v459
    %490 = vmatprep.subr.mxu0 0.0
    %491 = vmatpush1.msra.mxu0 %v457
    %492 = vmatprep.subr.mxu0 0.0
    %493 = vmatpush1.msra.mxu0 %v455
    %494 = vmatprep.subr.mxu0 0.0
    %495 = vmatpush1.msra.mxu0 %v453
    %496 = vmatprep.subr.mxu0 0.0
    %497 = vmatpush2.msra.mxu0 0.0
    %498 = vmatprep.subr.mxu0 0.0
    %499 = vmatpush2.msra.mxu0 0.0
    %500 = vmatprep.subr.mxu0 0.0
    %501 = vmatpush2.msra.mxu0 0.0
    %502 = vmatprep.subr.mxu0 0.0
    %503 = vmatpush2.msra.mxu0 0.0
    %504 = vmatprep.subr.mxu0 0.0
    %505 = vmatpush2.msra.mxu0 0.0
    %506 = vmatprep.subr.mxu0 0.0
    %507 = vmatpush2.msra.mxu0 0.0
    %508 = vmatprep.subr.mxu0 0.0
    %509 = vmatpush2.msra.mxu0 0.0
    %510 = vmatprep.subr.mxu0 0.0
    %511 = vmatpush2.msra.mxu0 0.0
    %512 = vmatprep.subr.mxu0 0.0
    %513 = vmatpush2.msra.mxu0 0.0
    %514 = vmatprep.subr.mxu0 0.0
    %515 = vmatpush2.msra.mxu0 0.0
    %516 = vmatprep.subr.mxu0 0.0
    %517 = vmatpush2.msra.mxu0 0.0
    %518 = vmatprep.subr.mxu0 0.0
    %519 = vmatpush2.msra.mxu0 0.0
    %520 = vmatprep.subr.mxu0 0.0
    %521 = vmatpush2.msra.mxu0 0.0
    %522 = vmatprep.subr.mxu0 0.0
    %523 = vmatpush2.msra.mxu0 0.0
    %524 = vmatprep.subr.mxu0 0.0
    %525 = vmatpush2.msra.mxu0 0.0
    %526 = vmatprep.subr.mxu0 0.0
    %527 = vmatpush2.msra.mxu0 0.0
    %528 = vmatprep.mubr.f32.mxu0 0.0
    %529 = vmatmul.mubr.f32.gmra.mxu0 %v188
    %v530 = vpop.f32.mrf.mxu0
    %v531 = vadd.f32 0.0, %v530
    %v532 = vpop.f32.mrf.mxu0
    %533 = vdwg.mxu0
    %535 = vrot.lane.b32.xlu0 %v531, 96
    %v536 = vpop.permute.xlu0 %535
    %v538 = vadd.f32 %v174, %v536
    %v539 = vxor.u32 %v538, 2147483648
    %v540 = vmul.f32 %v539, 1.442695
    %v541 = vpow.pop %v540
    %v542 = vadd.f32 %v541, 1.0
    %v543 = vrcp.pop %v542
    %v544 = vmul.f32 1.0, %v543
    %v545 = vmul.f32 %v363, 0.0
    %547 = vrot.lane.b32.xlu0 %v451, 64
    %v548 = vpop.permute.xlu0 %547
    %v550 = vmul.f32 %v266, %v548
    %552 = vrot.lane.b32.xlu0 %v550, 32
    %v553 = vpop.permute.xlu0 %552
    %v555 = vadd.f32 %v545, %v553
    %v556 = vtanh.pop %v555
    %558 = vrot.lane.b32.xlu0 %v556, 64
    %v559 = vpop.permute.xlu0 %558
    %v561 = vmul.f32 %v544, %v559
    %563 = vrot.lane.b32.xlu0 %v561, 32
    %v564 = vpop.permute.xlu0 %563
    %v565 = vsel %vm186, %v564, 0
    %567 = vmatprep.subr.mxu0 0.0
    %568 = vmatpush1.msra.mxu0 0.0
    %569 = vmatprep.subr.mxu0 0.0
    %570 = vmatpush1.msra.mxu0 0.0
    %571 = vmatprep.subr.mxu0 0.0
    %572 = vmatpush1.msra.mxu0 0.0
    %573 = vmatprep.subr.mxu0 0.0
    %574 = vmatpush1.msra.mxu0 0.0
    %575 = vmatprep.subr.mxu0 0.0
    %576 = vmatpush1.msra.mxu0 0.0
    %577 = vmatprep.subr.mxu0 0.0
    %578 = vmatpush1.msra.mxu0 0.0
    %579 = vmatprep.subr.mxu0 0.0
    %580 = vmatpush1.msra.mxu0 0.0
    %581 = vmatprep.subr.mxu0 0.0
    %582 = vmatpush1.msra.mxu0 0.0
    %583 = vmatprep.subr.mxu0 0.0
    %584 = vmatpush1.msra.mxu0 0.0
    %585 = vmatprep.subr.mxu0 0.0
    %586 = vmatpush1.msra.mxu0 0.0
    %587 = vmatprep.subr.mxu0 0.0
    %588 = vmatpush1.msra.mxu0 0.0
    %589 = vmatprep.subr.mxu0 0.0
    %590 = vmatpush1.msra.mxu0 0.0
    %591 = vmatprep.subr.mxu0 0.0
    %592 = vmatpush1.msra.mxu0 %v185
    %593 = vmatprep.subr.mxu0 0.0
    %594 = vmatpush1.msra.mxu0 %v184
    %595 = vmatprep.subr.mxu0 0.0
    %596 = vmatpush1.msra.mxu0 %v183
    %597 = vmatprep.subr.mxu0 0.0
    %598 = vmatpush1.msra.mxu0 %v182
    %599 = vmatprep.subr.mxu0 0.0
    %600 = vmatpush2.msra.mxu0 0.0
    %601 = vmatprep.subr.mxu0 0.0
    %602 = vmatpush2.msra.mxu0 0.0
    %603 = vmatprep.subr.mxu0 0.0
    %604 = vmatpush2.msra.mxu0 0.0
    %605 = vmatprep.subr.mxu0 0.0
    %606 = vmatpush2.msra.mxu0 0.0
    %607 = vmatprep.subr.mxu0 0.0
    %608 = vmatpush2.msra.mxu0 0.0
    %609 = vmatprep.subr.mxu0 0.0
    %610 = vmatpush2.msra.mxu0 0.0
    %611 = vmatprep.subr.mxu0 0.0
    %612 = vmatpush2.msra.mxu0 0.0
    %613 = vmatprep.subr.mxu0 0.0
    %614 = vmatpush2.msra.mxu0 0.0
    %615 = vmatprep.subr.mxu0 0.0
    %616 = vmatpush2.msra.mxu0 0.0
    %617 = vmatprep.subr.mxu0 0.0
    %618 = vmatpush2.msra.mxu0 0.0
    %619 = vmatprep.subr.mxu0 0.0
    %620 = vmatpush2.msra.mxu0 0.0
    %621 = vmatprep.subr.mxu0 0.0
    %622 = vmatpush2.msra.mxu0 0.0
    %623 = vmatprep.subr.mxu0 0.0
    %624 = vmatpush2.msra.mxu0 0.0
    %625 = vmatprep.subr.mxu0 0.0
    %626 = vmatpush2.msra.mxu0 0.0
    %627 = vmatprep.subr.mxu0 0.0
    %628 = vmatpush2.msra.mxu0 0.0
    %629 = vmatprep.subr.mxu0 0.0
    %630 = vmatpush2.msra.mxu0 0.0
    %631 = vmatprep.mubr.f32.mxu0 0.0
    %632 = vmatmul.mubr.f32.gmra.mxu0 %v565
    %v633 = vpop.f32.mrf.mxu0
    %v634 = vadd.f32 0.0, %v633
    %v635 = vpop.f32.mrf.mxu0
    %636 = vdwg.mxu0
    %v638 = vrot.slane %v634, 6
    %v640 = vadd.f32 %v174, %v638
    %v641 = vxor.u32 %v640, 2147483648
    %v642 = vmul.f32 %v641, 1.442695
    %v643 = vpow.pop %v642
    %v644 = vadd.f32 %v643, 1.0
    %v645 = vrcp.pop %v644
    %v646 = vmul.f32 1.0, %v645
    %647 = vmatprep.subr.mxu0 0.0
    %648 = vmatpush1.msra.mxu0 0.0
    %649 = vmatprep.subr.mxu0 0.0
    %650 = vmatpush1.msra.mxu0 0.0
    %651 = vmatprep.subr.mxu0 0.0
    %652 = vmatpush1.msra.mxu0 0.0
    %653 = vmatprep.subr.mxu0 0.0
    %654 = vmatpush1.msra.mxu0 0.0
    %655 = vmatprep.subr.mxu0 0.0
    %656 = vmatpush1.msra.mxu0 0.0
    %657 = vmatprep.subr.mxu0 0.0
    %658 = vmatpush1.msra.mxu0 0.0
    %659 = vmatprep.subr.mxu0 0.0
    %660 = vmatpush1.msra.mxu0 0.0
    %661 = vmatprep.subr.mxu0 0.0
    %662 = vmatpush1.msra.mxu0 0.0
    %663 = vmatprep.subr.mxu0 0.0
    %664 = vmatpush1.msra.mxu0 0.0
    %665 = vmatprep.subr.mxu0 0.0
    %666 = vmatpush1.msra.mxu0 0.0
    %667 = vmatprep.subr.mxu0 0.0
    %668 = vmatpush1.msra.mxu0 0.0
    %669 = vmatprep.subr.mxu0 0.0
    %670 = vmatpush1.msra.mxu0 0.0
    %671 = vmatprep.subr.mxu0 0.0
    %672 = vmatpush1.msra.mxu0 %v278
    %673 = vmatprep.subr.mxu0 0.0
    %674 = vmatpush1.msra.mxu0 %v276
    %675 = vmatprep.subr.mxu0 0.0
    %676 = vmatpush1.msra.mxu0 %v274
    %677 = vmatprep.subr.mxu0 0.0
    %678 = vmatpush1.msra.mxu0 %v272
    %679 = vmatprep.subr.mxu0 0.0
    %680 = vmatpush2.msra.mxu0 0.0
    %681 = vmatprep.subr.mxu0 0.0
    %682 = vmatpush2.msra.mxu0 0.0
    %683 = vmatprep.subr.mxu0 0.0
    %684 = vmatpush2.msra.mxu0 0.0
    %685 = vmatprep.subr.mxu0 0.0
    %686 = vmatpush2.msra.mxu0 0.0
    %687 = vmatprep.subr.mxu0 0.0
    %688 = vmatpush2.msra.mxu0 0.0
    %689 = vmatprep.subr.mxu0 0.0
    %690 = vmatpush2.msra.mxu0 0.0
    %691 = vmatprep.subr.mxu0 0.0
    %692 = vmatpush2.msra.mxu0 0.0
    %693 = vmatprep.subr.mxu0 0.0
    %694 = vmatpush2.msra.mxu0 0.0
    %695 = vmatprep.subr.mxu0 0.0
    %696 = vmatpush2.msra.mxu0 0.0
    %697 = vmatprep.subr.mxu0 0.0
    %698 = vmatpush2.msra.mxu0 0.0
    %699 = vmatprep.subr.mxu0 0.0
    %700 = vmatpush2.msra.mxu0 0.0
    %701 = vmatprep.subr.mxu0 0.0
    %702 = vmatpush2.msra.mxu0 0.0
    %703 = vmatprep.subr.mxu0 0.0
    %704 = vmatpush2.msra.mxu0 0.0
    %705 = vmatprep.subr.mxu0 0.0
    %706 = vmatpush2.msra.mxu0 0.0
    %707 = vmatprep.subr.mxu0 0.0
    %708 = vmatpush2.msra.mxu0 0.0
    %709 = vmatprep.subr.mxu0 0.0
    %710 = vmatpush2.msra.mxu0 0.0
    %711 = vmatprep.mubr.f32.mxu0 0.0
    %712 = vmatmul.mubr.f32.gmra.mxu0 %v565
    %v713 = vpop.f32.mrf.mxu0
    %v714 = vadd.f32 0.0, %v713
    %v715 = vpop.f32.mrf.mxu0
    %716 = vdwg.mxu0
    %v718 = vrot.slane %v714, 6
    %719 = vrot.lane.b32.xlu0 %v718, 32
    %v720 = vpop.permute.xlu0 %719
    %v722 = vadd.f32 %v174, %v720
    %v723 = vxor.u32 %v722, 2147483648
    %v724 = vmul.f32 %v723, 1.442695
    %v725 = vpow.pop %v724
    %v726 = vadd.f32 %v725, 1.0
    %v727 = vrcp.pop %v726
    %v728 = vmul.f32 1.0, %v727
    %729 = vmatprep.subr.mxu0 0.0
    %730 = vmatpush1.msra.mxu0 0.0
    %731 = vmatprep.subr.mxu0 0.0
    %732 = vmatpush1.msra.mxu0 0.0
    %733 = vmatprep.subr.mxu0 0.0
    %734 = vmatpush1.msra.mxu0 0.0
    %735 = vmatprep.subr.mxu0 0.0
    %736 = vmatpush1.msra.mxu0 0.0
    %737 = vmatprep.subr.mxu0 0.0
    %738 = vmatpush1.msra.mxu0 0.0
    %739 = vmatprep.subr.mxu0 0.0
    %740 = vmatpush1.msra.mxu0 0.0
    %741 = vmatprep.subr.mxu0 0.0
    %742 = vmatpush1.msra.mxu0 0.0
    %743 = vmatprep.subr.mxu0 0.0
    %744 = vmatpush1.msra.mxu0 0.0
    %745 = vmatprep.subr.mxu0 0.0
    %746 = vmatpush1.msra.mxu0 0.0
    %747 = vmatprep.subr.mxu0 0.0
    %748 = vmatpush1.msra.mxu0 0.0
    %749 = vmatprep.subr.mxu0 0.0
    %750 = vmatpush1.msra.mxu0 0.0
    %751 = vmatprep.subr.mxu0 0.0
    %752 = vmatpush1.msra.mxu0 0.0
    %753 = vmatprep.subr.mxu0 0.0
    %754 = vmatpush1.msra.mxu0 %v371
    %755 = vmatprep.subr.mxu0 0.0
    %756 = vmatpush1.msra.mxu0 %v369
    %757 = vmatprep.subr.mxu0 0.0
    %758 = vmatpush1.msra.mxu0 %v367
    %759 = vmatprep.subr.mxu0 0.0
    %760 = vmatpush1.msra.mxu0 %v365
    %761 = vmatprep.subr.mxu0 0.0
    %762 = vmatpush2.msra.mxu0 0.0
    %763 = vmatprep.subr.mxu0 0.0
    %764 = vmatpush2.msra.mxu0 0.0
    %765 = vmatprep.subr.mxu0 0.0
    %766 = vmatpush2.msra.mxu0 0.0
    %767 = vmatprep.subr.mxu0 0.0
    %768 = vmatpush2.msra.mxu0 0.0
    %769 = vmatprep.subr.mxu0 0.0
    %770 = vmatpush2.msra.mxu0 0.0
    %771 = vmatprep.subr.mxu0 0.0
    %772 = vmatpush2.msra.mxu0 0.0
    %773 = vmatprep.subr.mxu0 0.0
    %774 = vmatpush2.msra.mxu0 0.0
    %775 = vmatprep.subr.mxu0 0.0
    %776 = vmatpush2.msra.mxu0 0.0
    %777 = vmatprep.subr.mxu0 0.0
    %778 = vmatpush2.msra.mxu0 0.0
    %779 = vmatprep.subr.mxu0 0.0
    %780 = vmatpush2.msra.mxu0 0.0
    %781 = vmatprep.subr.mxu0 0.0
    %782 = vmatpush2.msra.mxu0 0.0
    %783 = vmatprep.subr.mxu0 0.0
    %784 = vmatpush2.msra.mxu0 0.0
    %785 = vmatprep.subr.mxu0 0.0
    %786 = vmatpush2.msra.mxu0 0.0
    %787 = vmatprep.subr.mxu0 0.0
    %788 = vmatpush2.msra.mxu0 0.0
    %789 = vmatprep.subr.mxu0 0.0
    %790 = vmatpush2.msra.mxu0 0.0
    %791 = vmatprep.subr.mxu0 0.0
    %792 = vmatpush2.msra.mxu0 0.0
    %793 = vmatprep.mubr.f32.mxu0 0.0
    %794 = vmatmul.mubr.f32.gmra.mxu0 %v565
    %v795 = vpop.f32.mrf.mxu0
    %v796 = vadd.f32 0.0, %v795
    %v797 = vpop.f32.mrf.mxu0
    %798 = vdwg.mxu0
    %v800 = vrot.slane %v796, 6
    %801 = vrot.lane.b32.xlu0 %v800, 64
    %v802 = vpop.permute.xlu0 %801
    %v804 = vadd.f32 %v174, %v802
    %v805 = vtanh.pop %v804
    %806 = vmatprep.subr.mxu0 0.0
    %807 = vmatpush1.msra.mxu0 0.0
    %808 = vmatprep.subr.mxu0 0.0
    %809 = vmatpush1.msra.mxu0 0.0
    %810 = vmatprep.subr.mxu0 0.0
    %811 = vmatpush1.msra.mxu0 0.0
    %812 = vmatprep.subr.mxu0 0.0
    %813 = vmatpush1.msra.mxu0 0.0
    %814 = vmatprep.subr.mxu0 0.0
    %815 = vmatpush1.msra.mxu0 0.0
    %816 = vmatprep.subr.mxu0 0.0
    %817 = vmatpush1.msra.mxu0 0.0
    %818 = vmatprep.subr.mxu0 0.0
    %819 = vmatpush1.msra.mxu0 0.0
    %820 = vmatprep.subr.mxu0 0.0
    %821 = vmatpush1.msra.mxu0 0.0
    %822 = vmatprep.subr.mxu0 0.0
    %823 = vmatpush1.msra.mxu0 0.0
    %824 = vmatprep.subr.mxu0 0.0
    %825 = vmatpush1.msra.mxu0 0.0
    %826 = vmatprep.subr.mxu0 0.0
    %827 = vmatpush1.msra.mxu0 0.0
    %828 = vmatprep.subr.mxu0 0.0
    %829 = vmatpush1.msra.mxu0 0.0
    %830 = vmatprep.subr.mxu0 0.0
    %831 = vmatpush1.msra.mxu0 %v459
    %832 = vmatprep.subr.mxu0 0.0
    %833 = vmatpush1.msra.mxu0 %v457
    %834 = vmatprep.subr.mxu0 0.0
    %835 = vmatpush1.msra.mxu0 %v455
    %836 = vmatprep.subr.mxu0 0.0
    %837 = vmatpush1.msra.mxu0 %v453
    %838 = vmatprep.subr.mxu0 0.0
    %839 = vmatpush2.msra.mxu0 0.0
    %840 = vmatprep.subr.mxu0 0.0
    %841 = vmatpush2.msra.mxu0 0.0
    %842 = vmatprep.subr.mxu0 0.0
    %843 = vmatpush2.msra.mxu0 0.0
    %844 = vmatprep.subr.mxu0 0.0
    %845 = vmatpush2.msra.mxu0 0.0
    %846 = vmatprep.subr.mxu0 0.0
    %847 = vmatpush2.msra.mxu0 0.0
    %848 = vmatprep.subr.mxu0 0.0
    %849 = vmatpush2.msra.mxu0 0.0
    %850 = vmatprep.subr.mxu0 0.0
    %851 = vmatpush2.msra.mxu0 0.0
    %852 = vmatprep.subr.mxu0 0.0
    %853 = vmatpush2.msra.mxu0 0.0
    %854 = vmatprep.subr.mxu0 0.0
    %855 = vmatpush2.msra.mxu0 0.0
    %856 = vmatprep.subr.mxu0 0.0
    %857 = vmatpush2.msra.mxu0 0.0
    %858 = vmatprep.subr.mxu0 0.0
    %859 = vmatpush2.msra.mxu0 0.0
    %860 = vmatprep.subr.mxu0 0.0
    %861 = vmatpush2.msra.mxu0 0.0
    %862 = vmatprep.subr.mxu0 0.0
    %863 = vmatpush2.msra.mxu0 0.0
    %864 = vmatprep.subr.mxu0 0.0
    %865 = vmatpush2.msra.mxu0 0.0
    %866 = vmatprep.subr.mxu0 0.0
    %867 = vmatpush2.msra.mxu0 0.0
    %868 = vmatprep.subr.mxu0 0.0
    %869 = vmatpush2.msra.mxu0 0.0
    %870 = vmatprep.mubr.f32.mxu0 0.0
    %871 = vmatmul.mubr.f32.gmra.mxu0 %v565
    %v872 = vpop.f32.mrf.mxu0
    %v873 = vadd.f32 0.0, %v872
    %v874 = vpop.f32.mrf.mxu0
    %875 = vdwg.mxu0
    %v877 = vrot.slane %v873, 6
    %878 = vrot.lane.b32.xlu0 %v877, 96
    %v879 = vpop.permute.xlu0 %878
    %v881 = vadd.f32 %v174, %v879
    %v882 = vxor.u32 %v881, 2147483648
    %v883 = vmul.f32 %v882, 1.442695
    %v884 = vpow.pop %v883
    %v885 = vadd.f32 %v884, 1.0
    %v886 = vrcp.pop %v885
    %v887 = vmul.f32 1.0, %v886
    %v889 = vrot.slane %v555, 6
    %v891 = vmul.f32 %v728, %v889
    %893 = vrot.lane.b32.xlu0 %v805, 64
    %v894 = vpop.permute.xlu0 %893
    %v896 = vmul.f32 %v646, %v894
    %898 = vrot.lane.b32.xlu0 %v896, 32
    %v899 = vpop.permute.xlu0 %898
    %v901 = vadd.f32 %v891, %v899
    %v902 = vtanh.pop %v901
    %904 = vrot.lane.b32.xlu0 %v902, 64
    %v905 = vpop.permute.xlu0 %904
    %v907 = vmul.f32 %v887, %v905
    %v909 = vrot.slane %v907, 2
    %910 = vrot.lane.b32.xlu0 %v909, 32
    %v911 = vpop.permute.xlu0 %910
    %v912 = vsel %vm186, %v911, 0
    %914 = vmatprep.subr.mxu0 0.0
    %915 = vmatpush1.msra.mxu0 0.0
    %916 = vmatprep.subr.mxu0 0.0
    %917 = vmatpush1.msra.mxu0 0.0
    %918 = vmatprep.subr.mxu0 0.0
    %919 = vmatpush1.msra.mxu0 0.0
    %920 = vmatprep.subr.mxu0 0.0
    %921 = vmatpush1.msra.mxu0 0.0
    %922 = vmatprep.subr.mxu0 0.0
    %923 = vmatpush1.msra.mxu0 0.0
    %924 = vmatprep.subr.mxu0 0.0
    %925 = vmatpush1.msra.mxu0 0.0
    %926 = vmatprep.subr.mxu0 0.0
    %927 = vmatpush1.msra.mxu0 0.0
    %928 = vmatprep.subr.mxu0 0.0
    %929 = vmatpush1.msra.mxu0 0.0
    %930 = vmatprep.subr.mxu0 0.0
    %931 = vmatpush1.msra.mxu0 0.0
    %932 = vmatprep.subr.mxu0 0.0
    %933 = vmatpush1.msra.mxu0 0.0
    %934 = vmatprep.subr.mxu0 0.0
    %935 = vmatpush1.msra.mxu0 0.0
    %936 = vmatprep.subr.mxu0 0.0
    %937 = vmatpush1.msra.mxu0 0.0
    %938 = vmatprep.subr.mxu0 0.0
    %939 = vmatpush1.msra.mxu0 %v185
    %940 = vmatprep.subr.mxu0 0.0
    %941 = vmatpush1.msra.mxu0 %v184
    %942 = vmatprep.subr.mxu0 0.0
    %943 = vmatpush1.msra.mxu0 %v183
    %944 = vmatprep.subr.mxu0 0.0
    %945 = vmatpush1.msra.mxu0 %v182
    %946 = vmatprep.subr.mxu0 0.0
    %947 = vmatpush2.msra.mxu0 0.0
    %948 = vmatprep.subr.mxu0 0.0
    %949 = vmatpush2.msra.mxu0 0.0
    %950 = vmatprep.subr.mxu0 0.0
    %951 = vmatpush2.msra.mxu0 0.0
    %952 = vmatprep.subr.mxu0 0.0
    %953 = vmatpush2.msra.mxu0 0.0
    %954 = vmatprep.subr.mxu0 0.0
    %955 = vmatpush2.msra.mxu0 0.0
    %956 = vmatprep.subr.mxu0 0.0
    %957 = vmatpush2.msra.mxu0 0.0
    %958 = vmatprep.subr.mxu0 0.0
    %959 = vmatpush2.msra.mxu0 0.0
    %960 = vmatprep.subr.mxu0 0.0
    %961 = vmatpush2.msra.mxu0 0.0
    %962 = vmatprep.subr.mxu0 0.0
    %963 = vmatpush2.msra.mxu0 0.0
    %964 = vmatprep.subr.mxu0 0.0
    %965 = vmatpush2.msra.mxu0 0.0
    %966 = vmatprep.subr.mxu0 0.0
    %967 = vmatpush2.msra.mxu0 0.0
    %968 = vmatprep.subr.mxu0 0.0
    %969 = vmatpush2.msra.mxu0 0.0
    %970 = vmatprep.subr.mxu0 0.0
    %971 = vmatpush2.msra.mxu0 0.0
    %972 = vmatprep.subr.mxu0 0.0
    %973 = vmatpush2.msra.mxu0 0.0
    %974 = vmatprep.subr.mxu0 0.0
    %975 = vmatpush2.msra.mxu0 0.0
    %976 = vmatprep.subr.mxu0 0.0
    %977 = vmatpush2.msra.mxu0 0.0
    %978 = vmatprep.mubr.f32.mxu0 0.0
    %979 = vmatmul.mubr.f32.gmra.mxu0 %v912
    %v980 = vpop.f32.mrf.mxu0
    %v981 = vadd.f32 0.0, %v980
    %v982 = vpop.f32.mrf.mxu0
    %983 = vdwg.mxu0
    %v985 = vrot.slane %v981, 4
    %v987 = vadd.f32 %v174, %v985
    %v988 = vxor.u32 %v987, 2147483648
    %v989 = vmul.f32 %v988, 1.442695
    %v990 = vpow.pop %v989
    %v991 = vadd.f32 %v990, 1.0
    %v992 = vrcp.pop %v991
    %v993 = vmul.f32 1.0, %v992
    %994 = vmatprep.subr.mxu0 0.0
    %995 = vmatpush1.msra.mxu0 0.0
    %996 = vmatprep.subr.mxu0 0.0
    %997 = vmatpush1.msra.mxu0 0.0
    %998 = vmatprep.subr.mxu0 0.0
    %999 = vmatpush1.msra.mxu0 0.0
    %1000 = vmatprep.subr.mxu0 0.0
    %1001 = vmatpush1.msra.mxu0 0.0
    %1002 = vmatprep.subr.mxu0 0.0
    %1003 = vmatpush1.msra.mxu0 0.0
    %1004 = vmatprep.subr.mxu0 0.0
    %1005 = vmatpush1.msra.mxu0 0.0
    %1006 = vmatprep.subr.mxu0 0.0
    %1007 = vmatpush1.msra.mxu0 0.0
    %1008 = vmatprep.subr.mxu0 0.0
    %1009 = vmatpush1.msra.mxu0 0.0
    %1010 = vmatprep.subr.mxu0 0.0
    %1011 = vmatpush1.msra.mxu0 0.0
    %1012 = vmatprep.subr.mxu0 0.0
    %1013 = vmatpush1.msra.mxu0 0.0
    %1014 = vmatprep.subr.mxu0 0.0
    %1015 = vmatpush1.msra.mxu0 0.0
    %1016 = vmatprep.subr.mxu0 0.0
    %1017 = vmatpush1.msra.mxu0 0.0
    %1018 = vmatprep.subr.mxu0 0.0
    %1019 = vmatpush1.msra.mxu0 %v278
    %1020 = vmatprep.subr.mxu0 0.0
    %1021 = vmatpush1.msra.mxu0 %v276
    %1022 = vmatprep.subr.mxu0 0.0
    %1023 = vmatpush1.msra.mxu0 %v274
    %1024 = vmatprep.subr.mxu0 0.0
    %1025 = vmatpush1.msra.mxu0 %v272
    %1026 = vmatprep.subr.mxu0 0.0
    %1027 = vmatpush2.msra.mxu0 0.0
    %1028 = vmatprep.subr.mxu0 0.0
    %1029 = vmatpush2.msra.mxu0 0.0
    %1030 = vmatprep.subr.mxu0 0.0
    %1031 = vmatpush2.msra.mxu0 0.0
    %1032 = vmatprep.subr.mxu0 0.0
    %1033 = vmatpush2.msra.mxu0 0.0
    %1034 = vmatprep.subr.mxu0 0.0
    %1035 = vmatpush2.msra.mxu0 0.0
    %1036 = vmatprep.subr.mxu0 0.0
    %1037 = vmatpush2.msra.mxu0 0.0
    %1038 = vmatprep.subr.mxu0 0.0
    %1039 = vmatpush2.msra.mxu0 0.0
    %1040 = vmatprep.subr.mxu0 0.0
    %1041 = vmatpush2.msra.mxu0 0.0
    %1042 = vmatprep.subr.mxu0 0.0
    %1043 = vmatpush2.msra.mxu0 0.0
    %1044 = vmatprep.subr.mxu0 0.0
    %1045 = vmatpush2.msra.mxu0 0.0
    %1046 = vmatprep.subr.mxu0 0.0
    %1047 = vmatpush2.msra.mxu0 0.0
    %1048 = vmatprep.subr.mxu0 0.0
    %1049 = vmatpush2.msra.mxu0 0.0
    %1050 = vmatprep.subr.mxu0 0.0
    %1051 = vmatpush2.msra.mxu0 0.0
    %1052 = vmatprep.subr.mxu0 0.0
    %1053 = vmatpush2.msra.mxu0 0.0
    %1054 = vmatprep.subr.mxu0 0.0
    %1055 = vmatpush2.msra.mxu0 0.0
    %1056 = vmatprep.subr.mxu0 0.0
    %1057 = vmatpush2.msra.mxu0 0.0
    %1058 = vmatprep.mubr.f32.mxu0 0.0
    %1059 = vmatmul.mubr.f32.gmra.mxu0 %v912
    %v1060 = vpop.f32.mrf.mxu0
    %v1061 = vadd.f32 0.0, %v1060
    %v1062 = vpop.f32.mrf.mxu0
    %1063 = vdwg.mxu0
    %v1065 = vrot.slane %v1061, 4
    %1066 = vrot.lane.b32.xlu0 %v1065, 32
    %v1067 = vpop.permute.xlu0 %1066
    %v1069 = vadd.f32 %v174, %v1067
    %v1070 = vxor.u32 %v1069, 2147483648
    %v1071 = vmul.f32 %v1070, 1.442695
    %v1072 = vpow.pop %v1071
    %v1073 = vadd.f32 %v1072, 1.0
    %v1074 = vrcp.pop %v1073
    %v1075 = vmul.f32 1.0, %v1074
    %1076 = vmatprep.subr.mxu0 0.0
    %1077 = vmatpush1.msra.mxu0 0.0
    %1078 = vmatprep.subr.mxu0 0.0
    %1079 = vmatpush1.msra.mxu0 0.0
    %1080 = vmatprep.subr.mxu0 0.0
    %1081 = vmatpush1.msra.mxu0 0.0
    %1082 = vmatprep.subr.mxu0 0.0
    %1083 = vmatpush1.msra.mxu0 0.0
    %1084 = vmatprep.subr.mxu0 0.0
    %1085 = vmatpush1.msra.mxu0 0.0
    %1086 = vmatprep.subr.mxu0 0.0
    %1087 = vmatpush1.msra.mxu0 0.0
    %1088 = vmatprep.subr.mxu0 0.0
    %1089 = vmatpush1.msra.mxu0 0.0
    %1090 = vmatprep.subr.mxu0 0.0
    %1091 = vmatpush1.msra.mxu0 0.0
    %1092 = vmatprep.subr.mxu0 0.0
    %1093 = vmatpush1.msra.mxu0 0.0
    %1094 = vmatprep.subr.mxu0 0.0
    %1095 = vmatpush1.msra.mxu0 0.0
    %1096 = vmatprep.subr.mxu0 0.0
    %1097 = vmatpush1.msra.mxu0 0.0
    %1098 = vmatprep.subr.mxu0 0.0
    %1099 = vmatpush1.msra.mxu0 0.0
    %1100 = vmatprep.subr.mxu0 0.0
    %1101 = vmatpush1.msra.mxu0 %v371
    %1102 = vmatprep.subr.mxu0 0.0
    %1103 = vmatpush1.msra.mxu0 %v369
    %1104 = vmatprep.subr.mxu0 0.0
    %1105 = vmatpush1.msra.mxu0 %v367
    %1106 = vmatprep.subr.mxu0 0.0
    %1107 = vmatpush1.msra.mxu0 %v365
    %1108 = vmatprep.subr.mxu0 0.0
    %1109 = vmatpush2.msra.mxu0 0.0
    %1110 = vmatprep.subr.mxu0 0.0
    %1111 = vmatpush2.msra.mxu0 0.0
    %1112 = vmatprep.subr.mxu0 0.0
    %1113 = vmatpush2.msra.mxu0 0.0
    %1114 = vmatprep.subr.mxu0 0.0
    %1115 = vmatpush2.msra.mxu0 0.0
    %1116 = vmatprep.subr.mxu0 0.0
    %1117 = vmatpush2.msra.mxu0 0.0
    %1118 = vmatprep.subr.mxu0 0.0
    %1119 = vmatpush2.msra.mxu0 0.0
    %1120 = vmatprep.subr.mxu0 0.0
    %1121 = vmatpush2.msra.mxu0 0.0
    %1122 = vmatprep.subr.mxu0 0.0
    %1123 = vmatpush2.msra.mxu0 0.0
    %1124 = vmatprep.subr.mxu0 0.0
    %1125 = vmatpush2.msra.mxu0 0.0
    %1126 = vmatprep.subr.mxu0 0.0
    %1127 = vmatpush2.msra.mxu0 0.0
    %1128 = vmatprep.subr.mxu0 0.0
    %1129 = vmatpush2.msra.mxu0 0.0
    %1130 = vmatprep.subr.mxu0 0.0
    %1131 = vmatpush2.msra.mxu0 0.0
    %1132 = vmatprep.subr.mxu0 0.0
    %1133 = vmatpush2.msra.mxu0 0.0
    %1134 = vmatprep.subr.mxu0 0.0
    %1135 = vmatpush2.msra.mxu0 0.0
    %1136 = vmatprep.subr.mxu0 0.0
    %1137 = vmatpush2.msra.mxu0 0.0
    %1138 = vmatprep.subr.mxu0 0.0
    %1139 = vmatpush2.msra.mxu0 0.0
    %1140 = vmatprep.mubr.f32.mxu0 0.0
    %1141 = vmatmul.mubr.f32.gmra.mxu0 %v912
    %v1142 = vpop.f32.mrf.mxu0
    %v1143 = vadd.f32 0.0, %v1142
    %v1144 = vpop.f32.mrf.mxu0
    %1145 = vdwg.mxu0
    %v1147 = vrot.slane %v1143, 4
    %1148 = vrot.lane.b32.xlu0 %v1147, 64
    %v1149 = vpop.permute.xlu0 %1148
    %v1151 = vadd.f32 %v174, %v1149
    %v1152 = vtanh.pop %v1151
    %1153 = vmatprep.subr.mxu0 0.0
    %1154 = vmatpush1.msra.mxu0 0.0
    %1155 = vmatprep.subr.mxu0 0.0
    %1156 = vmatpush1.msra.mxu0 0.0
    %1157 = vmatprep.subr.mxu0 0.0
    %1158 = vmatpush1.msra.mxu0 0.0
    %1159 = vmatprep.subr.mxu0 0.0
    %1160 = vmatpush1.msra.mxu0 0.0
    %1161 = vmatprep.subr.mxu0 0.0
    %1162 = vmatpush1.msra.mxu0 0.0
    %1163 = vmatprep.subr.mxu0 0.0
    %1164 = vmatpush1.msra.mxu0 0.0
    %1165 = vmatprep.subr.mxu0 0.0
    %1166 = vmatpush1.msra.mxu0 0.0
    %1167 = vmatprep.subr.mxu0 0.0
    %1168 = vmatpush1.msra.mxu0 0.0
    %1169 = vmatprep.subr.mxu0 0.0
    %1170 = vmatpush1.msra.mxu0 0.0
    %1171 = vmatprep.subr.mxu0 0.0
    %1172 = vmatpush1.msra.mxu0 0.0
    %1173 = vmatprep.subr.mxu0 0.0
    %1174 = vmatpush1.msra.mxu0 0.0
    %1175 = vmatprep.subr.mxu0 0.0
    %1176 = vmatpush1.msra.mxu0 0.0
    %1177 = vmatprep.subr.mxu0 0.0
    %1178 = vmatpush1.msra.mxu0 %v459
    %1179 = vmatprep.subr.mxu0 0.0
    %1180 = vmatpush1.msra.mxu0 %v457
    %1181 = vmatprep.subr.mxu0 0.0
    %1182 = vmatpush1.msra.mxu0 %v455
    %1183 = vmatprep.subr.mxu0 0.0
    %1184 = vmatpush1.msra.mxu0 %v453
    %1185 = vmatprep.subr.mxu0 0.0
    %1186 = vmatpush2.msra.mxu0 0.0
    %1187 = vmatprep.subr.mxu0 0.0
    %1188 = vmatpush2.msra.mxu0 0.0
    %1189 = vmatprep.subr.mxu0 0.0
    %1190 = vmatpush2.msra.mxu0 0.0
    %1191 = vmatprep.subr.mxu0 0.0
    %1192 = vmatpush2.msra.mxu0 0.0
    %1193 = vmatprep.subr.mxu0 0.0
    %1194 = vmatpush2.msra.mxu0 0.0
    %1195 = vmatprep.subr.mxu0 0.0
    %1196 = vmatpush2.msra.mxu0 0.0
    %1197 = vmatprep.subr.mxu0 0.0
    %1198 = vmatpush2.msra.mxu0 0.0
    %1199 = vmatprep.subr.mxu0 0.0
    %1200 = vmatpush2.msra.mxu0 0.0
    %1201 = vmatprep.subr.mxu0 0.0
    %1202 = vmatpush2.msra.mxu0 0.0
    %1203 = vmatprep.subr.mxu0 0.0
    %1204 = vmatpush2.msra.mxu0 0.0
    %1205 = vmatprep.subr.mxu0 0.0
    %1206 = vmatpush2.msra.mxu0 0.0
    %1207 = vmatprep.subr.mxu0 0.0
    %1208 = vmatpush2.msra.mxu0 0.0
    %1209 = vmatprep.subr.mxu0 0.0
    %1210 = vmatpush2.msra.mxu0 0.0
    %1211 = vmatprep.subr.mxu0 0.0
    %1212 = vmatpush2.msra.mxu0 0.0
    %1213 = vmatprep.subr.mxu0 0.0
    %1214 = vmatpush2.msra.mxu0 0.0
    %1215 = vmatprep.subr.mxu0 0.0
    %1216 = vmatpush2.msra.mxu0 0.0
    %1217 = vmatprep.mubr.f32.mxu0 0.0
    %1218 = vmatmul.mubr.f32.gmra.mxu0 %v912
    %v1219 = vpop.f32.mrf.mxu0
    %v1220 = vadd.f32 0.0, %v1219
    %v1221 = vpop.f32.mrf.mxu0
    %1222 = vdwg.mxu0
    %v1224 = vrot.slane %v1220, 4
    %1225 = vrot.lane.b32.xlu0 %v1224, 96
    %v1226 = vpop.permute.xlu0 %1225
    %v1228 = vadd.f32 %v174, %v1226
    %v1229 = vxor.u32 %v1228, 2147483648
    %v1230 = vmul.f32 %v1229, 1.442695
    %v1231 = vpow.pop %v1230
    %v1232 = vadd.f32 %v1231, 1.0
    %v1233 = vrcp.pop %v1232
    %v1234 = vmul.f32 1.0, %v1233
    %v1236 = vrot.slane %v901, 6
    %v1238 = vmul.f32 %v1075, %v1236
    %1240 = vrot.lane.b32.xlu0 %v1152, 64
    %v1241 = vpop.permute.xlu0 %1240
    %v1243 = vmul.f32 %v993, %v1241
    %1245 = vrot.lane.b32.xlu0 %v1243, 32
    %v1246 = vpop.permute.xlu0 %1245
    %v1248 = vadd.f32 %v1238, %v1246
    %v1249 = vtanh.pop %v1248
    %1251 = vrot.lane.b32.xlu0 %v1249, 64
    %v1252 = vpop.permute.xlu0 %1251
    %v1254 = vmul.f32 %v1234, %v1252
    %v1256 = vrot.slane %v1254, 4
    %1257 = vrot.lane.b32.xlu0 %v1256, 32
    %v1258 = vpop.permute.xlu0 %1257
    %v1259 = vsel %vm186, %v1258, 0
    %1261 = vmatprep.subr.mxu0 0.0
    %1262 = vmatpush1.msra.mxu0 0.0
    %1263 = vmatprep.subr.mxu0 0.0
    %1264 = vmatpush1.msra.mxu0 0.0
    %1265 = vmatprep.subr.mxu0 0.0
    %1266 = vmatpush1.msra.mxu0 0.0
    %1267 = vmatprep.subr.mxu0 0.0
    %1268 = vmatpush1.msra.mxu0 0.0
    %1269 = vmatprep.subr.mxu0 0.0
    %1270 = vmatpush1.msra.mxu0 0.0
    %1271 = vmatprep.subr.mxu0 0.0
    %1272 = vmatpush1.msra.mxu0 0.0
    %1273 = vmatprep.subr.mxu0 0.0
    %1274 = vmatpush1.msra.mxu0 0.0
    %1275 = vmatprep.subr.mxu0 0.0
    %1276 = vmatpush1.msra.mxu0 0.0
    %1277 = vmatprep.subr.mxu0 0.0
    %1278 = vmatpush1.msra.mxu0 0.0
    %1279 = vmatprep.subr.mxu0 0.0
    %1280 = vmatpush1.msra.mxu0 0.0
    %1281 = vmatprep.subr.mxu0 0.0
    %1282 = vmatpush1.msra.mxu0 0.0
    %1283 = vmatprep.subr.mxu0 0.0
    %1284 = vmatpush1.msra.mxu0 0.0
    %1285 = vmatprep.subr.mxu0 0.0
    %1286 = vmatpush1.msra.mxu0 %v185
    %1287 = vmatprep.subr.mxu0 0.0
    %1288 = vmatpush1.msra.mxu0 %v184
    %1289 = vmatprep.subr.mxu0 0.0
    %1290 = vmatpush1.msra.mxu0 %v183
    %1291 = vmatprep.subr.mxu0 0.0
    %1292 = vmatpush1.msra.mxu0 %v182
    %1293 = vmatprep.subr.mxu0 0.0
    %1294 = vmatpush2.msra.mxu0 0.0
    %1295 = vmatprep.subr.mxu0 0.0
    %1296 = vmatpush2.msra.mxu0 0.0
    %1297 = vmatprep.subr.mxu0 0.0
    %1298 = vmatpush2.msra.mxu0 0.0
    %1299 = vmatprep.subr.mxu0 0.0
    %1300 = vmatpush2.msra.mxu0 0.0
    %1301 = vmatprep.subr.mxu0 0.0
    %1302 = vmatpush2.msra.mxu0 0.0
    %1303 = vmatprep.subr.mxu0 0.0
    %1304 = vmatpush2.msra.mxu0 0.0
    %1305 = vmatprep.subr.mxu0 0.0
    %1306 = vmatpush2.msra.mxu0 0.0
    %1307 = vmatprep.subr.mxu0 0.0
    %1308 = vmatpush2.msra.mxu0 0.0
    %1309 = vmatprep.subr.mxu0 0.0
    %1310 = vmatpush2.msra.mxu0 0.0
    %1311 = vmatprep.subr.mxu0 0.0
    %1312 = vmatpush2.msra.mxu0 0.0
    %1313 = vmatprep.subr.mxu0 0.0
    %1314 = vmatpush2.msra.mxu0 0.0
    %1315 = vmatprep.subr.mxu0 0.0
    %1316 = vmatpush2.msra.mxu0 0.0
    %1317 = vmatprep.subr.mxu0 0.0
    %1318 = vmatpush2.msra.mxu0 0.0
    %1319 = vmatprep.subr.mxu0 0.0
    %1320 = vmatpush2.msra.mxu0 0.0
    %1321 = vmatprep.subr.mxu0 0.0
    %1322 = vmatpush2.msra.mxu0 0.0
    %1323 = vmatprep.subr.mxu0 0.0
    %1324 = vmatpush2.msra.mxu0 0.0
    %1325 = vmatprep.mubr.f32.mxu0 0.0
    %1326 = vmatmul.mubr.f32.gmra.mxu0 %v1259
    %v1327 = vpop.f32.mrf.mxu0
    %v1328 = vadd.f32 0.0, %v1327
    %v1329 = vpop.f32.mrf.mxu0
    %1330 = vdwg.mxu0
    %v1332 = vrot.slane %v1328, 2
    %v1334 = vadd.f32 %v174, %v1332
    %v1335 = vxor.u32 %v1334, 2147483648
    %v1336 = vmul.f32 %v1335, 1.442695
    %v1337 = vpow.pop %v1336
    %v1338 = vadd.f32 %v1337, 1.0
    %v1339 = vrcp.pop %v1338
    %v1340 = vmul.f32 1.0, %v1339
    %1341 = vmatprep.subr.mxu0 0.0
    %1342 = vmatpush1.msra.mxu0 0.0
    %1343 = vmatprep.subr.mxu0 0.0
    %1344 = vmatpush1.msra.mxu0 0.0
    %1345 = vmatprep.subr.mxu0 0.0
    %1346 = vmatpush1.msra.mxu0 0.0
    %1347 = vmatprep.subr.mxu0 0.0
    %1348 = vmatpush1.msra.mxu0 0.0
    %1349 = vmatprep.subr.mxu0 0.0
    %1350 = vmatpush1.msra.mxu0 0.0
    %1351 = vmatprep.subr.mxu0 0.0
    %1352 = vmatpush1.msra.mxu0 0.0
    %1353 = vmatprep.subr.mxu0 0.0
    %1354 = vmatpush1.msra.mxu0 0.0
    %1355 = vmatprep.subr.mxu0 0.0
    %1356 = vmatpush1.msra.mxu0 0.0
    %1357 = vmatprep.subr.mxu0 0.0
    %1358 = vmatpush1.msra.mxu0 0.0
    %1359 = vmatprep.subr.mxu0 0.0
    %1360 = vmatpush1.msra.mxu0 0.0
    %1361 = vmatprep.subr.mxu0 0.0
    %1362 = vmatpush1.msra.mxu0 0.0
    %1363 = vmatprep.subr.mxu0 0.0
    %1364 = vmatpush1.msra.mxu0 0.0
    %1365 = vmatprep.subr.mxu0 0.0
    %1366 = vmatpush1.msra.mxu0 %v278
    %1367 = vmatprep.subr.mxu0 0.0
    %1368 = vmatpush1.msra.mxu0 %v276
    %1369 = vmatprep.subr.mxu0 0.0
    %1370 = vmatpush1.msra.mxu0 %v274
    %1371 = vmatprep.subr.mxu0 0.0
    %1372 = vmatpush1.msra.mxu0 %v272
    %1373 = vmatprep.subr.mxu0 0.0
    %1374 = vmatpush2.msra.mxu0 0.0
    %1375 = vmatprep.subr.mxu0 0.0
    %1376 = vmatpush2.msra.mxu0 0.0
    %1377 = vmatprep.subr.mxu0 0.0
    %1378 = vmatpush2.msra.mxu0 0.0
    %1379 = vmatprep.subr.mxu0 0.0
    %1380 = vmatpush2.msra.mxu0 0.0
    %1381 = vmatprep.subr.mxu0 0.0
    %1382 = vmatpush2.msra.mxu0 0.0
    %1383 = vmatprep.subr.mxu0 0.0
    %1384 = vmatpush2.msra.mxu0 0.0
    %1385 = vmatprep.subr.mxu0 0.0
    %1386 = vmatpush2.msra.mxu0 0.0
    %1387 = vmatprep.subr.mxu0 0.0
    %1388 = vmatpush2.msra.mxu0 0.0
    %1389 = vmatprep.subr.mxu0 0.0
    %1390 = vmatpush2.msra.mxu0 0.0
    %1391 = vmatprep.subr.mxu0 0.0
    %1392 = vmatpush2.msra.mxu0 0.0
    %1393 = vmatprep.subr.mxu0 0.0
    %1394 = vmatpush2.msra.mxu0 0.0
    %1395 = vmatprep.subr.mxu0 0.0
    %1396 = vmatpush2.msra.mxu0 0.0
    %1397 = vmatprep.subr.mxu0 0.0
    %1398 = vmatpush2.msra.mxu0 0.0
    %1399 = vmatprep.subr.mxu0 0.0
    %1400 = vmatpush2.msra.mxu0 0.0
    %1401 = vmatprep.subr.mxu0 0.0
    %1402 = vmatpush2.msra.mxu0 0.0
    %1403 = vmatprep.subr.mxu0 0.0
    %1404 = vmatpush2.msra.mxu0 0.0
    %1405 = vmatprep.mubr.f32.mxu0 0.0
    %1406 = vmatmul.mubr.f32.gmra.mxu0 %v1259
    %v1407 = vpop.f32.mrf.mxu0
    %v1408 = vadd.f32 0.0, %v1407
    %v1409 = vpop.f32.mrf.mxu0
    %1410 = vdwg.mxu0
    %v1412 = vrot.slane %v1408, 2
    %1413 = vrot.lane.b32.xlu0 %v1412, 32
    %v1414 = vpop.permute.xlu0 %1413
    %v1416 = vadd.f32 %v174, %v1414
    %v1417 = vxor.u32 %v1416, 2147483648
    %v1418 = vmul.f32 %v1417, 1.442695
    %v1419 = vpow.pop %v1418
    %v1420 = vadd.f32 %v1419, 1.0
    %v1421 = vrcp.pop %v1420
    %v1422 = vmul.f32 1.0, %v1421
    %1423 = vmatprep.subr.mxu0 0.0
    %1424 = vmatpush1.msra.mxu0 0.0
    %1425 = vmatprep.subr.mxu0 0.0
    %1426 = vmatpush1.msra.mxu0 0.0
    %1427 = vmatprep.subr.mxu0 0.0
    %1428 = vmatpush1.msra.mxu0 0.0
    %1429 = vmatprep.subr.mxu0 0.0
    %1430 = vmatpush1.msra.mxu0 0.0
    %1431 = vmatprep.subr.mxu0 0.0
    %1432 = vmatpush1.msra.mxu0 0.0
    %1433 = vmatprep.subr.mxu0 0.0
    %1434 = vmatpush1.msra.mxu0 0.0
    %1435 = vmatprep.subr.mxu0 0.0
    %1436 = vmatpush1.msra.mxu0 0.0
    %1437 = vmatprep.subr.mxu0 0.0
    %1438 = vmatpush1.msra.mxu0 0.0
    %1439 = vmatprep.subr.mxu0 0.0
    %1440 = vmatpush1.msra.mxu0 0.0
    %1441 = vmatprep.subr.mxu0 0.0
    %1442 = vmatpush1.msra.mxu0 0.0
    %1443 = vmatprep.subr.mxu0 0.0
    %1444 = vmatpush1.msra.mxu0 0.0
    %1445 = vmatprep.subr.mxu0 0.0
    %1446 = vmatpush1.msra.mxu0 0.0
    %1447 = vmatprep.subr.mxu0 0.0
    %1448 = vmatpush1.msra.mxu0 %v371
    %1449 = vmatprep.subr.mxu0 0.0
    %1450 = vmatpush1.msra.mxu0 %v369
    %1451 = vmatprep.subr.mxu0 0.0
    %1452 = vmatpush1.msra.mxu0 %v367
    %1453 = vmatprep.subr.mxu0 0.0
    %1454 = vmatpush1.msra.mxu0 %v365
    %1455 = vmatprep.subr.mxu0 0.0
    %1456 = vmatpush2.msra.mxu0 0.0
    %1457 = vmatprep.subr.mxu0 0.0
    %1458 = vmatpush2.msra.mxu0 0.0
    %1459 = vmatprep.subr.mxu0 0.0
    %1460 = vmatpush2.msra.mxu0 0.0
    %1461 = vmatprep.subr.mxu0 0.0
    %1462 = vmatpush2.msra.mxu0 0.0
    %1463 = vmatprep.subr.mxu0 0.0
    %1464 = vmatpush2.msra.mxu0 0.0
    %1465 = vmatprep.subr.mxu0 0.0
    %1466 = vmatpush2.msra.mxu0 0.0
    %1467 = vmatprep.subr.mxu0 0.0
    %1468 = vmatpush2.msra.mxu0 0.0
    %1469 = vmatprep.subr.mxu0 0.0
    %1470 = vmatpush2.msra.mxu0 0.0
    %1471 = vmatprep.subr.mxu0 0.0
    %1472 = vmatpush2.msra.mxu0 0.0
    %1473 = vmatprep.subr.mxu0 0.0
    %1474 = vmatpush2.msra.mxu0 0.0
    %1475 = vmatprep.subr.mxu0 0.0
    %1476 = vmatpush2.msra.mxu0 0.0
    %1477 = vmatprep.subr.mxu0 0.0
    %1478 = vmatpush2.msra.mxu0 0.0
    %1479 = vmatprep.subr.mxu0 0.0
    %1480 = vmatpush2.msra.mxu0 0.0
    %1481 = vmatprep.subr.mxu0 0.0
    %1482 = vmatpush2.msra.mxu0 0.0
    %1483 = vmatprep.subr.mxu0 0.0
    %1484 = vmatpush2.msra.mxu0 0.0
    %1485 = vmatprep.subr.mxu0 0.0
    %1486 = vmatpush2.msra.mxu0 0.0
    %1487 = vmatprep.mubr.f32.mxu0 0.0
    %1488 = vmatmul.mubr.f32.gmra.mxu0 %v1259
    %v1489 = vpop.f32.mrf.mxu0
    %v1490 = vadd.f32 0.0, %v1489
    %v1491 = vpop.f32.mrf.mxu0
    %1492 = vdwg.mxu0
    %v1494 = vrot.slane %v1490, 2
    %1495 = vrot.lane.b32.xlu0 %v1494, 64
    %v1496 = vpop.permute.xlu0 %1495
    %v1498 = vadd.f32 %v174, %v1496
    %v1499 = vtanh.pop %v1498
    %1500 = vmatprep.subr.mxu0 0.0
    %1501 = vmatpush1.msra.mxu0 0.0
    %1502 = vmatprep.subr.mxu0 0.0
    %1503 = vmatpush1.msra.mxu0 0.0
    %1504 = vmatprep.subr.mxu0 0.0
    %1505 = vmatpush1.msra.mxu0 0.0
    %1506 = vmatprep.subr.mxu0 0.0
    %1507 = vmatpush1.msra.mxu0 0.0
    %1508 = vmatprep.subr.mxu0 0.0
    %1509 = vmatpush1.msra.mxu0 0.0
    %1510 = vmatprep.subr.mxu0 0.0
    %1511 = vmatpush1.msra.mxu0 0.0
    %1512 = vmatprep.subr.mxu0 0.0
    %1513 = vmatpush1.msra.mxu0 0.0
    %1514 = vmatprep.subr.mxu0 0.0
    %1515 = vmatpush1.msra.mxu0 0.0
    %1516 = vmatprep.subr.mxu0 0.0
    %1517 = vmatpush1.msra.mxu0 0.0
    %1518 = vmatprep.subr.mxu0 0.0
    %1519 = vmatpush1.msra.mxu0 0.0
    %1520 = vmatprep.subr.mxu0 0.0
    %1521 = vmatpush1.msra.mxu0 0.0
    %1522 = vmatprep.subr.mxu0 0.0
    %1523 = vmatpush1.msra.mxu0 0.0
    %1524 = vmatprep.subr.mxu0 0.0
    %1525 = vmatpush1.msra.mxu0 %v459
    %1526 = vmatprep.subr.mxu0 0.0
    %1527 = vmatpush1.msra.mxu0 %v457
    %1528 = vmatprep.subr.mxu0 0.0
    %1529 = vmatpush1.msra.mxu0 %v455
    %1530 = vmatprep.subr.mxu0 0.0
    %1531 = vmatpush1.msra.mxu0 %v453
    %1532 = vmatprep.subr.mxu0 0.0
    %1533 = vmatpush2.msra.mxu0 0.0
    %1534 = vmatprep.subr.mxu0 0.0
    %1535 = vmatpush2.msra.mxu0 0.0
    %1536 = vmatprep.subr.mxu0 0.0
    %1537 = vmatpush2.msra.mxu0 0.0
    %1538 = vmatprep.subr.mxu0 0.0
    %1539 = vmatpush2.msra.mxu0 0.0
    %1540 = vmatprep.subr.mxu0 0.0
    %1541 = vmatpush2.msra.mxu0 0.0
    %1542 = vmatprep.subr.mxu0 0.0
    %1543 = vmatpush2.msra.mxu0 0.0
    %1544 = vmatprep.subr.mxu0 0.0
    %1545 = vmatpush2.msra.mxu0 0.0
    %1546 = vmatprep.subr.mxu0 0.0
    %1547 = vmatpush2.msra.mxu0 0.0
    %1548 = vmatprep.subr.mxu0 0.0
    %1549 = vmatpush2.msra.mxu0 0.0
    %1550 = vmatprep.subr.mxu0 0.0
    %1551 = vmatpush2.msra.mxu0 0.0
    %1552 = vmatprep.subr.mxu0 0.0
    %1553 = vmatpush2.msra.mxu0 0.0
    %1554 = vmatprep.subr.mxu0 0.0
    %1555 = vmatpush2.msra.mxu0 0.0
    %1556 = vmatprep.subr.mxu0 0.0
    %1557 = vmatpush2.msra.mxu0 0.0
    %1558 = vmatprep.subr.mxu0 0.0
    %1559 = vmatpush2.msra.mxu0 0.0
    %1560 = vmatprep.subr.mxu0 0.0
    %1561 = vmatpush2.msra.mxu0 0.0
    %1562 = vmatprep.subr.mxu0 0.0
    %1563 = vmatpush2.msra.mxu0 0.0
    %1564 = vmatprep.mubr.f32.mxu0 0.0
    %1565 = vmatmul.mubr.f32.gmra.mxu0 %v1259
    %v1566 = vpop.f32.mrf.mxu0
    %v1567 = vadd.f32 0.0, %v1566
    %v1568 = vpop.f32.mrf.mxu0
    %1569 = vdwg.mxu0
    %v1571 = vrot.slane %v1567, 2
    %1572 = vrot.lane.b32.xlu0 %v1571, 96
    %v1573 = vpop.permute.xlu0 %1572
    %v1575 = vadd.f32 %v174, %v1573
    %v1576 = vxor.u32 %v1575, 2147483648
    %v1577 = vmul.f32 %v1576, 1.442695
    %v1578 = vpow.pop %v1577
    %v1579 = vadd.f32 %v1578, 1.0
    %v1580 = vrcp.pop %v1579
    %v1581 = vmul.f32 1.0, %v1580
    %v1583 = vrot.slane %v1248, 6
    %v1585 = vmul.f32 %v1422, %v1583
    %1587 = vrot.lane.b32.xlu0 %v1499, 64
    %v1588 = vpop.permute.xlu0 %1587
    %v1590 = vmul.f32 %v1340, %v1588
    %1592 = vrot.lane.b32.xlu0 %v1590, 32
    %v1593 = vpop.permute.xlu0 %1592
    %v1595 = vadd.f32 %v1585, %v1593
    %v1596 = vtanh.pop %v1595
    %1598 = vrot.lane.b32.xlu0 %v1596, 64
    %v1599 = vpop.permute.xlu0 %1598
    %v1601 = vmul.f32 %v1581, %v1599
    %v1603 = vrot.slane %v1601, 6
    %1604 = vrot.lane.b32.xlu0 %v1603, 32
    %v1605 = vpop.permute.xlu0 %1604
    %v1606 = vsel %vm186, %v1605, 0
    %1608 = vmatprep.subr.mxu0 0.0
    %1609 = vmatpush1.msra.mxu0 0.0
    %1610 = vmatprep.subr.mxu0 0.0
    %1611 = vmatpush1.msra.mxu0 0.0
    %1612 = vmatprep.subr.mxu0 0.0
    %1613 = vmatpush1.msra.mxu0 0.0
    %1614 = vmatprep.subr.mxu0 0.0
    %1615 = vmatpush1.msra.mxu0 0.0
    %1616 = vmatprep.subr.mxu0 0.0
    %1617 = vmatpush1.msra.mxu0 0.0
    %1618 = vmatprep.subr.mxu0 0.0
    %1619 = vmatpush1.msra.mxu0 0.0
    %1620 = vmatprep.subr.mxu0 0.0
    %1621 = vmatpush1.msra.mxu0 0.0
    %1622 = vmatprep.subr.mxu0 0.0
    %1623 = vmatpush1.msra.mxu0 0.0
    %1624 = vmatprep.subr.mxu0 0.0
    %1625 = vmatpush1.msra.mxu0 0.0
    %1626 = vmatprep.subr.mxu0 0.0
    %1627 = vmatpush1.msra.mxu0 0.0
    %1628 = vmatprep.subr.mxu0 0.0
    %1629 = vmatpush1.msra.mxu0 0.0
    %1630 = vmatprep.subr.mxu0 0.0
    %1631 = vmatpush1.msra.mxu0 0.0
    %1632 = vmatprep.subr.mxu0 0.0
    %1633 = vmatpush1.msra.mxu0 %v185
    %1634 = vmatprep.subr.mxu0 0.0
    %1635 = vmatpush1.msra.mxu0 %v184
    %1636 = vmatprep.subr.mxu0 0.0
    %1637 = vmatpush1.msra.mxu0 %v183
    %1638 = vmatprep.subr.mxu0 0.0
    %1639 = vmatpush1.msra.mxu0 %v182
    %1640 = vmatprep.subr.mxu0 0.0
    %1641 = vmatpush2.msra.mxu0 0.0
    %1642 = vmatprep.subr.mxu0 0.0
    %1643 = vmatpush2.msra.mxu0 0.0
    %1644 = vmatprep.subr.mxu0 0.0
    %1645 = vmatpush2.msra.mxu0 0.0
    %1646 = vmatprep.subr.mxu0 0.0
    %1647 = vmatpush2.msra.mxu0 0.0
    %1648 = vmatprep.subr.mxu0 0.0
    %1649 = vmatpush2.msra.mxu0 0.0
    %1650 = vmatprep.subr.mxu0 0.0
    %1651 = vmatpush2.msra.mxu0 0.0
    %1652 = vmatprep.subr.mxu0 0.0
    %1653 = vmatpush2.msra.mxu0 0.0
    %1654 = vmatprep.subr.mxu0 0.0
    %1655 = vmatpush2.msra.mxu0 0.0
    %1656 = vmatprep.subr.mxu0 0.0
    %1657 = vmatpush2.msra.mxu0 0.0
    %1658 = vmatprep.subr.mxu0 0.0
    %1659 = vmatpush2.msra.mxu0 0.0
    %1660 = vmatprep.subr.mxu0 0.0
    %1661 = vmatpush2.msra.mxu0 0.0
    %1662 = vmatprep.subr.mxu0 0.0
    %1663 = vmatpush2.msra.mxu0 0.0
    %1664 = vmatprep.subr.mxu0 0.0
    %1665 = vmatpush2.msra.mxu0 0.0
    %1666 = vmatprep.subr.mxu0 0.0
    %1667 = vmatpush2.msra.mxu0 0.0
    %1668 = vmatprep.subr.mxu0 0.0
    %1669 = vmatpush2.msra.mxu0 0.0
    %1670 = vmatprep.subr.mxu0 0.0
    %1671 = vmatpush2.msra.mxu0 0.0
    %1672 = vmatprep.mubr.f32.mxu0 0.0
    %1673 = vmatmul.mubr.f32.gmra.mxu0 %v1606
    %v1674 = vpop.f32.mrf.mxu0
    %v1675 = vadd.f32 0.0, %v1674
    %v1676 = vpop.f32.mrf.mxu0
    %1677 = vdwg.mxu0
    %v1678 = vadd.f32 %v179, %v1675
    %v1679 = vxor.u32 %v1678, 2147483648
    %v1680 = vmul.f32 %v1679, 1.442695
    %v1681 = vpow.pop %v1680
    %v1682 = vadd.f32 %v1681, 1.0
    %v1683 = vrcp.pop %v1682
    %v1684 = vmul.f32 1.0, %v1683
    %1685 = vmatprep.subr.mxu0 0.0
    %1686 = vmatpush1.msra.mxu0 0.0
    %1687 = vmatprep.subr.mxu0 0.0
    %1688 = vmatpush1.msra.mxu0 0.0
    %1689 = vmatprep.subr.mxu0 0.0
    %1690 = vmatpush1.msra.mxu0 0.0
    %1691 = vmatprep.subr.mxu0 0.0
    %1692 = vmatpush1.msra.mxu0 0.0
    %1693 = vmatprep.subr.mxu0 0.0
    %1694 = vmatpush1.msra.mxu0 0.0
    %1695 = vmatprep.subr.mxu0 0.0
    %1696 = vmatpush1.msra.mxu0 0.0
    %1697 = vmatprep.subr.mxu0 0.0
    %1698 = vmatpush1.msra.mxu0 0.0
    %1699 = vmatprep.subr.mxu0 0.0
    %1700 = vmatpush1.msra.mxu0 0.0
    %1701 = vmatprep.subr.mxu0 0.0
    %1702 = vmatpush1.msra.mxu0 0.0
    %1703 = vmatprep.subr.mxu0 0.0
    %1704 = vmatpush1.msra.mxu0 0.0
    %1705 = vmatprep.subr.mxu0 0.0
    %1706 = vmatpush1.msra.mxu0 0.0
    %1707 = vmatprep.subr.mxu0 0.0
    %1708 = vmatpush1.msra.mxu0 0.0
    %1709 = vmatprep.subr.mxu0 0.0
    %1710 = vmatpush1.msra.mxu0 %v278
    %1711 = vmatprep.subr.mxu0 0.0
    %1712 = vmatpush1.msra.mxu0 %v276
    %1713 = vmatprep.subr.mxu0 0.0
    %1714 = vmatpush1.msra.mxu0 %v274
    %1715 = vmatprep.subr.mxu0 0.0
    %1716 = vmatpush1.msra.mxu0 %v272
    %1717 = vmatprep.subr.mxu0 0.0
    %1718 = vmatpush2.msra.mxu0 0.0
    %1719 = vmatprep.subr.mxu0 0.0
    %1720 = vmatpush2.msra.mxu0 0.0
    %1721 = vmatprep.subr.mxu0 0.0
    %1722 = vmatpush2.msra.mxu0 0.0
    %1723 = vmatprep.subr.mxu0 0.0
    %1724 = vmatpush2.msra.mxu0 0.0
    %1725 = vmatprep.subr.mxu0 0.0
    %1726 = vmatpush2.msra.mxu0 0.0
    %1727 = vmatprep.subr.mxu0 0.0
    %1728 = vmatpush2.msra.mxu0 0.0
    %1729 = vmatprep.subr.mxu0 0.0
    %1730 = vmatpush2.msra.mxu0 0.0
    %1731 = vmatprep.subr.mxu0 0.0
    %1732 = vmatpush2.msra.mxu0 0.0
    %1733 = vmatprep.subr.mxu0 0.0
    %1734 = vmatpush2.msra.mxu0 0.0
    %1735 = vmatprep.subr.mxu0 0.0
    %1736 = vmatpush2.msra.mxu0 0.0
    %1737 = vmatprep.subr.mxu0 0.0
    %1738 = vmatpush2.msra.mxu0 0.0
    %1739 = vmatprep.subr.mxu0 0.0
    %1740 = vmatpush2.msra.mxu0 0.0
    %1741 = vmatprep.subr.mxu0 0.0
    %1742 = vmatpush2.msra.mxu0 0.0
    %1743 = vmatprep.subr.mxu0 0.0
    %1744 = vmatpush2.msra.mxu0 0.0
    %1745 = vmatprep.subr.mxu0 0.0
    %1746 = vmatpush2.msra.mxu0 0.0
    %1747 = vmatprep.subr.mxu0 0.0
    %1748 = vmatpush2.msra.mxu0 0.0
    %1749 = vmatprep.mubr.f32.mxu0 0.0
    %1750 = vmatmul.mubr.f32.gmra.mxu0 %v1606
    %v1751 = vpop.f32.mrf.mxu0
    %v1752 = vadd.f32 0.0, %v1751
    %v1753 = vpop.f32.mrf.mxu0
    %1754 = vdwg.mxu0
    %1756 = vrot.lane.b32.xlu0 %v1752, 32
    %v1757 = vpop.permute.xlu0 %1756
    %v1759 = vadd.f32 %v179, %v1757
    %v1760 = vxor.u32 %v1759, 2147483648
    %v1761 = vmul.f32 %v1760, 1.442695
    %v1762 = vpow.pop %v1761
    %v1763 = vadd.f32 %v1762, 1.0
    %v1764 = vrcp.pop %v1763
    %v1765 = vmul.f32 1.0, %v1764
    %1766 = vmatprep.subr.mxu0 0.0
    %1767 = vmatpush1.msra.mxu0 0.0
    %1768 = vmatprep.subr.mxu0 0.0
    %1769 = vmatpush1.msra.mxu0 0.0
    %1770 = vmatprep.subr.mxu0 0.0
    %1771 = vmatpush1.msra.mxu0 0.0
    %1772 = vmatprep.subr.mxu0 0.0
    %1773 = vmatpush1.msra.mxu0 0.0
    %1774 = vmatprep.subr.mxu0 0.0
    %1775 = vmatpush1.msra.mxu0 0.0
    %1776 = vmatprep.subr.mxu0 0.0
    %1777 = vmatpush1.msra.mxu0 0.0
    %1778 = vmatprep.subr.mxu0 0.0
    %1779 = vmatpush1.msra.mxu0 0.0
    %1780 = vmatprep.subr.mxu0 0.0
    %1781 = vmatpush1.msra.mxu0 0.0
    %1782 = vmatprep.subr.mxu0 0.0
    %1783 = vmatpush1.msra.mxu0 0.0
    %1784 = vmatprep.subr.mxu0 0.0
    %1785 = vmatpush1.msra.mxu0 0.0
    %1786 = vmatprep.subr.mxu0 0.0
    %1787 = vmatpush1.msra.mxu0 0.0
    %1788 = vmatprep.subr.mxu0 0.0
    %1789 = vmatpush1.msra.mxu0 0.0
    %1790 = vmatprep.subr.mxu0 0.0
    %1791 = vmatpush1.msra.mxu0 %v371
    %1792 = vmatprep.subr.mxu0 0.0
    %1793 = vmatpush1.msra.mxu0 %v369
    %1794 = vmatprep.subr.mxu0 0.0
    %1795 = vmatpush1.msra.mxu0 %v367
    %1796 = vmatprep.subr.mxu0 0.0
    %1797 = vmatpush1.msra.mxu0 %v365
    %1798 = vmatprep.subr.mxu0 0.0
    %1799 = vmatpush2.msra.mxu0 0.0
    %1800 = vmatprep.subr.mxu0 0.0
    %1801 = vmatpush2.msra.mxu0 0.0
    %1802 = vmatprep.subr.mxu0 0.0
    %1803 = vmatpush2.msra.mxu0 0.0
    %1804 = vmatprep.subr.mxu0 0.0
    %1805 = vmatpush2.msra.mxu0 0.0
    %1806 = vmatprep.subr.mxu0 0.0
    %1807 = vmatpush2.msra.mxu0 0.0
    %1808 = vmatprep.subr.mxu0 0.0
    %1809 = vmatpush2.msra.mxu0 0.0
    %1810 = vmatprep.subr.mxu0 0.0
    %1811 = vmatpush2.msra.mxu0 0.0
    %1812 = vmatprep.subr.mxu0 0.0
    %1813 = vmatpush2.msra.mxu0 0.0
    %1814 = vmatprep.subr.mxu0 0.0
    %1815 = vmatpush2.msra.mxu0 0.0
    %1816 = vmatprep.subr.mxu0 0.0
    %1817 = vmatpush2.msra.mxu0 0.0
    %1818 = vmatprep.subr.mxu0 0.0
    %1819 = vmatpush2.msra.mxu0 0.0
    %1820 = vmatprep.subr.mxu0 0.0
    %1821 = vmatpush2.msra.mxu0 0.0
    %1822 = vmatprep.subr.mxu0 0.0
    %1823 = vmatpush2.msra.mxu0 0.0
    %1824 = vmatprep.subr.mxu0 0.0
    %1825 = vmatpush2.msra.mxu0 0.0
    %1826 = vmatprep.subr.mxu0 0.0
    %1827 = vmatpush2.msra.mxu0 0.0
    %1828 = vmatprep.subr.mxu0 0.0
    %1829 = vmatpush2.msra.mxu0 0.0
    %1830 = vmatprep.mubr.f32.mxu0 0.0
    %1831 = vmatmul.mubr.f32.gmra.mxu0 %v1606
    %v1832 = vpop.f32.mrf.mxu0
    %v1833 = vadd.f32 0.0, %v1832
    %v1834 = vpop.f32.mrf.mxu0
    %1835 = vdwg.mxu0
    %1837 = vrot.lane.b32.xlu0 %v1833, 64
    %v1838 = vpop.permute.xlu0 %1837
    %v1840 = vadd.f32 %v179, %v1838
    %v1841 = vtanh.pop %v1840
    %1842 = vmatprep.subr.mxu0 0.0
    %1843 = vmatpush1.msra.mxu0 0.0
    %1844 = vmatprep.subr.mxu0 0.0
    %1845 = vmatpush1.msra.mxu0 0.0
    %1846 = vmatprep.subr.mxu0 0.0
    %1847 = vmatpush1.msra.mxu0 0.0
    %1848 = vmatprep.subr.mxu0 0.0
    %1849 = vmatpush1.msra.mxu0 0.0
    %1850 = vmatprep.subr.mxu0 0.0
    %1851 = vmatpush1.msra.mxu0 0.0
    %1852 = vmatprep.subr.mxu0 0.0
    %1853 = vmatpush1.msra.mxu0 0.0
    %1854 = vmatprep.subr.mxu0 0.0
    %1855 = vmatpush1.msra.mxu0 0.0
    %1856 = vmatprep.subr.mxu0 0.0
    %1857 = vmatpush1.msra.mxu0 0.0
    %1858 = vmatprep.subr.mxu0 0.0
    %1859 = vmatpush1.msra.mxu0 0.0
    %1860 = vmatprep.subr.mxu0 0.0
    %1861 = vmatpush1.msra.mxu0 0.0
    %1862 = vmatprep.subr.mxu0 0.0
    %1863 = vmatpush1.msra.mxu0 0.0
    %1864 = vmatprep.subr.mxu0 0.0
    %1865 = vmatpush1.msra.mxu0 0.0
    %1866 = vmatprep.subr.mxu0 0.0
    %1867 = vmatpush1.msra.mxu0 %v459
    %1868 = vmatprep.subr.mxu0 0.0
    %1869 = vmatpush1.msra.mxu0 %v457
    %1870 = vmatprep.subr.mxu0 0.0
    %1871 = vmatpush1.msra.mxu0 %v455
    %1872 = vmatprep.subr.mxu0 0.0
    %1873 = vmatpush1.msra.mxu0 %v453
    %1874 = vmatprep.subr.mxu0 0.0
    %1875 = vmatpush2.msra.mxu0 0.0
    %1876 = vmatprep.subr.mxu0 0.0
    %1877 = vmatpush2.msra.mxu0 0.0
    %1878 = vmatprep.subr.mxu0 0.0
    %1879 = vmatpush2.msra.mxu0 0.0
    %1880 = vmatprep.subr.mxu0 0.0
    %1881 = vmatpush2.msra.mxu0 0.0
    %1882 = vmatprep.subr.mxu0 0.0
    %1883 = vmatpush2.msra.mxu0 0.0
    %1884 = vmatprep.subr.mxu0 0.0
    %1885 = vmatpush2.msra.mxu0 0.0
    %1886 = vmatprep.subr.mxu0 0.0
    %1887 = vmatpush2.msra.mxu0 0.0
    %1888 = vmatprep.subr.mxu0 0.0
    %1889 = vmatpush2.msra.mxu0 0.0
    %1890 = vmatprep.subr.mxu0 0.0
    %1891 = vmatpush2.msra.mxu0 0.0
    %1892 = vmatprep.subr.mxu0 0.0
    %1893 = vmatpush2.msra.mxu0 0.0
    %1894 = vmatprep.subr.mxu0 0.0
    %1895 = vmatpush2.msra.mxu0 0.0
    %1896 = vmatprep.subr.mxu0 0.0
    %1897 = vmatpush2.msra.mxu0 0.0
    %1898 = vmatprep.subr.mxu0 0.0
    %1899 = vmatpush2.msra.mxu0 0.0
    %1900 = vmatprep.subr.mxu0 0.0
    %1901 = vmatpush2.msra.mxu0 0.0
    %1902 = vmatprep.subr.mxu0 0.0
    %1903 = vmatpush2.msra.mxu0 0.0
    %1904 = vmatprep.subr.mxu0 0.0
    %1905 = vmatpush2.msra.mxu0 0.0
    %1906 = vmatprep.mubr.f32.mxu0 0.0
    %1907 = vmatmul.mubr.f32.gmra.mxu0 %v1606
    %v1908 = vpop.f32.mrf.mxu0
    %v1909 = vadd.f32 0.0, %v1908
    %v1910 = vpop.f32.mrf.mxu0
    %1911 = vdwg.mxu0
    %1913 = vrot.lane.b32.xlu0 %v1909, 96
    %v1914 = vpop.permute.xlu0 %1913
    %v1916 = vadd.f32 %v179, %v1914
    %v1917 = vxor.u32 %v1916, 2147483648
    %v1918 = vmul.f32 %v1917, 1.442695
    %v1919 = vpow.pop %v1918
    %v1920 = vadd.f32 %v1919, 1.0
    %v1921 = vrcp.pop %v1920
    %v1922 = vmul.f32 1.0, %v1921
    %v1924 = vrot.slane %v1595, 6
    %v1926 = vmul.f32 %v1765, %v1924
    %1928 = vrot.lane.b32.xlu0 %v1841, 64
    %v1929 = vpop.permute.xlu0 %1928
    %v1931 = vmul.f32 %v1684, %v1929
    %1933 = vrot.lane.b32.xlu0 %v1931, 32
    %v1934 = vpop.permute.xlu0 %1933
    %v1936 = vadd.f32 %v1926, %v1934
    %v1937 = vtanh.pop %v1936
    %1939 = vrot.lane.b32.xlu0 %v1937, 64
    %v1940 = vpop.permute.xlu0 %1939
    %v1942 = vmul.f32 %v1922, %v1940
    %1944 = vrot.lane.b32.xlu0 %v1942, 32
    %v1945 = vpop.permute.xlu0 %1944
    %v1946 = vsel %vm186, %v1945, 0
    %1948 = vmatprep.subr.mxu0 0.0
    %1949 = vmatpush1.msra.mxu0 0.0
    %1950 = vmatprep.subr.mxu0 0.0
    %1951 = vmatpush1.msra.mxu0 0.0
    %1952 = vmatprep.subr.mxu0 0.0
    %1953 = vmatpush1.msra.mxu0 0.0
    %1954 = vmatprep.subr.mxu0 0.0
    %1955 = vmatpush1.msra.mxu0 0.0
    %1956 = vmatprep.subr.mxu0 0.0
    %1957 = vmatpush1.msra.mxu0 0.0
    %1958 = vmatprep.subr.mxu0 0.0
    %1959 = vmatpush1.msra.mxu0 0.0
    %1960 = vmatprep.subr.mxu0 0.0
    %1961 = vmatpush1.msra.mxu0 0.0
    %1962 = vmatprep.subr.mxu0 0.0
    %1963 = vmatpush1.msra.mxu0 0.0
    %1964 = vmatprep.subr.mxu0 0.0
    %1965 = vmatpush1.msra.mxu0 0.0
    %1966 = vmatprep.subr.mxu0 0.0
    %1967 = vmatpush1.msra.mxu0 0.0
    %1968 = vmatprep.subr.mxu0 0.0
    %1969 = vmatpush1.msra.mxu0 0.0
    %1970 = vmatprep.subr.mxu0 0.0
    %1971 = vmatpush1.msra.mxu0 0.0
    %1972 = vmatprep.subr.mxu0 0.0
    %1973 = vmatpush1.msra.mxu0 %v185
    %1974 = vmatprep.subr.mxu0 0.0
    %1975 = vmatpush1.msra.mxu0 %v184
    %1976 = vmatprep.subr.mxu0 0.0
    %1977 = vmatpush1.msra.mxu0 %v183
    %1978 = vmatprep.subr.mxu0 0.0
    %1979 = vmatpush1.msra.mxu0 %v182
    %1980 = vmatprep.subr.mxu0 0.0
    %1981 = vmatpush2.msra.mxu0 0.0
    %1982 = vmatprep.subr.mxu0 0.0
    %1983 = vmatpush2.msra.mxu0 0.0
    %1984 = vmatprep.subr.mxu0 0.0
    %1985 = vmatpush2.msra.mxu0 0.0
    %1986 = vmatprep.subr.mxu0 0.0
    %1987 = vmatpush2.msra.mxu0 0.0
    %1988 = vmatprep.subr.mxu0 0.0
    %1989 = vmatpush2.msra.mxu0 0.0
    %1990 = vmatprep.subr.mxu0 0.0
    %1991 = vmatpush2.msra.mxu0 0.0
    %1992 = vmatprep.subr.mxu0 0.0
    %1993 = vmatpush2.msra.mxu0 0.0
    %1994 = vmatprep.subr.mxu0 0.0
    %1995 = vmatpush2.msra.mxu0 0.0
    %1996 = vmatprep.subr.mxu0 0.0
    %1997 = vmatpush2.msra.mxu0 0.0
    %1998 = vmatprep.subr.mxu0 0.0
    %1999 = vmatpush2.msra.mxu0 0.0
    %2000 = vmatprep.subr.mxu0 0.0
    %2001 = vmatpush2.msra.mxu0 0.0
    %2002 = vmatprep.subr.mxu0 0.0
    %2003 = vmatpush2.msra.mxu0 0.0
    %2004 = vmatprep.subr.mxu0 0.0
    %2005 = vmatpush2.msra.mxu0 0.0
    %2006 = vmatprep.subr.mxu0 0.0
    %2007 = vmatpush2.msra.mxu0 0.0
    %2008 = vmatprep.subr.mxu0 0.0
    %2009 = vmatpush2.msra.mxu0 0.0
    %2010 = vmatprep.subr.mxu0 0.0
    %2011 = vmatpush2.msra.mxu0 0.0
    %2012 = vmatprep.mubr.f32.mxu0 0.0
    %2013 = vmatmul.mubr.f32.gmra.mxu0 %v1946
    %v2014 = vpop.f32.mrf.mxu0
    %v2015 = vadd.f32 0.0, %v2014
    %v2016 = vpop.f32.mrf.mxu0
    %2017 = vdwg.mxu0
    %v2019 = vrot.slane %v2015, 6
    %v2021 = vadd.f32 %v179, %v2019
    %v2022 = vxor.u32 %v2021, 2147483648
    %v2023 = vmul.f32 %v2022, 1.442695
    %v2024 = vpow.pop %v2023
    %v2025 = vadd.f32 %v2024, 1.0
    %v2026 = vrcp.pop %v2025
    %v2027 = vmul.f32 1.0, %v2026
    %2028 = vmatprep.subr.mxu0 0.0
    %2029 = vmatpush1.msra.mxu0 0.0
    %2030 = vmatprep.subr.mxu0 0.0
    %2031 = vmatpush1.msra.mxu0 0.0
    %2032 = vmatprep.subr.mxu0 0.0
    %2033 = vmatpush1.msra.mxu0 0.0
    %2034 = vmatprep.subr.mxu0 0.0
    %2035 = vmatpush1.msra.mxu0 0.0
    %2036 = vmatprep.subr.mxu0 0.0
    %2037 = vmatpush1.msra.mxu0 0.0
    %2038 = vmatprep.subr.mxu0 0.0
    %2039 = vmatpush1.msra.mxu0 0.0
    %2040 = vmatprep.subr.mxu0 0.0
    %2041 = vmatpush1.msra.mxu0 0.0
    %2042 = vmatprep.subr.mxu0 0.0
    %2043 = vmatpush1.msra.mxu0 0.0
    %2044 = vmatprep.subr.mxu0 0.0
    %2045 = vmatpush1.msra.mxu0 0.0
    %2046 = vmatprep.subr.mxu0 0.0
    %2047 = vmatpush1.msra.mxu0 0.0
    %2048 = vmatprep.subr.mxu0 0.0
    %2049 = vmatpush1.msra.mxu0 0.0
    %2050 = vmatprep.subr.mxu0 0.0
    %2051 = vmatpush1.msra.mxu0 0.0
    %2052 = vmatprep.subr.mxu0 0.0
    %2053 = vmatpush1.msra.mxu0 %v278
    %2054 = vmatprep.subr.mxu0 0.0
    %2055 = vmatpush1.msra.mxu0 %v276
    %2056 = vmatprep.subr.mxu0 0.0
    %2057 = vmatpush1.msra.mxu0 %v274
    %2058 = vmatprep.subr.mxu0 0.0
    %2059 = vmatpush1.msra.mxu0 %v272
    %2060 = vmatprep.subr.mxu0 0.0
    %2061 = vmatpush2.msra.mxu0 0.0
    %2062 = vmatprep.subr.mxu0 0.0
    %2063 = vmatpush2.msra.mxu0 0.0
    %2064 = vmatprep.subr.mxu0 0.0
    %2065 = vmatpush2.msra.mxu0 0.0
    %2066 = vmatprep.subr.mxu0 0.0
    %2067 = vmatpush2.msra.mxu0 0.0
    %2068 = vmatprep.subr.mxu0 0.0
    %2069 = vmatpush2.msra.mxu0 0.0
    %2070 = vmatprep.subr.mxu0 0.0
    %2071 = vmatpush2.msra.mxu0 0.0
    %2072 = vmatprep.subr.mxu0 0.0
    %2073 = vmatpush2.msra.mxu0 0.0
    %2074 = vmatprep.subr.mxu0 0.0
    %2075 = vmatpush2.msra.mxu0 0.0
    %2076 = vmatprep.subr.mxu0 0.0
    %2077 = vmatpush2.msra.mxu0 0.0
    %2078 = vmatprep.subr.mxu0 0.0
    %2079 = vmatpush2.msra.mxu0 0.0
    %2080 = vmatprep.subr.mxu0 0.0
    %2081 = vmatpush2.msra.mxu0 0.0
    %2082 = vmatprep.subr.mxu0 0.0
    %2083 = vmatpush2.msra.mxu0 0.0
    %2084 = vmatprep.subr.mxu0 0.0
    %2085 = vmatpush2.msra.mxu0 0.0
    %2086 = vmatprep.subr.mxu0 0.0
    %2087 = vmatpush2.msra.mxu0 0.0
    %2088 = vmatprep.subr.mxu0 0.0
    %2089 = vmatpush2.msra.mxu0 0.0
    %2090 = vmatprep.subr.mxu0 0.0
    %2091 = vmatpush2.msra.mxu0 0.0
    %2092 = vmatprep.mubr.f32.mxu0 0.0
    %2093 = vmatmul.mubr.f32.gmra.mxu0 %v1946
    %v2094 = vpop.f32.mrf.mxu0
    %v2095 = vadd.f32 0.0, %v2094
    %v2096 = vpop.f32.mrf.mxu0
    %2097 = vdwg.mxu0
    %v2099 = vrot.slane %v2095, 6
    %2100 = vrot.lane.b32.xlu0 %v2099, 32
    %v2101 = vpop.permute.xlu0 %2100
    %v2103 = vadd.f32 %v179, %v2101
    %v2104 = vxor.u32 %v2103, 2147483648
    %v2105 = vmul.f32 %v2104, 1.442695
    %v2106 = vpow.pop %v2105
    %v2107 = vadd.f32 %v2106, 1.0
    %v2108 = vrcp.pop %v2107
    %v2109 = vmul.f32 1.0, %v2108
    %2110 = vmatprep.subr.mxu0 0.0
    %2111 = vmatpush1.msra.mxu0 0.0
    %2112 = vmatprep.subr.mxu0 0.0
    %2113 = vmatpush1.msra.mxu0 0.0
    %2114 = vmatprep.subr.mxu0 0.0
    %2115 = vmatpush1.msra.mxu0 0.0
    %2116 = vmatprep.subr.mxu0 0.0
    %2117 = vmatpush1.msra.mxu0 0.0
    %2118 = vmatprep.subr.mxu0 0.0
    %2119 = vmatpush1.msra.mxu0 0.0
    %2120 = vmatprep.subr.mxu0 0.0
    %2121 = vmatpush1.msra.mxu0 0.0
    %2122 = vmatprep.subr.mxu0 0.0
    %2123 = vmatpush1.msra.mxu0 0.0
    %2124 = vmatprep.subr.mxu0 0.0
    %2125 = vmatpush1.msra.mxu0 0.0
    %2126 = vmatprep.subr.mxu0 0.0
    %2127 = vmatpush1.msra.mxu0 0.0
    %2128 = vmatprep.subr.mxu0 0.0
    %2129 = vmatpush1.msra.mxu0 0.0
    %2130 = vmatprep.subr.mxu0 0.0
    %2131 = vmatpush1.msra.mxu0 0.0
    %2132 = vmatprep.subr.mxu0 0.0
    %2133 = vmatpush1.msra.mxu0 0.0
    %2134 = vmatprep.subr.mxu0 0.0
    %2135 = vmatpush1.msra.mxu0 %v371
    %2136 = vmatprep.subr.mxu0 0.0
    %2137 = vmatpush1.msra.mxu0 %v369
    %2138 = vmatprep.subr.mxu0 0.0
    %2139 = vmatpush1.msra.mxu0 %v367
    %2140 = vmatprep.subr.mxu0 0.0
    %2141 = vmatpush1.msra.mxu0 %v365
    %2142 = vmatprep.subr.mxu0 0.0
    %2143 = vmatpush2.msra.mxu0 0.0
    %2144 = vmatprep.subr.mxu0 0.0
    %2145 = vmatpush2.msra.mxu0 0.0
    %2146 = vmatprep.subr.mxu0 0.0
    %2147 = vmatpush2.msra.mxu0 0.0
    %2148 = vmatprep.subr.mxu0 0.0
    %2149 = vmatpush2.msra.mxu0 0.0
    %2150 = vmatprep.subr.mxu0 0.0
    %2151 = vmatpush2.msra.mxu0 0.0
    %2152 = vmatprep.subr.mxu0 0.0
    %2153 = vmatpush2.msra.mxu0 0.0
    %2154 = vmatprep.subr.mxu0 0.0
    %2155 = vmatpush2.msra.mxu0 0.0
    %2156 = vmatprep.subr.mxu0 0.0
    %2157 = vmatpush2.msra.mxu0 0.0
    %2158 = vmatprep.subr.mxu0 0.0
    %2159 = vmatpush2.msra.mxu0 0.0
    %2160 = vmatprep.subr.mxu0 0.0
    %2161 = vmatpush2.msra.mxu0 0.0
    %2162 = vmatprep.subr.mxu0 0.0
    %2163 = vmatpush2.msra.mxu0 0.0
    %2164 = vmatprep.subr.mxu0 0.0
    %2165 = vmatpush2.msra.mxu0 0.0
    %2166 = vmatprep.subr.mxu0 0.0
    %2167 = vmatpush2.msra.mxu0 0.0
    %2168 = vmatprep.subr.mxu0 0.0
    %2169 = vmatpush2.msra.mxu0 0.0
    %2170 = vmatprep.subr.mxu0 0.0
    %2171 = vmatpush2.msra.mxu0 0.0
    %2172 = vmatprep.subr.mxu0 0.0
    %2173 = vmatpush2.msra.mxu0 0.0
    %2174 = vmatprep.mubr.f32.mxu0 0.0
    %2175 = vmatmul.mubr.f32.gmra.mxu0 %v1946
    %v2176 = vpop.f32.mrf.mxu0
    %v2177 = vadd.f32 0.0, %v2176
    %v2178 = vpop.f32.mrf.mxu0
    %2179 = vdwg.mxu0
    %v2181 = vrot.slane %v2177, 6
    %2182 = vrot.lane.b32.xlu0 %v2181, 64
    %v2183 = vpop.permute.xlu0 %2182
    %v2185 = vadd.f32 %v179, %v2183
    %v2186 = vtanh.pop %v2185
    %2187 = vmatprep.subr.mxu0 0.0
    %2188 = vmatpush1.msra.mxu0 0.0
    %2189 = vmatprep.subr.mxu0 0.0
    %2190 = vmatpush1.msra.mxu0 0.0
    %2191 = vmatprep.subr.mxu0 0.0
    %2192 = vmatpush1.msra.mxu0 0.0
    %2193 = vmatprep.subr.mxu0 0.0
    %2194 = vmatpush1.msra.mxu0 0.0
    %2195 = vmatprep.subr.mxu0 0.0
    %2196 = vmatpush1.msra.mxu0 0.0
    %2197 = vmatprep.subr.mxu0 0.0
    %2198 = vmatpush1.msra.mxu0 0.0
    %2199 = vmatprep.subr.mxu0 0.0
    %2200 = vmatpush1.msra.mxu0 0.0
    %2201 = vmatprep.subr.mxu0 0.0
    %2202 = vmatpush1.msra.mxu0 0.0
    %2203 = vmatprep.subr.mxu0 0.0
    %2204 = vmatpush1.msra.mxu0 0.0
    %2205 = vmatprep.subr.mxu0 0.0
    %2206 = vmatpush1.msra.mxu0 0.0
    %2207 = vmatprep.subr.mxu0 0.0
    %2208 = vmatpush1.msra.mxu0 0.0
    %2209 = vmatprep.subr.mxu0 0.0
    %2210 = vmatpush1.msra.mxu0 0.0
    %2211 = vmatprep.subr.mxu0 0.0
    %2212 = vmatpush1.msra.mxu0 %v459
    %2213 = vmatprep.subr.mxu0 0.0
    %2214 = vmatpush1.msra.mxu0 %v457
    %2215 = vmatprep.subr.mxu0 0.0
    %2216 = vmatpush1.msra.mxu0 %v455
    %2217 = vmatprep.subr.mxu0 0.0
    %2218 = vmatpush1.msra.mxu0 %v453
    %2219 = vmatprep.subr.mxu0 0.0
    %2220 = vmatpush2.msra.mxu0 0.0
    %2221 = vmatprep.subr.mxu0 0.0
    %2222 = vmatpush2.msra.mxu0 0.0
    %2223 = vmatprep.subr.mxu0 0.0
    %2224 = vmatpush2.msra.mxu0 0.0
    %2225 = vmatprep.subr.mxu0 0.0
    %2226 = vmatpush2.msra.mxu0 0.0
    %2227 = vmatprep.subr.mxu0 0.0
    %2228 = vmatpush2.msra.mxu0 0.0
    %2229 = vmatprep.subr.mxu0 0.0
    %2230 = vmatpush2.msra.mxu0 0.0
    %2231 = vmatprep.subr.mxu0 0.0
    %2232 = vmatpush2.msra.mxu0 0.0
    %2233 = vmatprep.subr.mxu0 0.0
    %2234 = vmatpush2.msra.mxu0 0.0
    %2235 = vmatprep.subr.mxu0 0.0
    %2236 = vmatpush2.msra.mxu0 0.0
    %2237 = vmatprep.subr.mxu0 0.0
    %2238 = vmatpush2.msra.mxu0 0.0
    %2239 = vmatprep.subr.mxu0 0.0
    %2240 = vmatpush2.msra.mxu0 0.0
    %2241 = vmatprep.subr.mxu0 0.0
    %2242 = vmatpush2.msra.mxu0 0.0
    %2243 = vmatprep.subr.mxu0 0.0
    %2244 = vmatpush2.msra.mxu0 0.0
    %2245 = vmatprep.subr.mxu0 0.0
    %2246 = vmatpush2.msra.mxu0 0.0
    %2247 = vmatprep.subr.mxu0 0.0
    %2248 = vmatpush2.msra.mxu0 0.0
    %2249 = vmatprep.subr.mxu0 0.0
    %2250 = vmatpush2.msra.mxu0 0.0
    %2251 = vmatprep.mubr.f32.mxu0 0.0
    %2252 = vmatmul.mubr.f32.gmra.mxu0 %v1946
    %v2253 = vpop.f32.mrf.mxu0
    %v2254 = vadd.f32 0.0, %v2253
    %v2255 = vpop.f32.mrf.mxu0
    %2256 = vdwg.mxu0
    %v2258 = vrot.slane %v2254, 6
    %2259 = vrot.lane.b32.xlu0 %v2258, 96
    %v2260 = vpop.permute.xlu0 %2259
    %v2262 = vadd.f32 %v179, %v2260
    %v2263 = vxor.u32 %v2262, 2147483648
    %v2264 = vmul.f32 %v2263, 1.442695
    %v2265 = vpow.pop %v2264
    %v2266 = vadd.f32 %v2265, 1.0
    %v2267 = vrcp.pop %v2266
    %v2268 = vmul.f32 1.0, %v2267
    %v2270 = vrot.slane %v1936, 6
    %v2272 = vmul.f32 %v2109, %v2270
    %2274 = vrot.lane.b32.xlu0 %v2186, 64
    %v2275 = vpop.permute.xlu0 %2274
    %v2277 = vmul.f32 %v2027, %v2275
    %2279 = vrot.lane.b32.xlu0 %v2277, 32
    %v2280 = vpop.permute.xlu0 %2279
    %v2282 = vadd.f32 %v2272, %v2280
    %v2283 = vtanh.pop %v2282
    %2285 = vrot.lane.b32.xlu0 %v2283, 64
    %v2286 = vpop.permute.xlu0 %2285
    %v2288 = vmul.f32 %v2268, %v2286
    %v2290 = vrot.slane %v2288, 2
    %2291 = vrot.lane.b32.xlu0 %v2290, 32
    %v2292 = vpop.permute.xlu0 %2291
    %v2293 = vsel %vm186, %v2292, 0
    %2295 = vmatprep.subr.mxu0 0.0
    %2296 = vmatpush1.msra.mxu0 0.0
    %2297 = vmatprep.subr.mxu0 0.0
    %2298 = vmatpush1.msra.mxu0 0.0
    %2299 = vmatprep.subr.mxu0 0.0
    %2300 = vmatpush1.msra.mxu0 0.0
    %2301 = vmatprep.subr.mxu0 0.0
    %2302 = vmatpush1.msra.mxu0 0.0
    %2303 = vmatprep.subr.mxu0 0.0
    %2304 = vmatpush1.msra.mxu0 0.0
    %2305 = vmatprep.subr.mxu0 0.0
    %2306 = vmatpush1.msra.mxu0 0.0
    %2307 = vmatprep.subr.mxu0 0.0
    %2308 = vmatpush1.msra.mxu0 0.0
    %2309 = vmatprep.subr.mxu0 0.0
    %2310 = vmatpush1.msra.mxu0 0.0
    %2311 = vmatprep.subr.mxu0 0.0
    %2312 = vmatpush1.msra.mxu0 0.0
    %2313 = vmatprep.subr.mxu0 0.0
    %2314 = vmatpush1.msra.mxu0 0.0
    %2315 = vmatprep.subr.mxu0 0.0
    %2316 = vmatpush1.msra.mxu0 0.0
    %2317 = vmatprep.subr.mxu0 0.0
    %2318 = vmatpush1.msra.mxu0 0.0
    %2319 = vmatprep.subr.mxu0 0.0
    %2320 = vmatpush1.msra.mxu0 %v185
    %2321 = vmatprep.subr.mxu0 0.0
    %2322 = vmatpush1.msra.mxu0 %v184
    %2323 = vmatprep.subr.mxu0 0.0
    %2324 = vmatpush1.msra.mxu0 %v183
    %2325 = vmatprep.subr.mxu0 0.0
    %2326 = vmatpush1.msra.mxu0 %v182
    %2327 = vmatprep.subr.mxu0 0.0
    %2328 = vmatpush2.msra.mxu0 0.0
    %2329 = vmatprep.subr.mxu0 0.0
    %2330 = vmatpush2.msra.mxu0 0.0
    %2331 = vmatprep.subr.mxu0 0.0
    %2332 = vmatpush2.msra.mxu0 0.0
    %2333 = vmatprep.subr.mxu0 0.0
    %2334 = vmatpush2.msra.mxu0 0.0
    %2335 = vmatprep.subr.mxu0 0.0
    %2336 = vmatpush2.msra.mxu0 0.0
    %2337 = vmatprep.subr.mxu0 0.0
    %2338 = vmatpush2.msra.mxu0 0.0
    %2339 = vmatprep.subr.mxu0 0.0
    %2340 = vmatpush2.msra.mxu0 0.0
    %2341 = vmatprep.subr.mxu0 0.0
    %2342 = vmatpush2.msra.mxu0 0.0
    %2343 = vmatprep.subr.mxu0 0.0
    %2344 = vmatpush2.msra.mxu0 0.0
    %2345 = vmatprep.subr.mxu0 0.0
    %2346 = vmatpush2.msra.mxu0 0.0
    %2347 = vmatprep.subr.mxu0 0.0
    %2348 = vmatpush2.msra.mxu0 0.0
    %2349 = vmatprep.subr.mxu0 0.0
    %2350 = vmatpush2.msra.mxu0 0.0
    %2351 = vmatprep.subr.mxu0 0.0
    %2352 = vmatpush2.msra.mxu0 0.0
    %2353 = vmatprep.subr.mxu0 0.0
    %2354 = vmatpush2.msra.mxu0 0.0
    %2355 = vmatprep.subr.mxu0 0.0
    %2356 = vmatpush2.msra.mxu0 0.0
    %2357 = vmatprep.subr.mxu0 0.0
    %2358 = vmatpush2.msra.mxu0 0.0
    %2359 = vmatprep.mubr.f32.mxu0 0.0
    %2360 = vmatmul.mubr.f32.gmra.mxu0 %v2293
    %v2361 = vpop.f32.mrf.mxu0
    %v2362 = vadd.f32 0.0, %v2361
    %v2363 = vpop.f32.mrf.mxu0
    %2364 = vdwg.mxu0
    %v2366 = vrot.slane %v2362, 4
    %v2368 = vadd.f32 %v179, %v2366
    %v2369 = vxor.u32 %v2368, 2147483648
    %v2370 = vmul.f32 %v2369, 1.442695
    %v2371 = vpow.pop %v2370
    %v2372 = vadd.f32 %v2371, 1.0
    %v2373 = vrcp.pop %v2372
    %v2374 = vmul.f32 1.0, %v2373
    %2375 = vmatprep.subr.mxu0 0.0
    %2376 = vmatpush1.msra.mxu0 0.0
    %2377 = vmatprep.subr.mxu0 0.0
    %2378 = vmatpush1.msra.mxu0 0.0
    %2379 = vmatprep.subr.mxu0 0.0
    %2380 = vmatpush1.msra.mxu0 0.0
    %2381 = vmatprep.subr.mxu0 0.0
    %2382 = vmatpush1.msra.mxu0 0.0
    %2383 = vmatprep.subr.mxu0 0.0
    %2384 = vmatpush1.msra.mxu0 0.0
    %2385 = vmatprep.subr.mxu0 0.0
    %2386 = vmatpush1.msra.mxu0 0.0
    %2387 = vmatprep.subr.mxu0 0.0
    %2388 = vmatpush1.msra.mxu0 0.0
    %2389 = vmatprep.subr.mxu0 0.0
    %2390 = vmatpush1.msra.mxu0 0.0
    %2391 = vmatprep.subr.mxu0 0.0
    %2392 = vmatpush1.msra.mxu0 0.0
    %2393 = vmatprep.subr.mxu0 0.0
    %2394 = vmatpush1.msra.mxu0 0.0
    %2395 = vmatprep.subr.mxu0 0.0
    %2396 = vmatpush1.msra.mxu0 0.0
    %2397 = vmatprep.subr.mxu0 0.0
    %2398 = vmatpush1.msra.mxu0 0.0
    %2399 = vmatprep.subr.mxu0 0.0
    %2400 = vmatpush1.msra.mxu0 %v278
    %2401 = vmatprep.subr.mxu0 0.0
    %2402 = vmatpush1.msra.mxu0 %v276
    %2403 = vmatprep.subr.mxu0 0.0
    %2404 = vmatpush1.msra.mxu0 %v274
    %2405 = vmatprep.subr.mxu0 0.0
    %2406 = vmatpush1.msra.mxu0 %v272
    %2407 = vmatprep.subr.mxu0 0.0
    %2408 = vmatpush2.msra.mxu0 0.0
    %2409 = vmatprep.subr.mxu0 0.0
    %2410 = vmatpush2.msra.mxu0 0.0
    %2411 = vmatprep.subr.mxu0 0.0
    %2412 = vmatpush2.msra.mxu0 0.0
    %2413 = vmatprep.subr.mxu0 0.0
    %2414 = vmatpush2.msra.mxu0 0.0
    %2415 = vmatprep.subr.mxu0 0.0
    %2416 = vmatpush2.msra.mxu0 0.0
    %2417 = vmatprep.subr.mxu0 0.0
    %2418 = vmatpush2.msra.mxu0 0.0
    %2419 = vmatprep.subr.mxu0 0.0
    %2420 = vmatpush2.msra.mxu0 0.0
    %2421 = vmatprep.subr.mxu0 0.0
    %2422 = vmatpush2.msra.mxu0 0.0
    %2423 = vmatprep.subr.mxu0 0.0
    %2424 = vmatpush2.msra.mxu0 0.0
    %2425 = vmatprep.subr.mxu0 0.0
    %2426 = vmatpush2.msra.mxu0 0.0
    %2427 = vmatprep.subr.mxu0 0.0
    %2428 = vmatpush2.msra.mxu0 0.0
    %2429 = vmatprep.subr.mxu0 0.0
    %2430 = vmatpush2.msra.mxu0 0.0
    %2431 = vmatprep.subr.mxu0 0.0
    %2432 = vmatpush2.msra.mxu0 0.0
    %2433 = vmatprep.subr.mxu0 0.0
    %2434 = vmatpush2.msra.mxu0 0.0
    %2435 = vmatprep.subr.mxu0 0.0
    %2436 = vmatpush2.msra.mxu0 0.0
    %2437 = vmatprep.subr.mxu0 0.0
    %2438 = vmatpush2.msra.mxu0 0.0
    %2439 = vmatprep.mubr.f32.mxu0 0.0
    %2440 = vmatmul.mubr.f32.gmra.mxu0 %v2293
    %v2441 = vpop.f32.mrf.mxu0
    %v2442 = vadd.f32 0.0, %v2441
    %v2443 = vpop.f32.mrf.mxu0
    %2444 = vdwg.mxu0
    %v2446 = vrot.slane %v2442, 4
    %2447 = vrot.lane.b32.xlu0 %v2446, 32
    %v2448 = vpop.permute.xlu0 %2447
    %v2450 = vadd.f32 %v179, %v2448
    %v2451 = vxor.u32 %v2450, 2147483648
    %v2452 = vmul.f32 %v2451, 1.442695
    %v2453 = vpow.pop %v2452
    %v2454 = vadd.f32 %v2453, 1.0
    %v2455 = vrcp.pop %v2454
    %v2456 = vmul.f32 1.0, %v2455
    %2457 = vmatprep.subr.mxu0 0.0
    %2458 = vmatpush1.msra.mxu0 0.0
    %2459 = vmatprep.subr.mxu0 0.0
    %2460 = vmatpush1.msra.mxu0 0.0
    %2461 = vmatprep.subr.mxu0 0.0
    %2462 = vmatpush1.msra.mxu0 0.0
    %2463 = vmatprep.subr.mxu0 0.0
    %2464 = vmatpush1.msra.mxu0 0.0
    %2465 = vmatprep.subr.mxu0 0.0
    %2466 = vmatpush1.msra.mxu0 0.0
    %2467 = vmatprep.subr.mxu0 0.0
    %2468 = vmatpush1.msra.mxu0 0.0
    %2469 = vmatprep.subr.mxu0 0.0
    %2470 = vmatpush1.msra.mxu0 0.0
    %2471 = vmatprep.subr.mxu0 0.0
    %2472 = vmatpush1.msra.mxu0 0.0
    %2473 = vmatprep.subr.mxu0 0.0
    %2474 = vmatpush1.msra.mxu0 0.0
    %2475 = vmatprep.subr.mxu0 0.0
    %2476 = vmatpush1.msra.mxu0 0.0
    %2477 = vmatprep.subr.mxu0 0.0
    %2478 = vmatpush1.msra.mxu0 0.0
    %2479 = vmatprep.subr.mxu0 0.0
    %2480 = vmatpush1.msra.mxu0 0.0
    %2481 = vmatprep.subr.mxu0 0.0
    %2482 = vmatpush1.msra.mxu0 %v371
    %2483 = vmatprep.subr.mxu0 0.0
    %2484 = vmatpush1.msra.mxu0 %v369
    %2485 = vmatprep.subr.mxu0 0.0
    %2486 = vmatpush1.msra.mxu0 %v367
    %2487 = vmatprep.subr.mxu0 0.0
    %2488 = vmatpush1.msra.mxu0 %v365
    %2489 = vmatprep.subr.mxu0 0.0
    %2490 = vmatpush2.msra.mxu0 0.0
    %2491 = vmatprep.subr.mxu0 0.0
    %2492 = vmatpush2.msra.mxu0 0.0
    %2493 = vmatprep.subr.mxu0 0.0
    %2494 = vmatpush2.msra.mxu0 0.0
    %2495 = vmatprep.subr.mxu0 0.0
    %2496 = vmatpush2.msra.mxu0 0.0
    %2497 = vmatprep.subr.mxu0 0.0
    %2498 = vmatpush2.msra.mxu0 0.0
    %2499 = vmatprep.subr.mxu0 0.0
    %2500 = vmatpush2.msra.mxu0 0.0
    %2501 = vmatprep.subr.mxu0 0.0
    %2502 = vmatpush2.msra.mxu0 0.0
    %2503 = vmatprep.subr.mxu0 0.0
    %2504 = vmatpush2.msra.mxu0 0.0
    %2505 = vmatprep.subr.mxu0 0.0
    %2506 = vmatpush2.msra.mxu0 0.0
    %2507 = vmatprep.subr.mxu0 0.0
    %2508 = vmatpush2.msra.mxu0 0.0
    %2509 = vmatprep.subr.mxu0 0.0
    %2510 = vmatpush2.msra.mxu0 0.0
    %2511 = vmatprep.subr.mxu0 0.0
    %2512 = vmatpush2.msra.mxu0 0.0
    %2513 = vmatprep.subr.mxu0 0.0
    %2514 = vmatpush2.msra.mxu0 0.0
    %2515 = vmatprep.subr.mxu0 0.0
    %2516 = vmatpush2.msra.mxu0 0.0
    %2517 = vmatprep.subr.mxu0 0.0
    %2518 = vmatpush2.msra.mxu0 0.0
    %2519 = vmatprep.subr.mxu0 0.0
    %2520 = vmatpush2.msra.mxu0 0.0
    %2521 = vmatprep.mubr.f32.mxu0 0.0
    %2522 = vmatmul.mubr.f32.gmra.mxu0 %v2293
    %v2523 = vpop.f32.mrf.mxu0
    %v2524 = vadd.f32 0.0, %v2523
    %v2525 = vpop.f32.mrf.mxu0
    %2526 = vdwg.mxu0
    %v2528 = vrot.slane %v2524, 4
    %2529 = vrot.lane.b32.xlu0 %v2528, 64
    %v2530 = vpop.permute.xlu0 %2529
    %v2532 = vadd.f32 %v179, %v2530
    %v2533 = vtanh.pop %v2532
    %2534 = vmatprep.subr.mxu0 0.0
    %2535 = vmatpush1.msra.mxu0 0.0
    %2536 = vmatprep.subr.mxu0 0.0
    %2537 = vmatpush1.msra.mxu0 0.0
    %2538 = vmatprep.subr.mxu0 0.0
    %2539 = vmatpush1.msra.mxu0 0.0
    %2540 = vmatprep.subr.mxu0 0.0
    %2541 = vmatpush1.msra.mxu0 0.0
    %2542 = vmatprep.subr.mxu0 0.0
    %2543 = vmatpush1.msra.mxu0 0.0
    %2544 = vmatprep.subr.mxu0 0.0
    %2545 = vmatpush1.msra.mxu0 0.0
    %2546 = vmatprep.subr.mxu0 0.0
    %2547 = vmatpush1.msra.mxu0 0.0
    %2548 = vmatprep.subr.mxu0 0.0
    %2549 = vmatpush1.msra.mxu0 0.0
    %2550 = vmatprep.subr.mxu0 0.0
    %2551 = vmatpush1.msra.mxu0 0.0
    %2552 = vmatprep.subr.mxu0 0.0
    %2553 = vmatpush1.msra.mxu0 0.0
    %2554 = vmatprep.subr.mxu0 0.0
    %2555 = vmatpush1.msra.mxu0 0.0
    %2556 = vmatprep.subr.mxu0 0.0
    %2557 = vmatpush1.msra.mxu0 0.0
    %2558 = vmatprep.subr.mxu0 0.0
    %2559 = vmatpush1.msra.mxu0 %v459
    %2560 = vmatprep.subr.mxu0 0.0
    %2561 = vmatpush1.msra.mxu0 %v457
    %2562 = vmatprep.subr.mxu0 0.0
    %2563 = vmatpush1.msra.mxu0 %v455
    %2564 = vmatprep.subr.mxu0 0.0
    %2565 = vmatpush1.msra.mxu0 %v453
    %2566 = vmatprep.subr.mxu0 0.0
    %2567 = vmatpush2.msra.mxu0 0.0
    %2568 = vmatprep.subr.mxu0 0.0
    %2569 = vmatpush2.msra.mxu0 0.0
    %2570 = vmatprep.subr.mxu0 0.0
    %2571 = vmatpush2.msra.mxu0 0.0
    %2572 = vmatprep.subr.mxu0 0.0
    %2573 = vmatpush2.msra.mxu0 0.0
    %2574 = vmatprep.subr.mxu0 0.0
    %2575 = vmatpush2.msra.mxu0 0.0
    %2576 = vmatprep.subr.mxu0 0.0
    %2577 = vmatpush2.msra.mxu0 0.0
    %2578 = vmatprep.subr.mxu0 0.0
    %2579 = vmatpush2.msra.mxu0 0.0
    %2580 = vmatprep.subr.mxu0 0.0
    %2581 = vmatpush2.msra.mxu0 0.0
    %2582 = vmatprep.subr.mxu0 0.0
    %2583 = vmatpush2.msra.mxu0 0.0
    %2584 = vmatprep.subr.mxu0 0.0
    %2585 = vmatpush2.msra.mxu0 0.0
    %2586 = vmatprep.subr.mxu0 0.0
    %2587 = vmatpush2.msra.mxu0 0.0
    %2588 = vmatprep.subr.mxu0 0.0
    %2589 = vmatpush2.msra.mxu0 0.0
    %2590 = vmatprep.subr.mxu0 0.0
    %2591 = vmatpush2.msra.mxu0 0.0
    %2592 = vmatprep.subr.mxu0 0.0
    %2593 = vmatpush2.msra.mxu0 0.0
    %2594 = vmatprep.subr.mxu0 0.0
    %2595 = vmatpush2.msra.mxu0 0.0
    %2596 = vmatprep.subr.mxu0 0.0
    %2597 = vmatpush2.msra.mxu0 0.0
    %2598 = vmatprep.mubr.f32.mxu0 0.0
    %2599 = vmatmul.mubr.f32.gmra.mxu0 %v2293
    %v2600 = vpop.f32.mrf.mxu0
    %v2601 = vadd.f32 0.0, %v2600
    %v2602 = vpop.f32.mrf.mxu0
    %2603 = vdwg.mxu0
    %v2605 = vrot.slane %v2601, 4
    %2606 = vrot.lane.b32.xlu0 %v2605, 96
    %v2607 = vpop.permute.xlu0 %2606
    %v2609 = vadd.f32 %v179, %v2607
    %v2610 = vxor.u32 %v2609, 2147483648
    %v2611 = vmul.f32 %v2610, 1.442695
    %v2612 = vpow.pop %v2611
    %v2613 = vadd.f32 %v2612, 1.0
    %v2614 = vrcp.pop %v2613
    %v2615 = vmul.f32 1.0, %v2614
    %v2617 = vrot.slane %v2282, 6
    %v2619 = vmul.f32 %v2456, %v2617
    %2621 = vrot.lane.b32.xlu0 %v2533, 64
    %v2622 = vpop.permute.xlu0 %2621
    %v2624 = vmul.f32 %v2374, %v2622
    %2626 = vrot.lane.b32.xlu0 %v2624, 32
    %v2627 = vpop.permute.xlu0 %2626
    %v2629 = vadd.f32 %v2619, %v2627
    %v2630 = vtanh.pop %v2629
    %2632 = vrot.lane.b32.xlu0 %v2630, 64
    %v2633 = vpop.permute.xlu0 %2632
    %v2635 = vmul.f32 %v2615, %v2633
    %v2637 = vrot.slane %v2635, 4
    %2638 = vrot.lane.b32.xlu0 %v2637, 32
    %v2639 = vpop.permute.xlu0 %2638
    %v2640 = vsel %vm186, %v2639, 0
    %2642 = vmatprep.subr.mxu0 0.0
    %2643 = vmatpush1.msra.mxu0 0.0
    %2644 = vmatprep.subr.mxu0 0.0
    %2645 = vmatpush1.msra.mxu0 0.0
    %2646 = vmatprep.subr.mxu0 0.0
    %2647 = vmatpush1.msra.mxu0 0.0
    %2648 = vmatprep.subr.mxu0 0.0
    %2649 = vmatpush1.msra.mxu0 0.0
    %2650 = vmatprep.subr.mxu0 0.0
    %2651 = vmatpush1.msra.mxu0 0.0
    %2652 = vmatprep.subr.mxu0 0.0
    %2653 = vmatpush1.msra.mxu0 0.0
    %2654 = vmatprep.subr.mxu0 0.0
    %2655 = vmatpush1.msra.mxu0 0.0
    %2656 = vmatprep.subr.mxu0 0.0
    %2657 = vmatpush1.msra.mxu0 0.0
    %2658 = vmatprep.subr.mxu0 0.0
    %2659 = vmatpush1.msra.mxu0 0.0
    %2660 = vmatprep.subr.mxu0 0.0
    %2661 = vmatpush1.msra.mxu0 0.0
    %2662 = vmatprep.subr.mxu0 0.0
    %2663 = vmatpush1.msra.mxu0 0.0
    %2664 = vmatprep.subr.mxu0 0.0
    %2665 = vmatpush1.msra.mxu0 0.0
    %2666 = vmatprep.subr.mxu0 0.0
    %2667 = vmatpush1.msra.mxu0 %v185
    %2668 = vmatprep.subr.mxu0 0.0
    %2669 = vmatpush1.msra.mxu0 %v184
    %2670 = vmatprep.subr.mxu0 0.0
    %2671 = vmatpush1.msra.mxu0 %v183
    %2672 = vmatprep.subr.mxu0 0.0
    %2673 = vmatpush1.msra.mxu0 %v182
    %2674 = vmatprep.subr.mxu0 0.0
    %2675 = vmatpush2.msra.mxu0 0.0
    %2676 = vmatprep.subr.mxu0 0.0
    %2677 = vmatpush2.msra.mxu0 0.0
    %2678 = vmatprep.subr.mxu0 0.0
    %2679 = vmatpush2.msra.mxu0 0.0
    %2680 = vmatprep.subr.mxu0 0.0
    %2681 = vmatpush2.msra.mxu0 0.0
    %2682 = vmatprep.subr.mxu0 0.0
    %2683 = vmatpush2.msra.mxu0 0.0
    %2684 = vmatprep.subr.mxu0 0.0
    %2685 = vmatpush2.msra.mxu0 0.0
    %2686 = vmatprep.subr.mxu0 0.0
    %2687 = vmatpush2.msra.mxu0 0.0
    %2688 = vmatprep.subr.mxu0 0.0
    %2689 = vmatpush2.msra.mxu0 0.0
    %2690 = vmatprep.subr.mxu0 0.0
    %2691 = vmatpush2.msra.mxu0 0.0
    %2692 = vmatprep.subr.mxu0 0.0
    %2693 = vmatpush2.msra.mxu0 0.0
    %2694 = vmatprep.subr.mxu0 0.0
    %2695 = vmatpush2.msra.mxu0 0.0
    %2696 = vmatprep.subr.mxu0 0.0
    %2697 = vmatpush2.msra.mxu0 0.0
    %2698 = vmatprep.subr.mxu0 0.0
    %2699 = vmatpush2.msra.mxu0 0.0
    %2700 = vmatprep.subr.mxu0 0.0
    %2701 = vmatpush2.msra.mxu0 0.0
    %2702 = vmatprep.subr.mxu0 0.0
    %2703 = vmatpush2.msra.mxu0 0.0
    %2704 = vmatprep.subr.mxu0 0.0
    %2705 = vmatpush2.msra.mxu0 0.0
    %2706 = vmatprep.mubr.f32.mxu0 0.0
    %2707 = vmatmul.mubr.f32.gmra.mxu0 %v2640
    %v2708 = vpop.f32.mrf.mxu0
    %v2709 = vadd.f32 0.0, %v2708
    %v2710 = vpop.f32.mrf.mxu0
    %2711 = vdwg.mxu0
    %v2713 = vrot.slane %v2709, 2
    %v2715 = vadd.f32 %v179, %v2713
    %v2716 = vxor.u32 %v2715, 2147483648
    %v2717 = vmul.f32 %v2716, 1.442695
    %v2718 = vpow.pop %v2717
    %v2719 = vadd.f32 %v2718, 1.0
    %v2720 = vrcp.pop %v2719
    %v2721 = vmul.f32 1.0, %v2720
    %2722 = vmatprep.subr.mxu0 0.0
    %2723 = vmatpush1.msra.mxu0 0.0
    %2724 = vmatprep.subr.mxu0 0.0
    %2725 = vmatpush1.msra.mxu0 0.0
    %2726 = vmatprep.subr.mxu0 0.0
    %2727 = vmatpush1.msra.mxu0 0.0
    %2728 = vmatprep.subr.mxu0 0.0
    %2729 = vmatpush1.msra.mxu0 0.0
    %2730 = vmatprep.subr.mxu0 0.0
    %2731 = vmatpush1.msra.mxu0 0.0
    %2732 = vmatprep.subr.mxu0 0.0
    %2733 = vmatpush1.msra.mxu0 0.0
    %2734 = vmatprep.subr.mxu0 0.0
    %2735 = vmatpush1.msra.mxu0 0.0
    %2736 = vmatprep.subr.mxu0 0.0
    %2737 = vmatpush1.msra.mxu0 0.0
    %2738 = vmatprep.subr.mxu0 0.0
    %2739 = vmatpush1.msra.mxu0 0.0
    %2740 = vmatprep.subr.mxu0 0.0
    %2741 = vmatpush1.msra.mxu0 0.0
    %2742 = vmatprep.subr.mxu0 0.0
    %2743 = vmatpush1.msra.mxu0 0.0
    %2744 = vmatprep.subr.mxu0 0.0
    %2745 = vmatpush1.msra.mxu0 0.0
    %2746 = vmatprep.subr.mxu0 0.0
    %2747 = vmatpush1.msra.mxu0 %v278
    %2748 = vmatprep.subr.mxu0 0.0
    %2749 = vmatpush1.msra.mxu0 %v276
    %2750 = vmatprep.subr.mxu0 0.0
    %2751 = vmatpush1.msra.mxu0 %v274
    %2752 = vmatprep.subr.mxu0 0.0
    %2753 = vmatpush1.msra.mxu0 %v272
    %2754 = vmatprep.subr.mxu0 0.0
    %2755 = vmatpush2.msra.mxu0 0.0
    %2756 = vmatprep.subr.mxu0 0.0
    %2757 = vmatpush2.msra.mxu0 0.0
    %2758 = vmatprep.subr.mxu0 0.0
    %2759 = vmatpush2.msra.mxu0 0.0
    %2760 = vmatprep.subr.mxu0 0.0
    %2761 = vmatpush2.msra.mxu0 0.0
    %2762 = vmatprep.subr.mxu0 0.0
    %2763 = vmatpush2.msra.mxu0 0.0
    %2764 = vmatprep.subr.mxu0 0.0
    %2765 = vmatpush2.msra.mxu0 0.0
    %2766 = vmatprep.subr.mxu0 0.0
    %2767 = vmatpush2.msra.mxu0 0.0
    %2768 = vmatprep.subr.mxu0 0.0
    %2769 = vmatpush2.msra.mxu0 0.0
    %2770 = vmatprep.subr.mxu0 0.0
    %2771 = vmatpush2.msra.mxu0 0.0
    %2772 = vmatprep.subr.mxu0 0.0
    %2773 = vmatpush2.msra.mxu0 0.0
    %2774 = vmatprep.subr.mxu0 0.0
    %2775 = vmatpush2.msra.mxu0 0.0
    %2776 = vmatprep.subr.mxu0 0.0
    %2777 = vmatpush2.msra.mxu0 0.0
    %2778 = vmatprep.subr.mxu0 0.0
    %2779 = vmatpush2.msra.mxu0 0.0
    %2780 = vmatprep.subr.mxu0 0.0
    %2781 = vmatpush2.msra.mxu0 0.0
    %2782 = vmatprep.subr.mxu0 0.0
    %2783 = vmatpush2.msra.mxu0 0.0
    %2784 = vmatprep.subr.mxu0 0.0
    %2785 = vmatpush2.msra.mxu0 0.0
    %2786 = vmatprep.mubr.f32.mxu0 0.0
    %2787 = vmatmul.mubr.f32.gmra.mxu0 %v2640
    %v2788 = vpop.f32.mrf.mxu0
    %v2789 = vadd.f32 0.0, %v2788
    %v2790 = vpop.f32.mrf.mxu0
    %2791 = vdwg.mxu0
    %v2793 = vrot.slane %v2789, 2
    %2794 = vrot.lane.b32.xlu0 %v2793, 32
    %v2795 = vpop.permute.xlu0 %2794
    %v2797 = vadd.f32 %v179, %v2795
    %v2798 = vxor.u32 %v2797, 2147483648
    %v2799 = vmul.f32 %v2798, 1.442695
    %v2800 = vpow.pop %v2799
    %v2801 = vadd.f32 %v2800, 1.0
    %v2802 = vrcp.pop %v2801
    %v2803 = vmul.f32 1.0, %v2802
    %2804 = vmatprep.subr.mxu0 0.0
    %2805 = vmatpush1.msra.mxu0 0.0
    %2806 = vmatprep.subr.mxu0 0.0
    %2807 = vmatpush1.msra.mxu0 0.0
    %2808 = vmatprep.subr.mxu0 0.0
    %2809 = vmatpush1.msra.mxu0 0.0
    %2810 = vmatprep.subr.mxu0 0.0
    %2811 = vmatpush1.msra.mxu0 0.0
    %2812 = vmatprep.subr.mxu0 0.0
    %2813 = vmatpush1.msra.mxu0 0.0
    %2814 = vmatprep.subr.mxu0 0.0
    %2815 = vmatpush1.msra.mxu0 0.0
    %2816 = vmatprep.subr.mxu0 0.0
    %2817 = vmatpush1.msra.mxu0 0.0
    %2818 = vmatprep.subr.mxu0 0.0
    %2819 = vmatpush1.msra.mxu0 0.0
    %2820 = vmatprep.subr.mxu0 0.0
    %2821 = vmatpush1.msra.mxu0 0.0
    %2822 = vmatprep.subr.mxu0 0.0
    %2823 = vmatpush1.msra.mxu0 0.0
    %2824 = vmatprep.subr.mxu0 0.0
    %2825 = vmatpush1.msra.mxu0 0.0
    %2826 = vmatprep.subr.mxu0 0.0
    %2827 = vmatpush1.msra.mxu0 0.0
    %2828 = vmatprep.subr.mxu0 0.0
    %2829 = vmatpush1.msra.mxu0 %v371
    %2830 = vmatprep.subr.mxu0 0.0
    %2831 = vmatpush1.msra.mxu0 %v369
    %2832 = vmatprep.subr.mxu0 0.0
    %2833 = vmatpush1.msra.mxu0 %v367
    %2834 = vmatprep.subr.mxu0 0.0
    %2835 = vmatpush1.msra.mxu0 %v365
    %2836 = vmatprep.subr.mxu0 0.0
    %2837 = vmatpush2.msra.mxu0 0.0
    %2838 = vmatprep.subr.mxu0 0.0
    %2839 = vmatpush2.msra.mxu0 0.0
    %2840 = vmatprep.subr.mxu0 0.0
    %2841 = vmatpush2.msra.mxu0 0.0
    %2842 = vmatprep.subr.mxu0 0.0
    %2843 = vmatpush2.msra.mxu0 0.0
    %2844 = vmatprep.subr.mxu0 0.0
    %2845 = vmatpush2.msra.mxu0 0.0
    %2846 = vmatprep.subr.mxu0 0.0
    %2847 = vmatpush2.msra.mxu0 0.0
    %2848 = vmatprep.subr.mxu0 0.0
    %2849 = vmatpush2.msra.mxu0 0.0
    %2850 = vmatprep.subr.mxu0 0.0
    %2851 = vmatpush2.msra.mxu0 0.0
    %2852 = vmatprep.subr.mxu0 0.0
    %2853 = vmatpush2.msra.mxu0 0.0
    %2854 = vmatprep.subr.mxu0 0.0
    %2855 = vmatpush2.msra.mxu0 0.0
    %2856 = vmatprep.subr.mxu0 0.0
    %2857 = vmatpush2.msra.mxu0 0.0
    %2858 = vmatprep.subr.mxu0 0.0
    %2859 = vmatpush2.msra.mxu0 0.0
    %2860 = vmatprep.subr.mxu0 0.0
    %2861 = vmatpush2.msra.mxu0 0.0
    %2862 = vmatprep.subr.mxu0 0.0
    %2863 = vmatpush2.msra.mxu0 0.0
    %2864 = vmatprep.subr.mxu0 0.0
    %2865 = vmatpush2.msra.mxu0 0.0
    %2866 = vmatprep.subr.mxu0 0.0
    %2867 = vmatpush2.msra.mxu0 0.0
    %2868 = vmatprep.mubr.f32.mxu0 0.0
    %2869 = vmatmul.mubr.f32.gmra.mxu0 %v2640
    %v2870 = vpop.f32.mrf.mxu0
    %v2871 = vadd.f32 0.0, %v2870
    %v2872 = vpop.f32.mrf.mxu0
    %2873 = vdwg.mxu0
    %v2875 = vrot.slane %v2871, 2
    %2876 = vrot.lane.b32.xlu0 %v2875, 64
    %v2877 = vpop.permute.xlu0 %2876
    %v2879 = vadd.f32 %v179, %v2877
    %v2880 = vtanh.pop %v2879
    %2881 = vmatprep.subr.mxu0 0.0
    %2882 = vmatpush1.msra.mxu0 0.0
    %2883 = vmatprep.subr.mxu0 0.0
    %2884 = vmatpush1.msra.mxu0 0.0
    %2885 = vmatprep.subr.mxu0 0.0
    %2886 = vmatpush1.msra.mxu0 0.0
    %2887 = vmatprep.subr.mxu0 0.0
    %2888 = vmatpush1.msra.mxu0 0.0
    %2889 = vmatprep.subr.mxu0 0.0
    %2890 = vmatpush1.msra.mxu0 0.0
    %2891 = vmatprep.subr.mxu0 0.0
    %2892 = vmatpush1.msra.mxu0 0.0
    %2893 = vmatprep.subr.mxu0 0.0
    %2894 = vmatpush1.msra.mxu0 0.0
    %2895 = vmatprep.subr.mxu0 0.0
    %2896 = vmatpush1.msra.mxu0 0.0
    %2897 = vmatprep.subr.mxu0 0.0
    %2898 = vmatpush1.msra.mxu0 0.0
    %2899 = vmatprep.subr.mxu0 0.0
    %2900 = vmatpush1.msra.mxu0 0.0
    %2901 = vmatprep.subr.mxu0 0.0
    %2902 = vmatpush1.msra.mxu0 0.0
    %2903 = vmatprep.subr.mxu0 0.0
    %2904 = vmatpush1.msra.mxu0 0.0
    %2905 = vmatprep.subr.mxu0 0.0
    %2906 = vmatpush1.msra.mxu0 %v459
    %2907 = vmatprep.subr.mxu0 0.0
    %2908 = vmatpush1.msra.mxu0 %v457
    %2909 = vmatprep.subr.mxu0 0.0
    %2910 = vmatpush1.msra.mxu0 %v455
    %2911 = vmatprep.subr.mxu0 0.0
    %2912 = vmatpush1.msra.mxu0 %v453
    %2913 = vmatprep.subr.mxu0 0.0
    %2914 = vmatpush2.msra.mxu0 0.0
    %2915 = vmatprep.subr.mxu0 0.0
    %2916 = vmatpush2.msra.mxu0 0.0
    %2917 = vmatprep.subr.mxu0 0.0
    %2918 = vmatpush2.msra.mxu0 0.0
    %2919 = vmatprep.subr.mxu0 0.0
    %2920 = vmatpush2.msra.mxu0 0.0
    %2921 = vmatprep.subr.mxu0 0.0
    %2922 = vmatpush2.msra.mxu0 0.0
    %2923 = vmatprep.subr.mxu0 0.0
    %2924 = vmatpush2.msra.mxu0 0.0
    %2925 = vmatprep.subr.mxu0 0.0
    %2926 = vmatpush2.msra.mxu0 0.0
    %2927 = vmatprep.subr.mxu0 0.0
    %2928 = vmatpush2.msra.mxu0 0.0
    %2929 = vmatprep.subr.mxu0 0.0
    %2930 = vmatpush2.msra.mxu0 0.0
    %2931 = vmatprep.subr.mxu0 0.0
    %2932 = vmatpush2.msra.mxu0 0.0
    %2933 = vmatprep.subr.mxu0 0.0
    %2934 = vmatpush2.msra.mxu0 0.0
    %2935 = vmatprep.subr.mxu0 0.0
    %2936 = vmatpush2.msra.mxu0 0.0
    %2937 = vmatprep.subr.mxu0 0.0
    %2938 = vmatpush2.msra.mxu0 0.0
    %2939 = vmatprep.subr.mxu0 0.0
    %2940 = vmatpush2.msra.mxu0 0.0
    %2941 = vmatprep.subr.mxu0 0.0
    %2942 = vmatpush2.msra.mxu0 0.0
    %2943 = vmatprep.subr.mxu0 0.0
    %2944 = vmatpush2.msra.mxu0 0.0
    %2945 = vmatprep.mubr.f32.mxu0 0.0
    %2946 = vmatmul.mubr.f32.gmra.mxu0 %v2640
    %v2947 = vpop.f32.mrf.mxu0
    %v2948 = vadd.f32 0.0, %v2947
    %v2949 = vpop.f32.mrf.mxu0
    %2950 = vdwg.mxu0
    %v2952 = vrot.slane %v2948, 2
    %2953 = vrot.lane.b32.xlu0 %v2952, 96
    %v2954 = vpop.permute.xlu0 %2953
    %v2956 = vadd.f32 %v179, %v2954
    %v2957 = vxor.u32 %v2956, 2147483648
    %v2958 = vmul.f32 %v2957, 1.442695
    %v2959 = vpow.pop %v2958
    %v2960 = vadd.f32 %v2959, 1.0
    %v2961 = vrcp.pop %v2960
    %v2962 = vmul.f32 1.0, %v2961
    %v2964 = vrot.slane %v2629, 6
    %v2966 = vmul.f32 %v2803, %v2964
    %2968 = vrot.lane.b32.xlu0 %v2880, 64
    %v2969 = vpop.permute.xlu0 %2968
    %v2971 = vmul.f32 %v2721, %v2969
    %2973 = vrot.lane.b32.xlu0 %v2971, 32
    %v2974 = vpop.permute.xlu0 %2973
    %v2976 = vadd.f32 %v2966, %v2974
    %v2977 = vtanh.pop %v2976
    %2979 = vrot.lane.b32.xlu0 %v2977, 64
    %v2980 = vpop.permute.xlu0 %2979
    %v2982 = vmul.f32 %v2962, %v2980
    %v2983 = vld [vmem:[%s5] sm:$0xff]
    %v2984 = vld [vmem:[%s5 + $0x8] sm:$0xff]
    %v2985 = vld [vmem:[%s5 + $0x10] sm:$0xff]
    %v2986 = vld [vmem:[%s5 + $0x18] sm:$0xff]
    %v2987 = vld [vmem:[#allocation3] sm:$0x3]
    %v2988 = vld [vmem:[%s6] sm:$0x7]
    %vm2989 = vcmask 23552
    %v2991 = vsel %vm2989, %v2987, 0
    %vm2993 = vcmask 1042432
    %v2995 = vsel %vm2993, %v2988, 0
    %2997 = vmatprep.subr.mxu0 0.0
    %2998 = vmatpush1.msra.mxu0 0.0
    %2999 = vmatprep.subr.mxu0 0.0
    %3000 = vmatpush1.msra.mxu0 0.0
    %3001 = vmatprep.subr.mxu0 0.0
    %3002 = vmatpush1.msra.mxu0 0.0
    %3003 = vmatprep.subr.mxu0 0.0
    %3004 = vmatpush1.msra.mxu0 0.0
    %3005 = vmatprep.subr.mxu0 0.0
    %3006 = vmatpush1.msra.mxu0 0.0
    %3007 = vmatprep.subr.mxu0 0.0
    %3008 = vmatpush1.msra.mxu0 0.0
    %3009 = vmatprep.subr.mxu0 0.0
    %3010 = vmatpush1.msra.mxu0 0.0
    %3011 = vmatprep.subr.mxu0 0.0
    %3012 = vmatpush1.msra.mxu0 0.0
    %3013 = vmatprep.subr.mxu0 0.0
    %3014 = vmatpush1.msra.mxu0 0.0
    %3015 = vmatprep.subr.mxu0 0.0
    %3016 = vmatpush1.msra.mxu0 0.0
    %3017 = vmatprep.subr.mxu0 0.0
    %3018 = vmatpush1.msra.mxu0 0.0
    %3019 = vmatprep.subr.mxu0 0.0
    %3020 = vmatpush1.msra.mxu0 0.0
    %3021 = vmatprep.subr.mxu0 0.0
    %3022 = vmatpush1.msra.mxu0 0.0
    %3023 = vmatprep.subr.mxu0 0.0
    %3024 = vmatpush1.msra.mxu0 0.0
    %3025 = vmatprep.subr.mxu0 0.0
    %3026 = vmatpush1.msra.mxu0 0.0
    %3027 = vmatprep.subr.mxu0 0.0
    %3028 = vmatpush1.msra.mxu0 %v2995
    %3029 = vmatprep.subr.mxu0 0.0
    %3030 = vmatpush2.msra.mxu0 0.0
    %3031 = vmatprep.subr.mxu0 0.0
    %3032 = vmatpush2.msra.mxu0 0.0
    %3033 = vmatprep.subr.mxu0 0.0
    %3034 = vmatpush2.msra.mxu0 0.0
    %3035 = vmatprep.subr.mxu0 0.0
    %3036 = vmatpush2.msra.mxu0 0.0
    %3037 = vmatprep.subr.mxu0 0.0
    %3038 = vmatpush2.msra.mxu0 0.0
    %3039 = vmatprep.subr.mxu0 0.0
    %3040 = vmatpush2.msra.mxu0 0.0
    %3041 = vmatprep.subr.mxu0 0.0
    %3042 = vmatpush2.msra.mxu0 0.0
    %3043 = vmatprep.subr.mxu0 0.0
    %3044 = vmatpush2.msra.mxu0 0.0
    %3045 = vmatprep.subr.mxu0 0.0
    %3046 = vmatpush2.msra.mxu0 0.0
    %3047 = vmatprep.subr.mxu0 0.0
    %3048 = vmatpush2.msra.mxu0 0.0
    %3049 = vmatprep.subr.mxu0 0.0
    %3050 = vmatpush2.msra.mxu0 0.0
    %3051 = vmatprep.subr.mxu0 0.0
    %3052 = vmatpush2.msra.mxu0 0.0
    %3053 = vmatprep.subr.mxu0 0.0
    %3054 = vmatpush2.msra.mxu0 0.0
    %3055 = vmatprep.subr.mxu0 0.0
    %3056 = vmatpush2.msra.mxu0 0.0
    %3057 = vmatprep.subr.mxu0 0.0
    %3058 = vmatpush2.msra.mxu0 0.0
    %3059 = vmatprep.subr.mxu0 0.0
    %3060 = vmatpush2.msra.mxu0 0.0
    %3061 = vmatprep.mubr.f32.mxu0 0.0
    %3062 = vmatmul.mubr.f32.gmra.mxu0 %v2991
    %v3063 = vpop.f32.mrf.mxu0
    %v3064 = vadd.f32 0.0, %v3063
    %v3065 = vpop.f32.mrf.mxu0
    %3066 = vdwg.mxu0
    %v3068 = vrot.slane %v2982, 6
    %3069 = vrot.lane.b32.xlu0 %v3068, 32
    %v3070 = vpop.permute.xlu0 %3069
    %v3071 = vsel %vm186, %v3070, 0
    %3073 = vmatprep.subr.mxu0 0.0
    %3074 = vmatpush1.msra.mxu0 0.0
    %3075 = vmatprep.subr.mxu0 0.0
    %3076 = vmatpush1.msra.mxu0 0.0
    %3077 = vmatprep.subr.mxu0 0.0
    %3078 = vmatpush1.msra.mxu0 0.0
    %3079 = vmatprep.subr.mxu0 0.0
    %3080 = vmatpush1.msra.mxu0 0.0
    %3081 = vmatprep.subr.mxu0 0.0
    %3082 = vmatpush1.msra.mxu0 0.0
    %3083 = vmatprep.subr.mxu0 0.0
    %3084 = vmatpush1.msra.mxu0 0.0
    %3085 = vmatprep.subr.mxu0 0.0
    %3086 = vmatpush1.msra.mxu0 0.0
    %3087 = vmatprep.subr.mxu0 0.0
    %3088 = vmatpush1.msra.mxu0 0.0
    %3089 = vmatprep.subr.mxu0 0.0
    %3090 = vmatpush1.msra.mxu0 0.0
    %3091 = vmatprep.subr.mxu0 0.0
    %3092 = vmatpush1.msra.mxu0 0.0
    %3093 = vmatprep.subr.mxu0 0.0
    %3094 = vmatpush1.msra.mxu0 0.0
    %3095 = vmatprep.subr.mxu0 0.0
    %3096 = vmatpush1.msra.mxu0 0.0
    %3097 = vmatprep.subr.mxu0 0.0
    %3098 = vmatpush1.msra.mxu0 %v2986
    %3099 = vmatprep.subr.mxu0 0.0
    %3100 = vmatpush1.msra.mxu0 %v2985
    %3101 = vmatprep.subr.mxu0 0.0
    %3102 = vmatpush1.msra.mxu0 %v2984
    %3103 = vmatprep.subr.mxu0 0.0
    %3104 = vmatpush1.msra.mxu0 %v2983
    %3105 = vmatprep.subr.mxu0 0.0
    %3106 = vmatpush2.msra.mxu0 0.0
    %3107 = vmatprep.subr.mxu0 0.0
    %3108 = vmatpush2.msra.mxu0 0.0
    %3109 = vmatprep.subr.mxu0 0.0
    %3110 = vmatpush2.msra.mxu0 0.0
    %3111 = vmatprep.subr.mxu0 0.0
    %3112 = vmatpush2.msra.mxu0 0.0
    %3113 = vmatprep.subr.mxu0 0.0
    %3114 = vmatpush2.msra.mxu0 0.0
    %3115 = vmatprep.subr.mxu0 0.0
    %3116 = vmatpush2.msra.mxu0 0.0
    %3117 = vmatprep.subr.mxu0 0.0
    %3118 = vmatpush2.msra.mxu0 0.0
    %3119 = vmatprep.subr.mxu0 0.0
    %3120 = vmatpush2.msra.mxu0 0.0
    %3121 = vmatprep.subr.mxu0 0.0
    %3122 = vmatpush2.msra.mxu0 0.0
    %3123 = vmatprep.subr.mxu0 0.0
    %3124 = vmatpush2.msra.mxu0 0.0
    %3125 = vmatprep.subr.mxu0 0.0
    %3126 = vmatpush2.msra.mxu0 0.0
    %3127 = vmatprep.subr.mxu0 0.0
    %3128 = vmatpush2.msra.mxu0 0.0
    %3129 = vmatprep.subr.mxu0 0.0
    %3130 = vmatpush2.msra.mxu0 0.0
    %3131 = vmatprep.subr.mxu0 0.0
    %3132 = vmatpush2.msra.mxu0 0.0
    %3133 = vmatprep.subr.mxu0 0.0
    %3134 = vmatpush2.msra.mxu0 0.0
    %3135 = vmatprep.subr.mxu0 0.0
    %3136 = vmatpush2.msra.mxu0 0.0
    %3137 = vmatprep.mubr.f32.mxu0 0.0
    %3138 = vmatmul.mubr.f32.gmra.mxu0 %v3071
    %v3139 = vpop.f32.mrf.mxu0
    %v3140 = vadd.f32 %v3064, %v3139
    %v3141 = vpop.f32.mrf.mxu0
    %3142 = vdwg.mxu0
    %v3143 = vld [vmem:[%s7] sm:$0x1]
    %v3145 = vlaneseq
    %v3146 = vshrl.u32 %v3145, 7
    %v3147 = vsub.s32 0, %v3146
    %v3148 = vrot.slane %v3143, %v3147
    %v3150 = vadd.f32 %v3140, %v3148
    %v3151 = vmax.f32 %v3150, 0.0
    %v3152 = vld [vmem:[%s8] sm:$0x1]
    %v3154 = vlaneseq
    %v3155 = vshrl.u32 %v3154, 7
    %v3156 = vsub.s32 0, %v3155
    %v3157 = vrot.slane %v3152, %v3156
    %v3159 = vmul.f32 %v3151, %v3157
    %vm3160 = vcmask 254976
    %v3161 = vsel %vm3160, %v3159, 0.0
    %3162 = vadd.xlane.f32.xlu0 %v3161
    %v3163 = vpop.xlane.xlu0 %3162
    %v3164 = vld [vmem:[#allocation2] sm:$0x1]
    %v3166 = vlaneseq
    %v3167 = vshrl.u32 %v3166, 7
    %v3168 = vsub.s32 0, %v3167
    %v3169 = vrot.slane %v3164, %v3168
    %v3171 = vadd.f32 %v3163, %v3169
    %vm3172 = vcmask 1024
    %3173 = vst.msk [vmem:[%s10] sm:$0x3] %vm3172, %v3171
    // Predicated region
    $region58: #{tpu_custom_call.1} parent=1 // pred_check
      _
    $region59: #{tpu_custom_call.1} parent=1 // pred_check_branch
      %3175 = sbr.rel (0) target = $region61
    $region60: #{tpu_custom_call.1} parent=1 // pred_region
      _
    $region61: #{tpu_custom_call.1} parent=1 // pred_fallthru
      _
    // Predicated region
    $region62: #{tpu_custom_call.1} parent=1 // pred_check
      _
    $region63: #{tpu_custom_call.1} parent=1 // pred_check_branch
      %3177 = sbr.rel (0) target = $region65
    $region64: #{tpu_custom_call.1} parent=1 // pred_region
      _
    $region65: #{tpu_custom_call.1} parent=1 // pred_fallthru
      _
    %3178 = vsyncpa [#allocation4], 1
    %3179 = vsyncpa [#allocation6], 1
    %3180 = vsyncpa [#allocation9], 1

</llo_original>
